<compile_context>
chip_gen: v7x
topology: tpu7x:2x2x1
jax: 0.10.0
libtpu: 0.0.40
codegen_flags: <defaults>
</compile_context>

<pallas_src>
import functools
import math

import jax
import jax.numpy as jnp
from jax.experimental import pallas as pl
from jax.experimental.pallas import tpu as pltpu


def _compute_padding(filter_width):
    P = filter_width - 2
    if P % 2 == 0:
        return (P // 2, P // 2 + 1)
    return (P // 2, P // 2)


def _syncnet_kernel(x_ref, w_ref, bias_ref, ind_ref, fcw_ref, fcb_ref, out_ref, *,
                    block_batch, n_pool, pool_size, filter_width):
    Bb = block_batch
    Fw = filter_width
    U = n_pool * pool_size
    K = w_ref.shape[1]
    C = w_ref.shape[2]

    x = x_ref[0]                                         # (Bb, C, L_ext) bf16

    # Conv: Fw batched (Bb,K,C)x(Bb,C,U) MXU contractions, f32 accumulation.
    # (MXU shape tuning is irrelevant here -- the kernel is HBM-bound.)
    acc = None
    for j in range(Fw):
        w_j = jnp.broadcast_to(w_ref[j][None, :, :], (Bb, K, C))   # tiny
        x_j = x[:, :, j:j + U]                                     # (Bb, C, U)
        part = jnp.einsum('bkc,bcu->bku', w_j, x_j,
                          preferred_element_type=jnp.float32)
        acc = part if acc is None else acc + part

    # Conv bias in f32; the 0/1 indicator reproduces ConstantPad1d's exact
    # zeros on `res` (bias must not leak into padded pool positions).
    res = (acc + bias_ref[...][None, :, :]) * ind_ref[...][None, :, :]  # (Bb,K,U)

    # Non-overlapping max pool: each window is a contiguous lane slice.
    wins = [jnp.max(res[:, :, p * pool_size:(p + 1) * pool_size], axis=-1)
            for p in range(n_pool)]                      # each (Bb, K)
    act = jnp.maximum(jnp.concatenate(wins, axis=-1), 0.0)   # (Bb, n_pool*K), p-major

    # Final Linear as ONE contraction against the p-major weight layout,
    # writing a lane-dense (Bb, 128-padded) block.
    out = jnp.dot(act, fcw_ref[...], preferred_element_type=jnp.float32) + fcb_ref[...]
    out_ref[0] = out


def syncnet_forward(x, params, *, num_filters, filter_width, pool_size,
                    n_outputs, block_batch=None, use_bf16=True):
    """SyncNet forward. x: (batch, n_chans, n_times) float32. Returns (out, W_kcf)."""
    amplitude = params["amplitude"]   # (1, 1, C, K)
    omega = params["omega"]           # (1, 1, 1, K)
    bias = params["bias"]             # (K,)
    t = params["t"]                   # (1, Fw, 1, 1)
    phi = params["phi_ini"]           # (1, 1, C, K)
    beta = params["beta"]             # (1, 1, 1, K)
    fc_w = params["fc_w"]             # (n_outputs, classifier_input_size)
    fc_b = params["fc_b"]             # (n_outputs,)

    B, C, T = x.shape
    K = num_filters
    Fw = filter_width

    # ---- Morlet-style filter bank (parameter glue, plain JAX).
    # Row-major reshape reproduces torch's `.view(K, C, 1, Fw)` memory reshuffle.
    W_osc = amplitude * jnp.cos(t * omega + phi)            # (1, Fw, C, K)
    W_decay = jnp.exp(-(t ** 2) * beta)                     # (1, Fw, 1, K)
    W_kcf = (W_osc * W_decay).reshape(K, C, Fw)             # (K, C, Fw)

    # TODO(synk): torch does `self.beta.data.clamp_(min=0)` inside forward -- a
    # training-time in-place parameter mutation that does not change this
    # forward's output; intentionally omitted.

    pad_l, pad_r = _compute_padding(Fw)
    t_pad = T + pad_l + pad_r
    T_conv = t_pad - Fw + 1                                  # conv output length
    n_pool = (T_conv + pad_l + pad_r - pool_size) // pool_size + 1
    classifier_input_size = int(math.ceil(float(T) / float(pool_size))) * K
    assert n_pool * K == classifier_input_size
    assert fc_w.shape == (n_outputs, classifier_input_size)

    U = n_pool * pool_size                                   # pooled-covered length
    T_used = max(0, min(T_conv, U - pad_l))                  # valid conv cols kept by pool
    L_ext = U + Fw - 1                                       # extended input length
    left_ext = 2 * pad_l
    right_ext = L_ext - left_ext - T
    assert right_ext >= 0

    # ---- block sizing: stream raw input, target a few MiB per block.
    itemsize = 2 if use_bf16 else 4
    if block_batch is None:
        per_sample = max(1, C * L_ext * itemsize)
        block_batch = max(1, (4 * 1024 * 1024) // per_sample)
    block_batch = max(1, min(block_batch, B))
    nb = -(-B // block_batch)
    B_pad = nb * block_batch
    # Padded batch rows (B_pad > B) compute garbage that is sliced off below.

    cdt = jnp.bfloat16 if use_bf16 else jnp.float32

    # Cast EARLY (halves bytes of all downstream padding/reshapes), then pad.
    x_c = x.astype(cdt)
    x_ext = jnp.pad(x_c, ((0, B_pad - B), (0, 0), (left_ext, right_ext)))
    x_blk = x_ext.reshape(nb, block_batch, C, L_ext)

    # Weights per tap (Fw, K, C); f32 conv bias; indicator over the U pool cols.
    w_taps = jnp.transpose(W_kcf, (2, 0, 1)).astype(cdt)     # (Fw, K, C)
    bias2 = bias.reshape(K, 1).astype(jnp.float32)           # (K, 1)
    ind = jnp.concatenate(
        [jnp.zeros((1, pad_l), jnp.float32),
         jnp.ones((1, T_used), jnp.float32),
         jnp.zeros((1, U - pad_l - T_used), jnp.float32)], axis=1)   # (1, U)

    # p-major FC weight layout: row d' = p*K + k  <->  torch flat index k*n_pool+p.
    NOUT_PAD = ((n_outputs + 127) // 128) * 128
    fcw_pm = fc_w.reshape(n_outputs, K, n_pool).transpose(2, 1, 0)
    fcw_pm = fcw_pm.reshape(n_pool * K, n_outputs).astype(jnp.float32)
    fcw_pm = jnp.pad(fcw_pm, ((0, 0), (0, NOUT_PAD - n_outputs)))
    fcb2 = jnp.pad(fc_b.reshape(1, n_outputs).astype(jnp.float32),
                   ((0, 0), (0, NOUT_PAD - n_outputs)))

    kernel = functools.partial(
        _syncnet_kernel, block_batch=block_batch, n_pool=n_pool,
        pool_size=pool_size, filter_width=Fw)

    # ---- VMEM budget from actual residents (double-buffered x block, resident
    # weights, f32 intermediates, headroom); capped at 48 MiB so it fits v7x's
    # 64 MiB physical VMEM (v5e/v6e have 128 MiB and are never the binding cap
    # at these block sizes).
    bytes_x_blk = block_batch * C * L_ext * itemsize
    bytes_weights = 2 * (Fw * K * C * itemsize + 3 * 4096
                         + n_pool * K * NOUT_PAD * 4 + NOUT_PAD * 4)
    bytes_out = 2 * block_batch * NOUT_PAD * 4
    bytes_interm = (4 * block_batch * max(K, 8) * U * 4        # acc/part/res f32
                    + 2 * block_batch * max(C, 8) * U * itemsize)  # tap slices
    est = 2 * bytes_x_blk + bytes_weights + bytes_out + bytes_interm + (2 << 20)
    vmem_limit = int(min(48 * 1024 * 1024, max(16 * 1024 * 1024, 2 * est)))

    grid_spec = pltpu.PrefetchScalarGridSpec(
        num_scalar_prefetch=0,
        grid=(nb,),
        in_specs=[
            pl.BlockSpec((1, block_batch, C, L_ext), lambda g: (g, 0, 0, 0)),  # raw input
            pl.BlockSpec((Fw, K, C), lambda g: (0, 0, 0)),                     # tap filters
            pl.BlockSpec((K, 1), lambda g: (0, 0)),                            # conv bias f32
            pl.BlockSpec((1, U), lambda g: (0, 0)),                            # pad indicator
            pl.BlockSpec((n_pool * K, NOUT_PAD), lambda g: (0, 0)),            # fc weight
            pl.BlockSpec((1, NOUT_PAD), lambda g: (0, 0)),                     # fc bias
        ],
        out_specs=pl.BlockSpec((1, block_batch, NOUT_PAD), lambda g: (g, 0, 0)),
    )

    out = pl.pallas_call(
        kernel,
        grid_spec=grid_spec,
        out_shape=jax.ShapeDtypeStruct((nb, block_batch, NOUT_PAD), jnp.float32),
        compiler_params=pltpu.CompilerParams(
            dimension_semantics=("parallel",),
            vmem_limit_bytes=vmem_limit),
    )(x_blk, w_taps, bias2, ind, fcw_pm, fcb2)

    out = out.reshape(B_pad, NOUT_PAD)[:B, :n_outputs]
    return out, W_kcf


def syncnet_reference(x, W_kcf, bias, fc_w, fc_b, *, filter_width, pool_size):
    """Plain-JAX f32 reference mirroring the PyTorch forward semantics."""
    B, C, T = x.shape
    K = W_kcf.shape[0]
    pad_l, pad_r = _compute_padding(filter_width)
    hp = jax.lax.Precision.HIGHEST
    x_pad = jnp.pad(x.astype(jnp.float32), ((0, 0), (0, 0), (pad_l, pad_r)))
    t_pad = T + pad_l + pad_r
    T_conv = t_pad - filter_width + 1
    res = jnp.zeros((B, K, T_conv), jnp.float32)
    for j in range(filter_width):
        res = res + jnp.einsum('bct,kc->bkt', x_pad[:, :, j:j + T_conv],
                               W_kcf[:, :, j], precision=hp)
    res = res + bias[None, :, None]
    res_p = jnp.pad(res, ((0, 0), (0, 0), (pad_l, pad_r)))
    n_pool = (T_conv + pad_l + pad_r - pool_size) // pool_size + 1
    res_p = res_p[:, :, :n_pool * pool_size]
    pooled = res_p.reshape(B, K, n_pool, pool_size).max(-1)
    flat = pooled.reshape(B, K * n_pool)
    return jnp.einsum('bd,od->bo', jnp.maximum(flat, 0.0), fc_w, precision=hp) + fc_b


if __name__ == "__main__":
    # Small shapes consistent with the module (filter_width / pool_size defaults).
    B, C, T = 4, 4, 80            # batch, n_chans, n_times
    K, Fw, pool, n_out = 2, 40, 40, 5

    classifier_input_size = int(math.ceil(float(T) / float(pool))) * K

    key = jax.random.PRNGKey(0)
    ks = jax.random.split(key, 8)
    x = jax.random.normal(ks[0], (B, C, T), jnp.float32)

    # Deterministic parameter init matching the module's shapes / init ranges.
    amplitude = jax.random.uniform(ks[1], (1, 1, C, K), jnp.float32, -0.05, 0.05)
    omega = jax.random.uniform(ks[2], (1, 1, 1, K), jnp.float32, 0.0, 1.0)
    conv_bias = jnp.zeros((K,), jnp.float32)
    phi_ini = 0.0 + 0.05 * jax.random.normal(ks[3], (1, 1, C, K), jnp.float32)
    beta = jax.random.uniform(ks[4], (1, 1, 1, K), jnp.float32, 0.0, 0.05)
    if Fw % 2 == 0:
        t_range = jnp.arange(-(Fw // 2), Fw // 2, dtype=jnp.float32)
    else:
        t_range = jnp.arange(-((Fw - 1) // 2), (Fw - 1) // 2 + 1, dtype=jnp.float32)
    t_param = t_range.reshape(1, Fw, 1, 1)
    bound = 1.0 / math.sqrt(classifier_input_size)
    fc_w = jax.random.uniform(ks[5], (n_out, classifier_input_size),
                              jnp.float32, -bound, bound)
    fc_b = jax.random.uniform(ks[6], (n_out,), jnp.float32, -bound, bound)

    params = dict(amplitude=amplitude, omega=omega, bias=conv_bias, t=t_param,
                  phi_ini=phi_ini, beta=beta, fc_w=fc_w, fc_b=fc_b)

    out, W_kcf = syncnet_forward(x, params, num_filters=K, filter_width=Fw,
                                 pool_size=pool, n_outputs=n_out,
                                 block_batch=2)   # nb=2: exercises the grid / megacore
    out = jax.block_until_ready(out)
    assert out.shape == (B, n_out)

    ref = syncnet_reference(x, W_kcf, conv_bias, fc_w, fc_b,
                            filter_width=Fw, pool_size=pool)
    err = float(jnp.max(jnp.abs(out - ref)))
    if not (err < 2e-2):
        raise AssertionError(f"Pallas output mismatch vs reference, max abs err={err}")

    print("KERNEL_OK")
</pallas_src>

<mosaic_0001>
module attributes {stable_mosaic.version = 11 : i64} {
  func.func @_syncnet_kernel(%arg0: i32, %arg1: memref<1x2x4x119xbf16, #tpu.memory_space<vmem>>, %arg2: memref<40x2x4xbf16, #tpu.memory_space<vmem>>, %arg3: memref<2x1xf32, #tpu.memory_space<vmem>>, %arg4: memref<1x80xf32, #tpu.memory_space<vmem>>, %arg5: memref<4x128xf32, #tpu.memory_space<vmem>>, %arg6: memref<1x128xf32, #tpu.memory_space<vmem>>, %arg7: memref<1x2x128xf32, #tpu.memory_space<vmem>>) attributes {dimension_semantics = [#tpu.dimension_semantics<parallel>], iteration_bounds = array<i64: 2>, scalar_prefetch = 0 : i64, scratch_operands = 0 : i64, tpu.core_type = #tpu.core_type<tc>, window_params = [{transform_indices = @transform_0, window_bounds = array<i64: 1, 2, 4, 119>}, {pipeline_mode = #tpu.pipeline_mode<synchronous>, transform_indices = @transform_1, window_bounds = array<i64: 40, 2, 4>}, {pipeline_mode = #tpu.pipeline_mode<synchronous>, transform_indices = @transform_2, window_bounds = array<i64: 2, 1>}, {pipeline_mode = #tpu.pipeline_mode<synchronous>, transform_indices = @transform_3, window_bounds = array<i64: 1, 80>}, {pipeline_mode = #tpu.pipeline_mode<synchronous>, transform_indices = @transform_4, window_bounds = array<i64: 4, 128>}, {pipeline_mode = #tpu.pipeline_mode<synchronous>, transform_indices = @transform_5, window_bounds = array<i64: 1, 128>}, {transform_indices = @transform_6, window_bounds = array<i64: 1, 2, 128>}]} {
    %c0 = arith.constant 0 : index
    %c0_0 = arith.constant 0 : index
    %c0_1 = arith.constant 0 : index
    %c0_2 = arith.constant 0 : index
    %0 = vector.load %arg1[%c0, %c0_0, %c0_1, %c0_2] : memref<1x2x4x119xbf16, #tpu.memory_space<vmem>>, vector<1x2x4x119xbf16>
    %1 = vector.shape_cast %0 : vector<1x2x4x119xbf16> to vector<2x4x119xbf16>
    %c0_3 = arith.constant 0 : index
    %c0_4 = arith.constant 0 : index
    %c0_5 = arith.constant 0 : index
    %2 = vector.load %arg2[%c0_3, %c0_4, %c0_5] : memref<40x2x4xbf16, #tpu.memory_space<vmem>>, vector<1x2x4xbf16>
    %3 = vector.shape_cast %2 : vector<1x2x4xbf16> to vector<2x4xbf16>
    %4 = vector.shape_cast %3 : vector<2x4xbf16> to vector<1x2x4xbf16>
    %5 = vector.shape_cast %4 : vector<1x2x4xbf16> to vector<1x2x4xbf16>
    %6 = vector.broadcast %5 : vector<1x2x4xbf16> to vector<2x2x4xbf16>
    %7 = vector.extract_strided_slice %1 {offsets = [0, 0, 0], sizes = [2, 4, 80], strides = [1, 1, 1]} : vector<2x4x119xbf16> to vector<2x4x80xbf16>
    "tpu.trace_start"() <{level = 10 : i32, message = "bkc,bcu->bku"}> : () -> ()
    %cst = arith.constant dense<0.000000e+00> : vector<2x2x80xf32>
    %8 = tpu.matmul %6, %7, %cst {dimension_numbers = #tpu.dot_dimension_numbers<[2], [1], [1], [2], [0, 0, 0, 1, 1, 2], [0], [0]>} : vector<2x2x4xbf16>, vector<2x4x80xbf16>, vector<2x2x80xf32> -> vector<2x2x80xf32>
    "tpu.trace_stop"() : () -> ()
    %c1 = arith.constant 1 : index
    %c0_6 = arith.constant 0 : index
    %c0_7 = arith.constant 0 : index
    %9 = vector.load %arg2[%c1, %c0_6, %c0_7] : memref<40x2x4xbf16, #tpu.memory_space<vmem>>, vector<1x2x4xbf16>
    %10 = vector.shape_cast %9 : vector<1x2x4xbf16> to vector<2x4xbf16>
    %11 = vector.shape_cast %10 : vector<2x4xbf16> to vector<1x2x4xbf16>
    %12 = vector.shape_cast %11 : vector<1x2x4xbf16> to vector<1x2x4xbf16>
    %13 = vector.broadcast %12 : vector<1x2x4xbf16> to vector<2x2x4xbf16>
    %14 = vector.extract_strided_slice %1 {offsets = [0, 0, 1], sizes = [2, 4, 80], strides = [1, 1, 1]} : vector<2x4x119xbf16> to vector<2x4x80xbf16>
    "tpu.trace_start"() <{level = 10 : i32, message = "bkc,bcu->bku"}> : () -> ()
    %cst_8 = arith.constant dense<0.000000e+00> : vector<2x2x80xf32>
    %15 = tpu.matmul %13, %14, %cst_8 {dimension_numbers = #tpu.dot_dimension_numbers<[2], [1], [1], [2], [0, 0, 0, 1, 1, 2], [0], [0]>} : vector<2x2x4xbf16>, vector<2x4x80xbf16>, vector<2x2x80xf32> -> vector<2x2x80xf32>
    "tpu.trace_stop"() : () -> ()
    %16 = arith.addf %8, %15 : vector<2x2x80xf32>
    %c2 = arith.constant 2 : index
    %c0_9 = arith.constant 0 : index
    %c0_10 = arith.constant 0 : index
    %17 = vector.load %arg2[%c2, %c0_9, %c0_10] : memref<40x2x4xbf16, #tpu.memory_space<vmem>>, vector<1x2x4xbf16>
    %18 = vector.shape_cast %17 : vector<1x2x4xbf16> to vector<2x4xbf16>
    %19 = vector.shape_cast %18 : vector<2x4xbf16> to vector<1x2x4xbf16>
    %20 = vector.shape_cast %19 : vector<1x2x4xbf16> to vector<1x2x4xbf16>
    %21 = vector.broadcast %20 : vector<1x2x4xbf16> to vector<2x2x4xbf16>
    %22 = vector.extract_strided_slice %1 {offsets = [0, 0, 2], sizes = [2, 4, 80], strides = [1, 1, 1]} : vector<2x4x119xbf16> to vector<2x4x80xbf16>
    "tpu.trace_start"() <{level = 10 : i32, message = "bkc,bcu->bku"}> : () -> ()
    %cst_11 = arith.constant dense<0.000000e+00> : vector<2x2x80xf32>
    %23 = tpu.matmul %21, %22, %cst_11 {dimension_numbers = #tpu.dot_dimension_numbers<[2], [1], [1], [2], [0, 0, 0, 1, 1, 2], [0], [0]>} : vector<2x2x4xbf16>, vector<2x4x80xbf16>, vector<2x2x80xf32> -> vector<2x2x80xf32>
    "tpu.trace_stop"() : () -> ()
    %24 = arith.addf %16, %23 : vector<2x2x80xf32>
    %c3 = arith.constant 3 : index
    %c0_12 = arith.constant 0 : index
    %c0_13 = arith.constant 0 : index
    %25 = vector.load %arg2[%c3, %c0_12, %c0_13] : memref<40x2x4xbf16, #tpu.memory_space<vmem>>, vector<1x2x4xbf16>
    %26 = vector.shape_cast %25 : vector<1x2x4xbf16> to vector<2x4xbf16>
    %27 = vector.shape_cast %26 : vector<2x4xbf16> to vector<1x2x4xbf16>
    %28 = vector.shape_cast %27 : vector<1x2x4xbf16> to vector<1x2x4xbf16>
    %29 = vector.broadcast %28 : vector<1x2x4xbf16> to vector<2x2x4xbf16>
    %30 = vector.extract_strided_slice %1 {offsets = [0, 0, 3], sizes = [2, 4, 80], strides = [1, 1, 1]} : vector<2x4x119xbf16> to vector<2x4x80xbf16>
    "tpu.trace_start"() <{level = 10 : i32, message = "bkc,bcu->bku"}> : () -> ()
    %cst_14 = arith.constant dense<0.000000e+00> : vector<2x2x80xf32>
    %31 = tpu.matmul %29, %30, %cst_14 {dimension_numbers = #tpu.dot_dimension_numbers<[2], [1], [1], [2], [0, 0, 0, 1, 1, 2], [0], [0]>} : vector<2x2x4xbf16>, vector<2x4x80xbf16>, vector<2x2x80xf32> -> vector<2x2x80xf32>
    "tpu.trace_stop"() : () -> ()
    %32 = arith.addf %24, %31 : vector<2x2x80xf32>
    %c4 = arith.constant 4 : index
    %c0_15 = arith.constant 0 : index
    %c0_16 = arith.constant 0 : index
    %33 = vector.load %arg2[%c4, %c0_15, %c0_16] : memref<40x2x4xbf16, #tpu.memory_space<vmem>>, vector<1x2x4xbf16>
    %34 = vector.shape_cast %33 : vector<1x2x4xbf16> to vector<2x4xbf16>
    %35 = vector.shape_cast %34 : vector<2x4xbf16> to vector<1x2x4xbf16>
    %36 = vector.shape_cast %35 : vector<1x2x4xbf16> to vector<1x2x4xbf16>
    %37 = vector.broadcast %36 : vector<1x2x4xbf16> to vector<2x2x4xbf16>
    %38 = vector.extract_strided_slice %1 {offsets = [0, 0, 4], sizes = [2, 4, 80], strides = [1, 1, 1]} : vector<2x4x119xbf16> to vector<2x4x80xbf16>
    "tpu.trace_start"() <{level = 10 : i32, message = "bkc,bcu->bku"}> : () -> ()
    %cst_17 = arith.constant dense<0.000000e+00> : vector<2x2x80xf32>
    %39 = tpu.matmul %37, %38, %cst_17 {dimension_numbers = #tpu.dot_dimension_numbers<[2], [1], [1], [2], [0, 0, 0, 1, 1, 2], [0], [0]>} : vector<2x2x4xbf16>, vector<2x4x80xbf16>, vector<2x2x80xf32> -> vector<2x2x80xf32>
    "tpu.trace_stop"() : () -> ()
    %40 = arith.addf %32, %39 : vector<2x2x80xf32>
    %c5 = arith.constant 5 : index
    %c0_18 = arith.constant 0 : index
    %c0_19 = arith.constant 0 : index
    %41 = vector.load %arg2[%c5, %c0_18, %c0_19] : memref<40x2x4xbf16, #tpu.memory_space<vmem>>, vector<1x2x4xbf16>
    %42 = vector.shape_cast %41 : vector<1x2x4xbf16> to vector<2x4xbf16>
    %43 = vector.shape_cast %42 : vector<2x4xbf16> to vector<1x2x4xbf16>
    %44 = vector.shape_cast %43 : vector<1x2x4xbf16> to vector<1x2x4xbf16>
    %45 = vector.broadcast %44 : vector<1x2x4xbf16> to vector<2x2x4xbf16>
    %46 = vector.extract_strided_slice %1 {offsets = [0, 0, 5], sizes = [2, 4, 80], strides = [1, 1, 1]} : vector<2x4x119xbf16> to vector<2x4x80xbf16>
    "tpu.trace_start"() <{level = 10 : i32, message = "bkc,bcu->bku"}> : () -> ()
    %cst_20 = arith.constant dense<0.000000e+00> : vector<2x2x80xf32>
    %47 = tpu.matmul %45, %46, %cst_20 {dimension_numbers = #tpu.dot_dimension_numbers<[2], [1], [1], [2], [0, 0, 0, 1, 1, 2], [0], [0]>} : vector<2x2x4xbf16>, vector<2x4x80xbf16>, vector<2x2x80xf32> -> vector<2x2x80xf32>
    "tpu.trace_stop"() : () -> ()
    %48 = arith.addf %40, %47 : vector<2x2x80xf32>
    %c6 = arith.constant 6 : index
    %c0_21 = arith.constant 0 : index
    %c0_22 = arith.constant 0 : index
    %49 = vector.load %arg2[%c6, %c0_21, %c0_22] : memref<40x2x4xbf16, #tpu.memory_space<vmem>>, vector<1x2x4xbf16>
    %50 = vector.shape_cast %49 : vector<1x2x4xbf16> to vector<2x4xbf16>
    %51 = vector.shape_cast %50 : vector<2x4xbf16> to vector<1x2x4xbf16>
    %52 = vector.shape_cast %51 : vector<1x2x4xbf16> to vector<1x2x4xbf16>
    %53 = vector.broadcast %52 : vector<1x2x4xbf16> to vector<2x2x4xbf16>
    %54 = vector.extract_strided_slice %1 {offsets = [0, 0, 6], sizes = [2, 4, 80], strides = [1, 1, 1]} : vector<2x4x119xbf16> to vector<2x4x80xbf16>
    "tpu.trace_start"() <{level = 10 : i32, message = "bkc,bcu->bku"}> : () -> ()
    %cst_23 = arith.constant dense<0.000000e+00> : vector<2x2x80xf32>
    %55 = tpu.matmul %53, %54, %cst_23 {dimension_numbers = #tpu.dot_dimension_numbers<[2], [1], [1], [2], [0, 0, 0, 1, 1, 2], [0], [0]>} : vector<2x2x4xbf16>, vector<2x4x80xbf16>, vector<2x2x80xf32> -> vector<2x2x80xf32>
    "tpu.trace_stop"() : () -> ()
    %56 = arith.addf %48, %55 : vector<2x2x80xf32>
    %c7 = arith.constant 7 : index
    %c0_24 = arith.constant 0 : index
    %c0_25 = arith.constant 0 : index
    %57 = vector.load %arg2[%c7, %c0_24, %c0_25] : memref<40x2x4xbf16, #tpu.memory_space<vmem>>, vector<1x2x4xbf16>
    %58 = vector.shape_cast %57 : vector<1x2x4xbf16> to vector<2x4xbf16>
    %59 = vector.shape_cast %58 : vector<2x4xbf16> to vector<1x2x4xbf16>
    %60 = vector.shape_cast %59 : vector<1x2x4xbf16> to vector<1x2x4xbf16>
    %61 = vector.broadcast %60 : vector<1x2x4xbf16> to vector<2x2x4xbf16>
    %62 = vector.extract_strided_slice %1 {offsets = [0, 0, 7], sizes = [2, 4, 80], strides = [1, 1, 1]} : vector<2x4x119xbf16> to vector<2x4x80xbf16>
    "tpu.trace_start"() <{level = 10 : i32, message = "bkc,bcu->bku"}> : () -> ()
    %cst_26 = arith.constant dense<0.000000e+00> : vector<2x2x80xf32>
    %63 = tpu.matmul %61, %62, %cst_26 {dimension_numbers = #tpu.dot_dimension_numbers<[2], [1], [1], [2], [0, 0, 0, 1, 1, 2], [0], [0]>} : vector<2x2x4xbf16>, vector<2x4x80xbf16>, vector<2x2x80xf32> -> vector<2x2x80xf32>
    "tpu.trace_stop"() : () -> ()
    %64 = arith.addf %56, %63 : vector<2x2x80xf32>
    %c8 = arith.constant 8 : index
    %c0_27 = arith.constant 0 : index
    %c0_28 = arith.constant 0 : index
    %65 = vector.load %arg2[%c8, %c0_27, %c0_28] : memref<40x2x4xbf16, #tpu.memory_space<vmem>>, vector<1x2x4xbf16>
    %66 = vector.shape_cast %65 : vector<1x2x4xbf16> to vector<2x4xbf16>
    %67 = vector.shape_cast %66 : vector<2x4xbf16> to vector<1x2x4xbf16>
    %68 = vector.shape_cast %67 : vector<1x2x4xbf16> to vector<1x2x4xbf16>
    %69 = vector.broadcast %68 : vector<1x2x4xbf16> to vector<2x2x4xbf16>
    %70 = vector.extract_strided_slice %1 {offsets = [0, 0, 8], sizes = [2, 4, 80], strides = [1, 1, 1]} : vector<2x4x119xbf16> to vector<2x4x80xbf16>
    "tpu.trace_start"() <{level = 10 : i32, message = "bkc,bcu->bku"}> : () -> ()
    %cst_29 = arith.constant dense<0.000000e+00> : vector<2x2x80xf32>
    %71 = tpu.matmul %69, %70, %cst_29 {dimension_numbers = #tpu.dot_dimension_numbers<[2], [1], [1], [2], [0, 0, 0, 1, 1, 2], [0], [0]>} : vector<2x2x4xbf16>, vector<2x4x80xbf16>, vector<2x2x80xf32> -> vector<2x2x80xf32>
    "tpu.trace_stop"() : () -> ()
    %72 = arith.addf %64, %71 : vector<2x2x80xf32>
    %c9 = arith.constant 9 : index
    %c0_30 = arith.constant 0 : index
    %c0_31 = arith.constant 0 : index
    %73 = vector.load %arg2[%c9, %c0_30, %c0_31] : memref<40x2x4xbf16, #tpu.memory_space<vmem>>, vector<1x2x4xbf16>
    %74 = vector.shape_cast %73 : vector<1x2x4xbf16> to vector<2x4xbf16>
    %75 = vector.shape_cast %74 : vector<2x4xbf16> to vector<1x2x4xbf16>
    %76 = vector.shape_cast %75 : vector<1x2x4xbf16> to vector<1x2x4xbf16>
    %77 = vector.broadcast %76 : vector<1x2x4xbf16> to vector<2x2x4xbf16>
    %78 = vector.extract_strided_slice %1 {offsets = [0, 0, 9], sizes = [2, 4, 80], strides = [1, 1, 1]} : vector<2x4x119xbf16> to vector<2x4x80xbf16>
    "tpu.trace_start"() <{level = 10 : i32, message = "bkc,bcu->bku"}> : () -> ()
    %cst_32 = arith.constant dense<0.000000e+00> : vector<2x2x80xf32>
    %79 = tpu.matmul %77, %78, %cst_32 {dimension_numbers = #tpu.dot_dimension_numbers<[2], [1], [1], [2], [0, 0, 0, 1, 1, 2], [0], [0]>} : vector<2x2x4xbf16>, vector<2x4x80xbf16>, vector<2x2x80xf32> -> vector<2x2x80xf32>
    "tpu.trace_stop"() : () -> ()
    %80 = arith.addf %72, %79 : vector<2x2x80xf32>
    %c10 = arith.constant 10 : index
    %c0_33 = arith.constant 0 : index
    %c0_34 = arith.constant 0 : index
    %81 = vector.load %arg2[%c10, %c0_33, %c0_34] : memref<40x2x4xbf16, #tpu.memory_space<vmem>>, vector<1x2x4xbf16>
    %82 = vector.shape_cast %81 : vector<1x2x4xbf16> to vector<2x4xbf16>
    %83 = vector.shape_cast %82 : vector<2x4xbf16> to vector<1x2x4xbf16>
    %84 = vector.shape_cast %83 : vector<1x2x4xbf16> to vector<1x2x4xbf16>
    %85 = vector.broadcast %84 : vector<1x2x4xbf16> to vector<2x2x4xbf16>
    %86 = vector.extract_strided_slice %1 {offsets = [0, 0, 10], sizes = [2, 4, 80], strides = [1, 1, 1]} : vector<2x4x119xbf16> to vector<2x4x80xbf16>
    "tpu.trace_start"() <{level = 10 : i32, message = "bkc,bcu->bku"}> : () -> ()
    %cst_35 = arith.constant dense<0.000000e+00> : vector<2x2x80xf32>
    %87 = tpu.matmul %85, %86, %cst_35 {dimension_numbers = #tpu.dot_dimension_numbers<[2], [1], [1], [2], [0, 0, 0, 1, 1, 2], [0], [0]>} : vector<2x2x4xbf16>, vector<2x4x80xbf16>, vector<2x2x80xf32> -> vector<2x2x80xf32>
    "tpu.trace_stop"() : () -> ()
    %88 = arith.addf %80, %87 : vector<2x2x80xf32>
    %c11 = arith.constant 11 : index
    %c0_36 = arith.constant 0 : index
    %c0_37 = arith.constant 0 : index
    %89 = vector.load %arg2[%c11, %c0_36, %c0_37] : memref<40x2x4xbf16, #tpu.memory_space<vmem>>, vector<1x2x4xbf16>
    %90 = vector.shape_cast %89 : vector<1x2x4xbf16> to vector<2x4xbf16>
    %91 = vector.shape_cast %90 : vector<2x4xbf16> to vector<1x2x4xbf16>
    %92 = vector.shape_cast %91 : vector<1x2x4xbf16> to vector<1x2x4xbf16>
    %93 = vector.broadcast %92 : vector<1x2x4xbf16> to vector<2x2x4xbf16>
    %94 = vector.extract_strided_slice %1 {offsets = [0, 0, 11], sizes = [2, 4, 80], strides = [1, 1, 1]} : vector<2x4x119xbf16> to vector<2x4x80xbf16>
    "tpu.trace_start"() <{level = 10 : i32, message = "bkc,bcu->bku"}> : () -> ()
    %cst_38 = arith.constant dense<0.000000e+00> : vector<2x2x80xf32>
    %95 = tpu.matmul %93, %94, %cst_38 {dimension_numbers = #tpu.dot_dimension_numbers<[2], [1], [1], [2], [0, 0, 0, 1, 1, 2], [0], [0]>} : vector<2x2x4xbf16>, vector<2x4x80xbf16>, vector<2x2x80xf32> -> vector<2x2x80xf32>
    "tpu.trace_stop"() : () -> ()
    %96 = arith.addf %88, %95 : vector<2x2x80xf32>
    %c12 = arith.constant 12 : index
    %c0_39 = arith.constant 0 : index
    %c0_40 = arith.constant 0 : index
    %97 = vector.load %arg2[%c12, %c0_39, %c0_40] : memref<40x2x4xbf16, #tpu.memory_space<vmem>>, vector<1x2x4xbf16>
    %98 = vector.shape_cast %97 : vector<1x2x4xbf16> to vector<2x4xbf16>
    %99 = vector.shape_cast %98 : vector<2x4xbf16> to vector<1x2x4xbf16>
    %100 = vector.shape_cast %99 : vector<1x2x4xbf16> to vector<1x2x4xbf16>
    %101 = vector.broadcast %100 : vector<1x2x4xbf16> to vector<2x2x4xbf16>
    %102 = vector.extract_strided_slice %1 {offsets = [0, 0, 12], sizes = [2, 4, 80], strides = [1, 1, 1]} : vector<2x4x119xbf16> to vector<2x4x80xbf16>
    "tpu.trace_start"() <{level = 10 : i32, message = "bkc,bcu->bku"}> : () -> ()
    %cst_41 = arith.constant dense<0.000000e+00> : vector<2x2x80xf32>
    %103 = tpu.matmul %101, %102, %cst_41 {dimension_numbers = #tpu.dot_dimension_numbers<[2], [1], [1], [2], [0, 0, 0, 1, 1, 2], [0], [0]>} : vector<2x2x4xbf16>, vector<2x4x80xbf16>, vector<2x2x80xf32> -> vector<2x2x80xf32>
    "tpu.trace_stop"() : () -> ()
    %104 = arith.addf %96, %103 : vector<2x2x80xf32>
    %c13 = arith.constant 13 : index
    %c0_42 = arith.constant 0 : index
    %c0_43 = arith.constant 0 : index
    %105 = vector.load %arg2[%c13, %c0_42, %c0_43] : memref<40x2x4xbf16, #tpu.memory_space<vmem>>, vector<1x2x4xbf16>
    %106 = vector.shape_cast %105 : vector<1x2x4xbf16> to vector<2x4xbf16>
    %107 = vector.shape_cast %106 : vector<2x4xbf16> to vector<1x2x4xbf16>
    %108 = vector.shape_cast %107 : vector<1x2x4xbf16> to vector<1x2x4xbf16>
    %109 = vector.broadcast %108 : vector<1x2x4xbf16> to vector<2x2x4xbf16>
    %110 = vector.extract_strided_slice %1 {offsets = [0, 0, 13], sizes = [2, 4, 80], strides = [1, 1, 1]} : vector<2x4x119xbf16> to vector<2x4x80xbf16>
    "tpu.trace_start"() <{level = 10 : i32, message = "bkc,bcu->bku"}> : () -> ()
    %cst_44 = arith.constant dense<0.000000e+00> : vector<2x2x80xf32>
    %111 = tpu.matmul %109, %110, %cst_44 {dimension_numbers = #tpu.dot_dimension_numbers<[2], [1], [1], [2], [0, 0, 0, 1, 1, 2], [0], [0]>} : vector<2x2x4xbf16>, vector<2x4x80xbf16>, vector<2x2x80xf32> -> vector<2x2x80xf32>
    "tpu.trace_stop"() : () -> ()
    %112 = arith.addf %104, %111 : vector<2x2x80xf32>
    %c14 = arith.constant 14 : index
    %c0_45 = arith.constant 0 : index
    %c0_46 = arith.constant 0 : index
    %113 = vector.load %arg2[%c14, %c0_45, %c0_46] : memref<40x2x4xbf16, #tpu.memory_space<vmem>>, vector<1x2x4xbf16>
    %114 = vector.shape_cast %113 : vector<1x2x4xbf16> to vector<2x4xbf16>
    %115 = vector.shape_cast %114 : vector<2x4xbf16> to vector<1x2x4xbf16>
    %116 = vector.shape_cast %115 : vector<1x2x4xbf16> to vector<1x2x4xbf16>
    %117 = vector.broadcast %116 : vector<1x2x4xbf16> to vector<2x2x4xbf16>
    %118 = vector.extract_strided_slice %1 {offsets = [0, 0, 14], sizes = [2, 4, 80], strides = [1, 1, 1]} : vector<2x4x119xbf16> to vector<2x4x80xbf16>
    "tpu.trace_start"() <{level = 10 : i32, message = "bkc,bcu->bku"}> : () -> ()
    %cst_47 = arith.constant dense<0.000000e+00> : vector<2x2x80xf32>
    %119 = tpu.matmul %117, %118, %cst_47 {dimension_numbers = #tpu.dot_dimension_numbers<[2], [1], [1], [2], [0, 0, 0, 1, 1, 2], [0], [0]>} : vector<2x2x4xbf16>, vector<2x4x80xbf16>, vector<2x2x80xf32> -> vector<2x2x80xf32>
    "tpu.trace_stop"() : () -> ()
    %120 = arith.addf %112, %119 : vector<2x2x80xf32>
    %c15 = arith.constant 15 : index
    %c0_48 = arith.constant 0 : index
    %c0_49 = arith.constant 0 : index
    %121 = vector.load %arg2[%c15, %c0_48, %c0_49] : memref<40x2x4xbf16, #tpu.memory_space<vmem>>, vector<1x2x4xbf16>
    %122 = vector.shape_cast %121 : vector<1x2x4xbf16> to vector<2x4xbf16>
    %123 = vector.shape_cast %122 : vector<2x4xbf16> to vector<1x2x4xbf16>
    %124 = vector.shape_cast %123 : vector<1x2x4xbf16> to vector<1x2x4xbf16>
    %125 = vector.broadcast %124 : vector<1x2x4xbf16> to vector<2x2x4xbf16>
    %126 = vector.extract_strided_slice %1 {offsets = [0, 0, 15], sizes = [2, 4, 80], strides = [1, 1, 1]} : vector<2x4x119xbf16> to vector<2x4x80xbf16>
    "tpu.trace_start"() <{level = 10 : i32, message = "bkc,bcu->bku"}> : () -> ()
    %cst_50 = arith.constant dense<0.000000e+00> : vector<2x2x80xf32>
    %127 = tpu.matmul %125, %126, %cst_50 {dimension_numbers = #tpu.dot_dimension_numbers<[2], [1], [1], [2], [0, 0, 0, 1, 1, 2], [0], [0]>} : vector<2x2x4xbf16>, vector<2x4x80xbf16>, vector<2x2x80xf32> -> vector<2x2x80xf32>
    "tpu.trace_stop"() : () -> ()
    %128 = arith.addf %120, %127 : vector<2x2x80xf32>
    %c16 = arith.constant 16 : index
    %c0_51 = arith.constant 0 : index
    %c0_52 = arith.constant 0 : index
    %129 = vector.load %arg2[%c16, %c0_51, %c0_52] : memref<40x2x4xbf16, #tpu.memory_space<vmem>>, vector<1x2x4xbf16>
    %130 = vector.shape_cast %129 : vector<1x2x4xbf16> to vector<2x4xbf16>
    %131 = vector.shape_cast %130 : vector<2x4xbf16> to vector<1x2x4xbf16>
    %132 = vector.shape_cast %131 : vector<1x2x4xbf16> to vector<1x2x4xbf16>
    %133 = vector.broadcast %132 : vector<1x2x4xbf16> to vector<2x2x4xbf16>
    %134 = vector.extract_strided_slice %1 {offsets = [0, 0, 16], sizes = [2, 4, 80], strides = [1, 1, 1]} : vector<2x4x119xbf16> to vector<2x4x80xbf16>
    "tpu.trace_start"() <{level = 10 : i32, message = "bkc,bcu->bku"}> : () -> ()
    %cst_53 = arith.constant dense<0.000000e+00> : vector<2x2x80xf32>
    %135 = tpu.matmul %133, %134, %cst_53 {dimension_numbers = #tpu.dot_dimension_numbers<[2], [1], [1], [2], [0, 0, 0, 1, 1, 2], [0], [0]>} : vector<2x2x4xbf16>, vector<2x4x80xbf16>, vector<2x2x80xf32> -> vector<2x2x80xf32>
    "tpu.trace_stop"() : () -> ()
    %136 = arith.addf %128, %135 : vector<2x2x80xf32>
    %c17 = arith.constant 17 : index
    %c0_54 = arith.constant 0 : index
    %c0_55 = arith.constant 0 : index
    %137 = vector.load %arg2[%c17, %c0_54, %c0_55] : memref<40x2x4xbf16, #tpu.memory_space<vmem>>, vector<1x2x4xbf16>
    %138 = vector.shape_cast %137 : vector<1x2x4xbf16> to vector<2x4xbf16>
    %139 = vector.shape_cast %138 : vector<2x4xbf16> to vector<1x2x4xbf16>
    %140 = vector.shape_cast %139 : vector<1x2x4xbf16> to vector<1x2x4xbf16>
    %141 = vector.broadcast %140 : vector<1x2x4xbf16> to vector<2x2x4xbf16>
    %142 = vector.extract_strided_slice %1 {offsets = [0, 0, 17], sizes = [2, 4, 80], strides = [1, 1, 1]} : vector<2x4x119xbf16> to vector<2x4x80xbf16>
    "tpu.trace_start"() <{level = 10 : i32, message = "bkc,bcu->bku"}> : () -> ()
    %cst_56 = arith.constant dense<0.000000e+00> : vector<2x2x80xf32>
    %143 = tpu.matmul %141, %142, %cst_56 {dimension_numbers = #tpu.dot_dimension_numbers<[2], [1], [1], [2], [0, 0, 0, 1, 1, 2], [0], [0]>} : vector<2x2x4xbf16>, vector<2x4x80xbf16>, vector<2x2x80xf32> -> vector<2x2x80xf32>
    "tpu.trace_stop"() : () -> ()
    %144 = arith.addf %136, %143 : vector<2x2x80xf32>
    %c18 = arith.constant 18 : index
    %c0_57 = arith.constant 0 : index
    %c0_58 = arith.constant 0 : index
    %145 = vector.load %arg2[%c18, %c0_57, %c0_58] : memref<40x2x4xbf16, #tpu.memory_space<vmem>>, vector<1x2x4xbf16>
    %146 = vector.shape_cast %145 : vector<1x2x4xbf16> to vector<2x4xbf16>
    %147 = vector.shape_cast %146 : vector<2x4xbf16> to vector<1x2x4xbf16>
    %148 = vector.shape_cast %147 : vector<1x2x4xbf16> to vector<1x2x4xbf16>
    %149 = vector.broadcast %148 : vector<1x2x4xbf16> to vector<2x2x4xbf16>
    %150 = vector.extract_strided_slice %1 {offsets = [0, 0, 18], sizes = [2, 4, 80], strides = [1, 1, 1]} : vector<2x4x119xbf16> to vector<2x4x80xbf16>
    "tpu.trace_start"() <{level = 10 : i32, message = "bkc,bcu->bku"}> : () -> ()
    %cst_59 = arith.constant dense<0.000000e+00> : vector<2x2x80xf32>
    %151 = tpu.matmul %149, %150, %cst_59 {dimension_numbers = #tpu.dot_dimension_numbers<[2], [1], [1], [2], [0, 0, 0, 1, 1, 2], [0], [0]>} : vector<2x2x4xbf16>, vector<2x4x80xbf16>, vector<2x2x80xf32> -> vector<2x2x80xf32>
    "tpu.trace_stop"() : () -> ()
    %152 = arith.addf %144, %151 : vector<2x2x80xf32>
    %c19 = arith.constant 19 : index
    %c0_60 = arith.constant 0 : index
    %c0_61 = arith.constant 0 : index
    %153 = vector.load %arg2[%c19, %c0_60, %c0_61] : memref<40x2x4xbf16, #tpu.memory_space<vmem>>, vector<1x2x4xbf16>
    %154 = vector.shape_cast %153 : vector<1x2x4xbf16> to vector<2x4xbf16>
    %155 = vector.shape_cast %154 : vector<2x4xbf16> to vector<1x2x4xbf16>
    %156 = vector.shape_cast %155 : vector<1x2x4xbf16> to vector<1x2x4xbf16>
    %157 = vector.broadcast %156 : vector<1x2x4xbf16> to vector<2x2x4xbf16>
    %158 = vector.extract_strided_slice %1 {offsets = [0, 0, 19], sizes = [2, 4, 80], strides = [1, 1, 1]} : vector<2x4x119xbf16> to vector<2x4x80xbf16>
    "tpu.trace_start"() <{level = 10 : i32, message = "bkc,bcu->bku"}> : () -> ()
    %cst_62 = arith.constant dense<0.000000e+00> : vector<2x2x80xf32>
    %159 = tpu.matmul %157, %158, %cst_62 {dimension_numbers = #tpu.dot_dimension_numbers<[2], [1], [1], [2], [0, 0, 0, 1, 1, 2], [0], [0]>} : vector<2x2x4xbf16>, vector<2x4x80xbf16>, vector<2x2x80xf32> -> vector<2x2x80xf32>
    "tpu.trace_stop"() : () -> ()
    %160 = arith.addf %152, %159 : vector<2x2x80xf32>
    %c20 = arith.constant 20 : index
    %c0_63 = arith.constant 0 : index
    %c0_64 = arith.constant 0 : index
    %161 = vector.load %arg2[%c20, %c0_63, %c0_64] : memref<40x2x4xbf16, #tpu.memory_space<vmem>>, vector<1x2x4xbf16>
    %162 = vector.shape_cast %161 : vector<1x2x4xbf16> to vector<2x4xbf16>
    %163 = vector.shape_cast %162 : vector<2x4xbf16> to vector<1x2x4xbf16>
    %164 = vector.shape_cast %163 : vector<1x2x4xbf16> to vector<1x2x4xbf16>
    %165 = vector.broadcast %164 : vector<1x2x4xbf16> to vector<2x2x4xbf16>
    %166 = vector.extract_strided_slice %1 {offsets = [0, 0, 20], sizes = [2, 4, 80], strides = [1, 1, 1]} : vector<2x4x119xbf16> to vector<2x4x80xbf16>
    "tpu.trace_start"() <{level = 10 : i32, message = "bkc,bcu->bku"}> : () -> ()
    %cst_65 = arith.constant dense<0.000000e+00> : vector<2x2x80xf32>
    %167 = tpu.matmul %165, %166, %cst_65 {dimension_numbers = #tpu.dot_dimension_numbers<[2], [1], [1], [2], [0, 0, 0, 1, 1, 2], [0], [0]>} : vector<2x2x4xbf16>, vector<2x4x80xbf16>, vector<2x2x80xf32> -> vector<2x2x80xf32>
    "tpu.trace_stop"() : () -> ()
    %168 = arith.addf %160, %167 : vector<2x2x80xf32>
    %c21 = arith.constant 21 : index
    %c0_66 = arith.constant 0 : index
    %c0_67 = arith.constant 0 : index
    %169 = vector.load %arg2[%c21, %c0_66, %c0_67] : memref<40x2x4xbf16, #tpu.memory_space<vmem>>, vector<1x2x4xbf16>
    %170 = vector.shape_cast %169 : vector<1x2x4xbf16> to vector<2x4xbf16>
    %171 = vector.shape_cast %170 : vector<2x4xbf16> to vector<1x2x4xbf16>
    %172 = vector.shape_cast %171 : vector<1x2x4xbf16> to vector<1x2x4xbf16>
    %173 = vector.broadcast %172 : vector<1x2x4xbf16> to vector<2x2x4xbf16>
    %174 = vector.extract_strided_slice %1 {offsets = [0, 0, 21], sizes = [2, 4, 80], strides = [1, 1, 1]} : vector<2x4x119xbf16> to vector<2x4x80xbf16>
    "tpu.trace_start"() <{level = 10 : i32, message = "bkc,bcu->bku"}> : () -> ()
    %cst_68 = arith.constant dense<0.000000e+00> : vector<2x2x80xf32>
    %175 = tpu.matmul %173, %174, %cst_68 {dimension_numbers = #tpu.dot_dimension_numbers<[2], [1], [1], [2], [0, 0, 0, 1, 1, 2], [0], [0]>} : vector<2x2x4xbf16>, vector<2x4x80xbf16>, vector<2x2x80xf32> -> vector<2x2x80xf32>
    "tpu.trace_stop"() : () -> ()
    %176 = arith.addf %168, %175 : vector<2x2x80xf32>
    %c22 = arith.constant 22 : index
    %c0_69 = arith.constant 0 : index
    %c0_70 = arith.constant 0 : index
    %177 = vector.load %arg2[%c22, %c0_69, %c0_70] : memref<40x2x4xbf16, #tpu.memory_space<vmem>>, vector<1x2x4xbf16>
    %178 = vector.shape_cast %177 : vector<1x2x4xbf16> to vector<2x4xbf16>
    %179 = vector.shape_cast %178 : vector<2x4xbf16> to vector<1x2x4xbf16>
    %180 = vector.shape_cast %179 : vector<1x2x4xbf16> to vector<1x2x4xbf16>
    %181 = vector.broadcast %180 : vector<1x2x4xbf16> to vector<2x2x4xbf16>
    %182 = vector.extract_strided_slice %1 {offsets = [0, 0, 22], sizes = [2, 4, 80], strides = [1, 1, 1]} : vector<2x4x119xbf16> to vector<2x4x80xbf16>
    "tpu.trace_start"() <{level = 10 : i32, message = "bkc,bcu->bku"}> : () -> ()
    %cst_71 = arith.constant dense<0.000000e+00> : vector<2x2x80xf32>
    %183 = tpu.matmul %181, %182, %cst_71 {dimension_numbers = #tpu.dot_dimension_numbers<[2], [1], [1], [2], [0, 0, 0, 1, 1, 2], [0], [0]>} : vector<2x2x4xbf16>, vector<2x4x80xbf16>, vector<2x2x80xf32> -> vector<2x2x80xf32>
    "tpu.trace_stop"() : () -> ()
    %184 = arith.addf %176, %183 : vector<2x2x80xf32>
    %c23 = arith.constant 23 : index
    %c0_72 = arith.constant 0 : index
    %c0_73 = arith.constant 0 : index
    %185 = vector.load %arg2[%c23, %c0_72, %c0_73] : memref<40x2x4xbf16, #tpu.memory_space<vmem>>, vector<1x2x4xbf16>
    %186 = vector.shape_cast %185 : vector<1x2x4xbf16> to vector<2x4xbf16>
    %187 = vector.shape_cast %186 : vector<2x4xbf16> to vector<1x2x4xbf16>
    %188 = vector.shape_cast %187 : vector<1x2x4xbf16> to vector<1x2x4xbf16>
    %189 = vector.broadcast %188 : vector<1x2x4xbf16> to vector<2x2x4xbf16>
    %190 = vector.extract_strided_slice %1 {offsets = [0, 0, 23], sizes = [2, 4, 80], strides = [1, 1, 1]} : vector<2x4x119xbf16> to vector<2x4x80xbf16>
    "tpu.trace_start"() <{level = 10 : i32, message = "bkc,bcu->bku"}> : () -> ()
    %cst_74 = arith.constant dense<0.000000e+00> : vector<2x2x80xf32>
    %191 = tpu.matmul %189, %190, %cst_74 {dimension_numbers = #tpu.dot_dimension_numbers<[2], [1], [1], [2], [0, 0, 0, 1, 1, 2], [0], [0]>} : vector<2x2x4xbf16>, vector<2x4x80xbf16>, vector<2x2x80xf32> -> vector<2x2x80xf32>
    "tpu.trace_stop"() : () -> ()
    %192 = arith.addf %184, %191 : vector<2x2x80xf32>
    %c24 = arith.constant 24 : index
    %c0_75 = arith.constant 0 : index
    %c0_76 = arith.constant 0 : index
    %193 = vector.load %arg2[%c24, %c0_75, %c0_76] : memref<40x2x4xbf16, #tpu.memory_space<vmem>>, vector<1x2x4xbf16>
    %194 = vector.shape_cast %193 : vector<1x2x4xbf16> to vector<2x4xbf16>
    %195 = vector.shape_cast %194 : vector<2x4xbf16> to vector<1x2x4xbf16>
    %196 = vector.shape_cast %195 : vector<1x2x4xbf16> to vector<1x2x4xbf16>
    %197 = vector.broadcast %196 : vector<1x2x4xbf16> to vector<2x2x4xbf16>
    %198 = vector.extract_strided_slice %1 {offsets = [0, 0, 24], sizes = [2, 4, 80], strides = [1, 1, 1]} : vector<2x4x119xbf16> to vector<2x4x80xbf16>
    "tpu.trace_start"() <{level = 10 : i32, message = "bkc,bcu->bku"}> : () -> ()
    %cst_77 = arith.constant dense<0.000000e+00> : vector<2x2x80xf32>
    %199 = tpu.matmul %197, %198, %cst_77 {dimension_numbers = #tpu.dot_dimension_numbers<[2], [1], [1], [2], [0, 0, 0, 1, 1, 2], [0], [0]>} : vector<2x2x4xbf16>, vector<2x4x80xbf16>, vector<2x2x80xf32> -> vector<2x2x80xf32>
    "tpu.trace_stop"() : () -> ()
    %200 = arith.addf %192, %199 : vector<2x2x80xf32>
    %c25 = arith.constant 25 : index
    %c0_78 = arith.constant 0 : index
    %c0_79 = arith.constant 0 : index
    %201 = vector.load %arg2[%c25, %c0_78, %c0_79] : memref<40x2x4xbf16, #tpu.memory_space<vmem>>, vector<1x2x4xbf16>
    %202 = vector.shape_cast %201 : vector<1x2x4xbf16> to vector<2x4xbf16>
    %203 = vector.shape_cast %202 : vector<2x4xbf16> to vector<1x2x4xbf16>
    %204 = vector.shape_cast %203 : vector<1x2x4xbf16> to vector<1x2x4xbf16>
    %205 = vector.broadcast %204 : vector<1x2x4xbf16> to vector<2x2x4xbf16>
    %206 = vector.extract_strided_slice %1 {offsets = [0, 0, 25], sizes = [2, 4, 80], strides = [1, 1, 1]} : vector<2x4x119xbf16> to vector<2x4x80xbf16>
    "tpu.trace_start"() <{level = 10 : i32, message = "bkc,bcu->bku"}> : () -> ()
    %cst_80 = arith.constant dense<0.000000e+00> : vector<2x2x80xf32>
    %207 = tpu.matmul %205, %206, %cst_80 {dimension_numbers = #tpu.dot_dimension_numbers<[2], [1], [1], [2], [0, 0, 0, 1, 1, 2], [0], [0]>} : vector<2x2x4xbf16>, vector<2x4x80xbf16>, vector<2x2x80xf32> -> vector<2x2x80xf32>
    "tpu.trace_stop"() : () -> ()
    %208 = arith.addf %200, %207 : vector<2x2x80xf32>
    %c26 = arith.constant 26 : index
    %c0_81 = arith.constant 0 : index
    %c0_82 = arith.constant 0 : index
    %209 = vector.load %arg2[%c26, %c0_81, %c0_82] : memref<40x2x4xbf16, #tpu.memory_space<vmem>>, vector<1x2x4xbf16>
    %210 = vector.shape_cast %209 : vector<1x2x4xbf16> to vector<2x4xbf16>
    %211 = vector.shape_cast %210 : vector<2x4xbf16> to vector<1x2x4xbf16>
    %212 = vector.shape_cast %211 : vector<1x2x4xbf16> to vector<1x2x4xbf16>
    %213 = vector.broadcast %212 : vector<1x2x4xbf16> to vector<2x2x4xbf16>
    %214 = vector.extract_strided_slice %1 {offsets = [0, 0, 26], sizes = [2, 4, 80], strides = [1, 1, 1]} : vector<2x4x119xbf16> to vector<2x4x80xbf16>
    "tpu.trace_start"() <{level = 10 : i32, message = "bkc,bcu->bku"}> : () -> ()
    %cst_83 = arith.constant dense<0.000000e+00> : vector<2x2x80xf32>
    %215 = tpu.matmul %213, %214, %cst_83 {dimension_numbers = #tpu.dot_dimension_numbers<[2], [1], [1], [2], [0, 0, 0, 1, 1, 2], [0], [0]>} : vector<2x2x4xbf16>, vector<2x4x80xbf16>, vector<2x2x80xf32> -> vector<2x2x80xf32>
    "tpu.trace_stop"() : () -> ()
    %216 = arith.addf %208, %215 : vector<2x2x80xf32>
    %c27 = arith.constant 27 : index
    %c0_84 = arith.constant 0 : index
    %c0_85 = arith.constant 0 : index
    %217 = vector.load %arg2[%c27, %c0_84, %c0_85] : memref<40x2x4xbf16, #tpu.memory_space<vmem>>, vector<1x2x4xbf16>
    %218 = vector.shape_cast %217 : vector<1x2x4xbf16> to vector<2x4xbf16>
    %219 = vector.shape_cast %218 : vector<2x4xbf16> to vector<1x2x4xbf16>
    %220 = vector.shape_cast %219 : vector<1x2x4xbf16> to vector<1x2x4xbf16>
    %221 = vector.broadcast %220 : vector<1x2x4xbf16> to vector<2x2x4xbf16>
    %222 = vector.extract_strided_slice %1 {offsets = [0, 0, 27], sizes = [2, 4, 80], strides = [1, 1, 1]} : vector<2x4x119xbf16> to vector<2x4x80xbf16>
    "tpu.trace_start"() <{level = 10 : i32, message = "bkc,bcu->bku"}> : () -> ()
    %cst_86 = arith.constant dense<0.000000e+00> : vector<2x2x80xf32>
    %223 = tpu.matmul %221, %222, %cst_86 {dimension_numbers = #tpu.dot_dimension_numbers<[2], [1], [1], [2], [0, 0, 0, 1, 1, 2], [0], [0]>} : vector<2x2x4xbf16>, vector<2x4x80xbf16>, vector<2x2x80xf32> -> vector<2x2x80xf32>
    "tpu.trace_stop"() : () -> ()
    %224 = arith.addf %216, %223 : vector<2x2x80xf32>
    %c28 = arith.constant 28 : index
    %c0_87 = arith.constant 0 : index
    %c0_88 = arith.constant 0 : index
    %225 = vector.load %arg2[%c28, %c0_87, %c0_88] : memref<40x2x4xbf16, #tpu.memory_space<vmem>>, vector<1x2x4xbf16>
    %226 = vector.shape_cast %225 : vector<1x2x4xbf16> to vector<2x4xbf16>
    %227 = vector.shape_cast %226 : vector<2x4xbf16> to vector<1x2x4xbf16>
    %228 = vector.shape_cast %227 : vector<1x2x4xbf16> to vector<1x2x4xbf16>
    %229 = vector.broadcast %228 : vector<1x2x4xbf16> to vector<2x2x4xbf16>
    %230 = vector.extract_strided_slice %1 {offsets = [0, 0, 28], sizes = [2, 4, 80], strides = [1, 1, 1]} : vector<2x4x119xbf16> to vector<2x4x80xbf16>
    "tpu.trace_start"() <{level = 10 : i32, message = "bkc,bcu->bku"}> : () -> ()
    %cst_89 = arith.constant dense<0.000000e+00> : vector<2x2x80xf32>
    %231 = tpu.matmul %229, %230, %cst_89 {dimension_numbers = #tpu.dot_dimension_numbers<[2], [1], [1], [2], [0, 0, 0, 1, 1, 2], [0], [0]>} : vector<2x2x4xbf16>, vector<2x4x80xbf16>, vector<2x2x80xf32> -> vector<2x2x80xf32>
    "tpu.trace_stop"() : () -> ()
    %232 = arith.addf %224, %231 : vector<2x2x80xf32>
    %c29 = arith.constant 29 : index
    %c0_90 = arith.constant 0 : index
    %c0_91 = arith.constant 0 : index
    %233 = vector.load %arg2[%c29, %c0_90, %c0_91] : memref<40x2x4xbf16, #tpu.memory_space<vmem>>, vector<1x2x4xbf16>
    %234 = vector.shape_cast %233 : vector<1x2x4xbf16> to vector<2x4xbf16>
    %235 = vector.shape_cast %234 : vector<2x4xbf16> to vector<1x2x4xbf16>
    %236 = vector.shape_cast %235 : vector<1x2x4xbf16> to vector<1x2x4xbf16>
    %237 = vector.broadcast %236 : vector<1x2x4xbf16> to vector<2x2x4xbf16>
    %238 = vector.extract_strided_slice %1 {offsets = [0, 0, 29], sizes = [2, 4, 80], strides = [1, 1, 1]} : vector<2x4x119xbf16> to vector<2x4x80xbf16>
    "tpu.trace_start"() <{level = 10 : i32, message = "bkc,bcu->bku"}> : () -> ()
    %cst_92 = arith.constant dense<0.000000e+00> : vector<2x2x80xf32>
    %239 = tpu.matmul %237, %238, %cst_92 {dimension_numbers = #tpu.dot_dimension_numbers<[2], [1], [1], [2], [0, 0, 0, 1, 1, 2], [0], [0]>} : vector<2x2x4xbf16>, vector<2x4x80xbf16>, vector<2x2x80xf32> -> vector<2x2x80xf32>
    "tpu.trace_stop"() : () -> ()
    %240 = arith.addf %232, %239 : vector<2x2x80xf32>
    %c30 = arith.constant 30 : index
    %c0_93 = arith.constant 0 : index
    %c0_94 = arith.constant 0 : index
    %241 = vector.load %arg2[%c30, %c0_93, %c0_94] : memref<40x2x4xbf16, #tpu.memory_space<vmem>>, vector<1x2x4xbf16>
    %242 = vector.shape_cast %241 : vector<1x2x4xbf16> to vector<2x4xbf16>
    %243 = vector.shape_cast %242 : vector<2x4xbf16> to vector<1x2x4xbf16>
    %244 = vector.shape_cast %243 : vector<1x2x4xbf16> to vector<1x2x4xbf16>
    %245 = vector.broadcast %244 : vector<1x2x4xbf16> to vector<2x2x4xbf16>
    %246 = vector.extract_strided_slice %1 {offsets = [0, 0, 30], sizes = [2, 4, 80], strides = [1, 1, 1]} : vector<2x4x119xbf16> to vector<2x4x80xbf16>
    "tpu.trace_start"() <{level = 10 : i32, message = "bkc,bcu->bku"}> : () -> ()
    %cst_95 = arith.constant dense<0.000000e+00> : vector<2x2x80xf32>
    %247 = tpu.matmul %245, %246, %cst_95 {dimension_numbers = #tpu.dot_dimension_numbers<[2], [1], [1], [2], [0, 0, 0, 1, 1, 2], [0], [0]>} : vector<2x2x4xbf16>, vector<2x4x80xbf16>, vector<2x2x80xf32> -> vector<2x2x80xf32>
    "tpu.trace_stop"() : () -> ()
    %248 = arith.addf %240, %247 : vector<2x2x80xf32>
    %c31 = arith.constant 31 : index
    %c0_96 = arith.constant 0 : index
    %c0_97 = arith.constant 0 : index
    %249 = vector.load %arg2[%c31, %c0_96, %c0_97] : memref<40x2x4xbf16, #tpu.memory_space<vmem>>, vector<1x2x4xbf16>
    %250 = vector.shape_cast %249 : vector<1x2x4xbf16> to vector<2x4xbf16>
    %251 = vector.shape_cast %250 : vector<2x4xbf16> to vector<1x2x4xbf16>
    %252 = vector.shape_cast %251 : vector<1x2x4xbf16> to vector<1x2x4xbf16>
    %253 = vector.broadcast %252 : vector<1x2x4xbf16> to vector<2x2x4xbf16>
    %254 = vector.extract_strided_slice %1 {offsets = [0, 0, 31], sizes = [2, 4, 80], strides = [1, 1, 1]} : vector<2x4x119xbf16> to vector<2x4x80xbf16>
    "tpu.trace_start"() <{level = 10 : i32, message = "bkc,bcu->bku"}> : () -> ()
    %cst_98 = arith.constant dense<0.000000e+00> : vector<2x2x80xf32>
    %255 = tpu.matmul %253, %254, %cst_98 {dimension_numbers = #tpu.dot_dimension_numbers<[2], [1], [1], [2], [0, 0, 0, 1, 1, 2], [0], [0]>} : vector<2x2x4xbf16>, vector<2x4x80xbf16>, vector<2x2x80xf32> -> vector<2x2x80xf32>
    "tpu.trace_stop"() : () -> ()
    %256 = arith.addf %248, %255 : vector<2x2x80xf32>
    %c32 = arith.constant 32 : index
    %c0_99 = arith.constant 0 : index
    %c0_100 = arith.constant 0 : index
    %257 = vector.load %arg2[%c32, %c0_99, %c0_100] : memref<40x2x4xbf16, #tpu.memory_space<vmem>>, vector<1x2x4xbf16>
    %258 = vector.shape_cast %257 : vector<1x2x4xbf16> to vector<2x4xbf16>
    %259 = vector.shape_cast %258 : vector<2x4xbf16> to vector<1x2x4xbf16>
    %260 = vector.shape_cast %259 : vector<1x2x4xbf16> to vector<1x2x4xbf16>
    %261 = vector.broadcast %260 : vector<1x2x4xbf16> to vector<2x2x4xbf16>
    %262 = vector.extract_strided_slice %1 {offsets = [0, 0, 32], sizes = [2, 4, 80], strides = [1, 1, 1]} : vector<2x4x119xbf16> to vector<2x4x80xbf16>
    "tpu.trace_start"() <{level = 10 : i32, message = "bkc,bcu->bku"}> : () -> ()
    %cst_101 = arith.constant dense<0.000000e+00> : vector<2x2x80xf32>
    %263 = tpu.matmul %261, %262, %cst_101 {dimension_numbers = #tpu.dot_dimension_numbers<[2], [1], [1], [2], [0, 0, 0, 1, 1, 2], [0], [0]>} : vector<2x2x4xbf16>, vector<2x4x80xbf16>, vector<2x2x80xf32> -> vector<2x2x80xf32>
    "tpu.trace_stop"() : () -> ()
    %264 = arith.addf %256, %263 : vector<2x2x80xf32>
    %c33 = arith.constant 33 : index
    %c0_102 = arith.constant 0 : index
    %c0_103 = arith.constant 0 : index
    %265 = vector.load %arg2[%c33, %c0_102, %c0_103] : memref<40x2x4xbf16, #tpu.memory_space<vmem>>, vector<1x2x4xbf16>
    %266 = vector.shape_cast %265 : vector<1x2x4xbf16> to vector<2x4xbf16>
    %267 = vector.shape_cast %266 : vector<2x4xbf16> to vector<1x2x4xbf16>
    %268 = vector.shape_cast %267 : vector<1x2x4xbf16> to vector<1x2x4xbf16>
    %269 = vector.broadcast %268 : vector<1x2x4xbf16> to vector<2x2x4xbf16>
    %270 = vector.extract_strided_slice %1 {offsets = [0, 0, 33], sizes = [2, 4, 80], strides = [1, 1, 1]} : vector<2x4x119xbf16> to vector<2x4x80xbf16>
    "tpu.trace_start"() <{level = 10 : i32, message = "bkc,bcu->bku"}> : () -> ()
    %cst_104 = arith.constant dense<0.000000e+00> : vector<2x2x80xf32>
    %271 = tpu.matmul %269, %270, %cst_104 {dimension_numbers = #tpu.dot_dimension_numbers<[2], [1], [1], [2], [0, 0, 0, 1, 1, 2], [0], [0]>} : vector<2x2x4xbf16>, vector<2x4x80xbf16>, vector<2x2x80xf32> -> vector<2x2x80xf32>
    "tpu.trace_stop"() : () -> ()
    %272 = arith.addf %264, %271 : vector<2x2x80xf32>
    %c34 = arith.constant 34 : index
    %c0_105 = arith.constant 0 : index
    %c0_106 = arith.constant 0 : index
    %273 = vector.load %arg2[%c34, %c0_105, %c0_106] : memref<40x2x4xbf16, #tpu.memory_space<vmem>>, vector<1x2x4xbf16>
    %274 = vector.shape_cast %273 : vector<1x2x4xbf16> to vector<2x4xbf16>
    %275 = vector.shape_cast %274 : vector<2x4xbf16> to vector<1x2x4xbf16>
    %276 = vector.shape_cast %275 : vector<1x2x4xbf16> to vector<1x2x4xbf16>
    %277 = vector.broadcast %276 : vector<1x2x4xbf16> to vector<2x2x4xbf16>
    %278 = vector.extract_strided_slice %1 {offsets = [0, 0, 34], sizes = [2, 4, 80], strides = [1, 1, 1]} : vector<2x4x119xbf16> to vector<2x4x80xbf16>
    "tpu.trace_start"() <{level = 10 : i32, message = "bkc,bcu->bku"}> : () -> ()
    %cst_107 = arith.constant dense<0.000000e+00> : vector<2x2x80xf32>
    %279 = tpu.matmul %277, %278, %cst_107 {dimension_numbers = #tpu.dot_dimension_numbers<[2], [1], [1], [2], [0, 0, 0, 1, 1, 2], [0], [0]>} : vector<2x2x4xbf16>, vector<2x4x80xbf16>, vector<2x2x80xf32> -> vector<2x2x80xf32>
    "tpu.trace_stop"() : () -> ()
    %280 = arith.addf %272, %279 : vector<2x2x80xf32>
    %c35 = arith.constant 35 : index
    %c0_108 = arith.constant 0 : index
    %c0_109 = arith.constant 0 : index
    %281 = vector.load %arg2[%c35, %c0_108, %c0_109] : memref<40x2x4xbf16, #tpu.memory_space<vmem>>, vector<1x2x4xbf16>
    %282 = vector.shape_cast %281 : vector<1x2x4xbf16> to vector<2x4xbf16>
    %283 = vector.shape_cast %282 : vector<2x4xbf16> to vector<1x2x4xbf16>
    %284 = vector.shape_cast %283 : vector<1x2x4xbf16> to vector<1x2x4xbf16>
    %285 = vector.broadcast %284 : vector<1x2x4xbf16> to vector<2x2x4xbf16>
    %286 = vector.extract_strided_slice %1 {offsets = [0, 0, 35], sizes = [2, 4, 80], strides = [1, 1, 1]} : vector<2x4x119xbf16> to vector<2x4x80xbf16>
    "tpu.trace_start"() <{level = 10 : i32, message = "bkc,bcu->bku"}> : () -> ()
    %cst_110 = arith.constant dense<0.000000e+00> : vector<2x2x80xf32>
    %287 = tpu.matmul %285, %286, %cst_110 {dimension_numbers = #tpu.dot_dimension_numbers<[2], [1], [1], [2], [0, 0, 0, 1, 1, 2], [0], [0]>} : vector<2x2x4xbf16>, vector<2x4x80xbf16>, vector<2x2x80xf32> -> vector<2x2x80xf32>
    "tpu.trace_stop"() : () -> ()
    %288 = arith.addf %280, %287 : vector<2x2x80xf32>
    %c36 = arith.constant 36 : index
    %c0_111 = arith.constant 0 : index
    %c0_112 = arith.constant 0 : index
    %289 = vector.load %arg2[%c36, %c0_111, %c0_112] : memref<40x2x4xbf16, #tpu.memory_space<vmem>>, vector<1x2x4xbf16>
    %290 = vector.shape_cast %289 : vector<1x2x4xbf16> to vector<2x4xbf16>
    %291 = vector.shape_cast %290 : vector<2x4xbf16> to vector<1x2x4xbf16>
    %292 = vector.shape_cast %291 : vector<1x2x4xbf16> to vector<1x2x4xbf16>
    %293 = vector.broadcast %292 : vector<1x2x4xbf16> to vector<2x2x4xbf16>
    %294 = vector.extract_strided_slice %1 {offsets = [0, 0, 36], sizes = [2, 4, 80], strides = [1, 1, 1]} : vector<2x4x119xbf16> to vector<2x4x80xbf16>
    "tpu.trace_start"() <{level = 10 : i32, message = "bkc,bcu->bku"}> : () -> ()
    %cst_113 = arith.constant dense<0.000000e+00> : vector<2x2x80xf32>
    %295 = tpu.matmul %293, %294, %cst_113 {dimension_numbers = #tpu.dot_dimension_numbers<[2], [1], [1], [2], [0, 0, 0, 1, 1, 2], [0], [0]>} : vector<2x2x4xbf16>, vector<2x4x80xbf16>, vector<2x2x80xf32> -> vector<2x2x80xf32>
    "tpu.trace_stop"() : () -> ()
    %296 = arith.addf %288, %295 : vector<2x2x80xf32>
    %c37 = arith.constant 37 : index
    %c0_114 = arith.constant 0 : index
    %c0_115 = arith.constant 0 : index
    %297 = vector.load %arg2[%c37, %c0_114, %c0_115] : memref<40x2x4xbf16, #tpu.memory_space<vmem>>, vector<1x2x4xbf16>
    %298 = vector.shape_cast %297 : vector<1x2x4xbf16> to vector<2x4xbf16>
    %299 = vector.shape_cast %298 : vector<2x4xbf16> to vector<1x2x4xbf16>
    %300 = vector.shape_cast %299 : vector<1x2x4xbf16> to vector<1x2x4xbf16>
    %301 = vector.broadcast %300 : vector<1x2x4xbf16> to vector<2x2x4xbf16>
    %302 = vector.extract_strided_slice %1 {offsets = [0, 0, 37], sizes = [2, 4, 80], strides = [1, 1, 1]} : vector<2x4x119xbf16> to vector<2x4x80xbf16>
    "tpu.trace_start"() <{level = 10 : i32, message = "bkc,bcu->bku"}> : () -> ()
    %cst_116 = arith.constant dense<0.000000e+00> : vector<2x2x80xf32>
    %303 = tpu.matmul %301, %302, %cst_116 {dimension_numbers = #tpu.dot_dimension_numbers<[2], [1], [1], [2], [0, 0, 0, 1, 1, 2], [0], [0]>} : vector<2x2x4xbf16>, vector<2x4x80xbf16>, vector<2x2x80xf32> -> vector<2x2x80xf32>
    "tpu.trace_stop"() : () -> ()
    %304 = arith.addf %296, %303 : vector<2x2x80xf32>
    %c38 = arith.constant 38 : index
    %c0_117 = arith.constant 0 : index
    %c0_118 = arith.constant 0 : index
    %305 = vector.load %arg2[%c38, %c0_117, %c0_118] : memref<40x2x4xbf16, #tpu.memory_space<vmem>>, vector<1x2x4xbf16>
    %306 = vector.shape_cast %305 : vector<1x2x4xbf16> to vector<2x4xbf16>
    %307 = vector.shape_cast %306 : vector<2x4xbf16> to vector<1x2x4xbf16>
    %308 = vector.shape_cast %307 : vector<1x2x4xbf16> to vector<1x2x4xbf16>
    %309 = vector.broadcast %308 : vector<1x2x4xbf16> to vector<2x2x4xbf16>
    %310 = vector.extract_strided_slice %1 {offsets = [0, 0, 38], sizes = [2, 4, 80], strides = [1, 1, 1]} : vector<2x4x119xbf16> to vector<2x4x80xbf16>
    "tpu.trace_start"() <{level = 10 : i32, message = "bkc,bcu->bku"}> : () -> ()
    %cst_119 = arith.constant dense<0.000000e+00> : vector<2x2x80xf32>
    %311 = tpu.matmul %309, %310, %cst_119 {dimension_numbers = #tpu.dot_dimension_numbers<[2], [1], [1], [2], [0, 0, 0, 1, 1, 2], [0], [0]>} : vector<2x2x4xbf16>, vector<2x4x80xbf16>, vector<2x2x80xf32> -> vector<2x2x80xf32>
    "tpu.trace_stop"() : () -> ()
    %312 = arith.addf %304, %311 : vector<2x2x80xf32>
    %c39 = arith.constant 39 : index
    %c0_120 = arith.constant 0 : index
    %c0_121 = arith.constant 0 : index
    %313 = vector.load %arg2[%c39, %c0_120, %c0_121] : memref<40x2x4xbf16, #tpu.memory_space<vmem>>, vector<1x2x4xbf16>
    %314 = vector.shape_cast %313 : vector<1x2x4xbf16> to vector<2x4xbf16>
    %315 = vector.shape_cast %314 : vector<2x4xbf16> to vector<1x2x4xbf16>
    %316 = vector.shape_cast %315 : vector<1x2x4xbf16> to vector<1x2x4xbf16>
    %317 = vector.broadcast %316 : vector<1x2x4xbf16> to vector<2x2x4xbf16>
    %318 = vector.extract_strided_slice %1 {offsets = [0, 0, 39], sizes = [2, 4, 80], strides = [1, 1, 1]} : vector<2x4x119xbf16> to vector<2x4x80xbf16>
    "tpu.trace_start"() <{level = 10 : i32, message = "bkc,bcu->bku"}> : () -> ()
    %cst_122 = arith.constant dense<0.000000e+00> : vector<2x2x80xf32>
    %319 = tpu.matmul %317, %318, %cst_122 {dimension_numbers = #tpu.dot_dimension_numbers<[2], [1], [1], [2], [0, 0, 0, 1, 1, 2], [0], [0]>} : vector<2x2x4xbf16>, vector<2x4x80xbf16>, vector<2x2x80xf32> -> vector<2x2x80xf32>
    "tpu.trace_stop"() : () -> ()
    %320 = arith.addf %312, %319 : vector<2x2x80xf32>
    %c0_123 = arith.constant 0 : index
    %c0_124 = arith.constant 0 : index
    %321 = vector.load %arg3[%c0_123, %c0_124] : memref<2x1xf32, #tpu.memory_space<vmem>>, vector<2x1xf32>
    %322 = vector.shape_cast %321 : vector<2x1xf32> to vector<1x2x1xf32>
    %323 = vector.broadcast %322 : vector<1x2x1xf32> to vector<2x2x80xf32>
    %324 = arith.addf %320, %323 : vector<2x2x80xf32>
    %c0_125 = arith.constant 0 : index
    %c0_126 = arith.constant 0 : index
    %325 = vector.load %arg4[%c0_125, %c0_126] : memref<1x80xf32, #tpu.memory_space<vmem>>, vector<1x80xf32>
    %326 = vector.shape_cast %325 : vector<1x80xf32> to vector<1x1x80xf32>
    %327 = vector.broadcast %326 : vector<1x1x80xf32> to vector<2x2x80xf32>
    %328 = arith.mulf %324, %327 : vector<2x2x80xf32>
    %329 = vector.extract_strided_slice %328 {offsets = [0, 0, 0], sizes = [2, 2, 40], strides = [1, 1, 1]} : vector<2x2x80xf32> to vector<2x2x40xf32>
    %cst_127 = arith.constant dense<0xFF800000> : vector<2x2xf32>
    %330 = vector.multi_reduction <maximumf>, %329, %cst_127 [2] : vector<2x2x40xf32> to vector<2x2xf32>
    %331 = vector.extract_strided_slice %328 {offsets = [0, 0, 40], sizes = [2, 2, 40], strides = [1, 1, 1]} : vector<2x2x80xf32> to vector<2x2x40xf32>
    %cst_128 = arith.constant dense<0xFF800000> : vector<2x2xf32>
    %332 = vector.multi_reduction <maximumf>, %331, %cst_128 [2] : vector<2x2x40xf32> to vector<2x2xf32>
    %333 = tpu.concatenate %330, %332 in 1 : vector<2x2xf32>, vector<2x2xf32> -> vector<2x4xf32>
    %cst_129 = arith.constant 0.000000e+00 : f32
    %334 = vector.broadcast %cst_129 : f32 to vector<2x4xf32>
    %335 = arith.maximumf %333, %334 : vector<2x4xf32>
    %c0_130 = arith.constant 0 : index
    %c0_131 = arith.constant 0 : index
    %336 = vector.load %arg5[%c0_130, %c0_131] : memref<4x128xf32, #tpu.memory_space<vmem>>, vector<4x128xf32>
    %cst_132 = arith.constant dense<0.000000e+00> : vector<2x128xf32>
    %337 = tpu.matmul %335, %336, %cst_132 {dimension_numbers = #tpu.dot_dimension_numbers<[1], [0], [0], [1], [0, 0, 1, 1], [], []>} : vector<2x4xf32>, vector<4x128xf32>, vector<2x128xf32> -> vector<2x128xf32>
    %c0_133 = arith.constant 0 : index
    %c0_134 = arith.constant 0 : index
    %338 = vector.load %arg6[%c0_133, %c0_134] : memref<1x128xf32, #tpu.memory_space<vmem>>, vector<1x128xf32>
    %339 = vector.broadcast %338 : vector<1x128xf32> to vector<2x128xf32>
    %340 = arith.addf %337, %339 : vector<2x128xf32>
    %c0_135 = arith.constant 0 : index
    %c0_136 = arith.constant 0 : index
    %c0_137 = arith.constant 0 : index
    %341 = vector.load %arg7[%c0_135, %c0_136, %c0_137] : memref<1x2x128xf32, #tpu.memory_space<vmem>>, vector<1x2x128xf32>
    %342 = vector.shape_cast %341 : vector<1x2x128xf32> to vector<2x128xf32>
    %343 = vector.shape_cast %340 : vector<2x128xf32> to vector<1x2x128xf32>
    tpu.vector_store %arg7[%c0_135, %c0_136, %c0_137], %343 {strides = array<i32>} : memref<1x2x128xf32, #tpu.memory_space<vmem>>, vector<1x2x128xf32>,
    return
  }
  func.func @transform_0(%arg0: i32) -> (i32, i32, i32, i32) {
    %c0_i32 = arith.constant 0 : i32
    %c0_i32_0 = arith.constant 0 : i32
    %c0_i32_1 = arith.constant 0 : i32
    %c0_i32_2 = arith.constant 0 : i32
    return %arg0, %c0_i32, %c0_i32_0, %c0_i32_1 : i32, i32, i32, i32
  }
  func.func @transform_1(%arg0: i32) -> (i32, i32, i32) {
    %c0_i32 = arith.constant 0 : i32
    %c0_i32_0 = arith.constant 0 : i32
    %c0_i32_1 = arith.constant 0 : i32
    %c0_i32_2 = arith.constant 0 : i32
    return %c0_i32, %c0_i32_0, %c0_i32_1 : i32, i32, i32
  }
  func.func @transform_2(%arg0: i32) -> (i32, i32) {
    %c0_i32 = arith.constant 0 : i32
    %c0_i32_0 = arith.constant 0 : i32
    %c0_i32_1 = arith.constant 0 : i32
    return %c0_i32, %c0_i32_0 : i32, i32
  }
  func.func @transform_3(%arg0: i32) -> (i32, i32) {
    %c0_i32 = arith.constant 0 : i32
    %c0_i32_0 = arith.constant 0 : i32
    %c0_i32_1 = arith.constant 0 : i32
    return %c0_i32, %c0_i32_0 : i32, i32
  }
  func.func @transform_4(%arg0: i32) -> (i32, i32) {
    %c0_i32 = arith.constant 0 : i32
    %c0_i32_0 = arith.constant 0 : i32
    %c0_i32_1 = arith.constant 0 : i32
    return %c0_i32, %c0_i32_0 : i32, i32
  }
  func.func @transform_5(%arg0: i32) -> (i32, i32) {
    %c0_i32 = arith.constant 0 : i32
    %c0_i32_0 = arith.constant 0 : i32
    %c0_i32_1 = arith.constant 0 : i32
    return %c0_i32, %c0_i32_0 : i32, i32
  }
  func.func @transform_6(%arg0: i32) -> (i32, i32, i32) {
    %c0_i32 = arith.constant 0 : i32
    %c0_i32_0 = arith.constant 0 : i32
    %c0_i32_1 = arith.constant 0 : i32
    return %arg0, %c0_i32, %c0_i32_0 : i32, i32, i32
  }
}

</mosaic_0001>

<llo_original>
// kernel: tpu_custom_call.1
$region0: #{tpu_custom_call.1}
  #allocation0 [shape = 'u32[]', space=smem, size = 0x4, offset = 0x4, fixed_abs, tag = 'smem constant byte address 0x4 - core index']
  #allocation1 [shape = 'u32[144,128]{1,0:T(1,128)}', space=vmem, size = 0x12000, scoped, tag = 'internal scratch']
  %s0 = inlined_call_operand.vmem [shape: bf16[2,2,4,119], index: 0, kind: input, shape index: {}]
  %s1 = inlined_call_operand.vmem [shape: bf16[40,2,4], index: 1, kind: input, shape index: {}]
  %s2 = inlined_call_operand.vmem [shape: f32[2,1], index: 2, kind: input, shape index: {}]
  %s3 = inlined_call_operand.vmem [shape: f32[1,80], index: 3, kind: input, shape index: {}]
  %s4 = inlined_call_operand.vmem [shape: f32[4,128], index: 4, kind: input, shape index: {}]
  %s5 = inlined_call_operand.vmem [shape: f32[1,128], index: 5, kind: input, shape index: {}]
  %s6 = inlined_call_operand.hbm [shape: f32[2,2,128], index: 6, kind: output, shape index: {}]
  %s7 = sld [smem:[#allocation0]]
  $region57: #{tpu_custom_call.1} parent=0
    _
  %s9 = ssub.s32 1, %s7
  %s10 = scalar_select 0, %s9, %s7
  $region1: #{tpu_custom_call.1} parent=0
    #allocation2 [shape = 'u8[2048]{0}', space=vmem, size = 0x800, scoped, tag = 'output window, operand 0']
    #allocation3 [shape = 's32[2]{0}', space=sflag, size = 0x8, scoped, tag = 'scoped memory for tpu_custom_call.1']
    %11 = vsyncpa [#allocation3], 0
    %s12 = scalar_lea.sflag [#allocation3], 1
    %13 = vsyncpa %s12, 0
    loop: start=0, step=1, limit=4
    $region2: #{tpu_custom_call.1} parent=1 // loop_pre_header
      _
    $region3: #{tpu_custom_call.1} parent=1 // loop_header
      %s15 = sphi 0, %s19
      %p16 = scmp.ge.s32.totalorder %s15, 4
      %s25 = sphi 0, %s27
      %s28 = sphi 0, %s25
      %s29 = sphi 0, %s28
      %s45 = sphi 0, %s29
      %s49 = sphi 0, %s49
      %s51 = sphi 0, %s49
      %s52 = sphi 0, %s51
      %s66 = sphi 0, %s52
      %s70 = sphi 0, %s70
      %s72 = sphi 0, %s70
      %s73 = sphi 0, %s72
      %s87 = sphi 0, %s73
      %s91 = sphi 0, %s91
      %s93 = sphi 0, %s91
      %s94 = sphi 0, %s93
      %s108 = sphi 0, %s94
      %s112 = sphi 0, %s112
      %s114 = sphi 0, %s112
      %s115 = sphi 0, %s114
      %s129 = sphi 0, %s115
      %s133 = sphi 0, %s133
      %s135 = sphi 0, %s133
      %s136 = sphi 0, %s135
      %s150 = sphi 0, %s136
      %s156 = sphi 0, %s158
      %s159 = sphi 0, %s156
      %s160 = sphi 0, %s159
      %s176 = sphi 0, %s160
    $region4: #{tpu_custom_call.1} parent=1 // loop_header_branch
      %18 = sbr.rel (%p16) target = $region8
    $region5: #{tpu_custom_call.1} parent=1 // loop_body
      %s20 = ssub.s32 %s15, 1
      %s21 = ssub.s32 %s15, 2
      %s22 = sadd.s32 %s15, 1
      %s23 = ssub.s32 %s15, %s22
      %p24 = scmp.eq.s32.totalorder %s23, 0
      %s26 = sadd.s32 %s25, 1
      %s27 = scalar_select %p24, %s25, %s26
      %p30 = pneg %p24
      %p31 = scmp.eq.s32.totalorder %s15, 1
      %p32 = por %p30, %p31
      %p33 = scmp.ne.s32.totalorder %s25, %s28
      %p34 = scmp.eq.s32.totalorder %s15, 0
      %p35 = por %p33, %p34
      %p36 = scmp.ne.s32.totalorder %s25, %s28
      %p37 = scmp.eq.s32.totalorder %s20, 1
      %p38 = por %p36, %p37
      %p39 = scmp.ne.s32.totalorder %s28, %s29
      %p40 = scmp.eq.s32.totalorder %s20, 0
      %p41 = por %p39, %p40
      %p42 = scmp.ne.s32.totalorder %s28, %s29
      %p43 = scmp.eq.s32.totalorder %s21, 1
      %p44 = por %p42, %p43
      %p46 = scmp.ne.s32.totalorder %s29, %s45
      %p47 = scmp.eq.s32.totalorder %s21, 0
      %p48 = por %p46, %p47
      %s50 = sadd.s32 %s49, 1
      %p53 = scmp.eq.s32.totalorder %s15, 1
      %p54 = scmp.ne.s32.totalorder %s49, %s51
      %p55 = scmp.eq.s32.totalorder %s15, 0
      %p56 = por %p54, %p55
      %p57 = scmp.ne.s32.totalorder %s49, %s51
      %p58 = scmp.eq.s32.totalorder %s20, 1
      %p59 = por %p57, %p58
      %p60 = scmp.ne.s32.totalorder %s51, %s52
      %p61 = scmp.eq.s32.totalorder %s20, 0
      %p62 = por %p60, %p61
      %p63 = scmp.ne.s32.totalorder %s51, %s52
      %p64 = scmp.eq.s32.totalorder %s21, 1
      %p65 = por %p63, %p64
      %p67 = scmp.ne.s32.totalorder %s52, %s66
      %p68 = scmp.eq.s32.totalorder %s21, 0
      %p69 = por %p67, %p68
      %s71 = sadd.s32 %s70, 1
      %p74 = scmp.eq.s32.totalorder %s15, 1
      %p75 = scmp.ne.s32.totalorder %s70, %s72
      %p76 = scmp.eq.s32.totalorder %s15, 0
      %p77 = por %p75, %p76
      %p78 = scmp.ne.s32.totalorder %s70, %s72
      %p79 = scmp.eq.s32.totalorder %s20, 1
      %p80 = por %p78, %p79
      %p81 = scmp.ne.s32.totalorder %s72, %s73
      %p82 = scmp.eq.s32.totalorder %s20, 0
      %p83 = por %p81, %p82
      %p84 = scmp.ne.s32.totalorder %s72, %s73
      %p85 = scmp.eq.s32.totalorder %s21, 1
      %p86 = por %p84, %p85
      %p88 = scmp.ne.s32.totalorder %s73, %s87
      %p89 = scmp.eq.s32.totalorder %s21, 0
      %p90 = por %p88, %p89
      %s92 = sadd.s32 %s91, 1
      %p95 = scmp.eq.s32.totalorder %s15, 1
      %p96 = scmp.ne.s32.totalorder %s91, %s93
      %p97 = scmp.eq.s32.totalorder %s15, 0
      %p98 = por %p96, %p97
      %p99 = scmp.ne.s32.totalorder %s91, %s93
      %p100 = scmp.eq.s32.totalorder %s20, 1
      %p101 = por %p99, %p100
      %p102 = scmp.ne.s32.totalorder %s93, %s94
      %p103 = scmp.eq.s32.totalorder %s20, 0
      %p104 = por %p102, %p103
      %p105 = scmp.ne.s32.totalorder %s93, %s94
      %p106 = scmp.eq.s32.totalorder %s21, 1
      %p107 = por %p105, %p106
      %p109 = scmp.ne.s32.totalorder %s94, %s108
      %p110 = scmp.eq.s32.totalorder %s21, 0
      %p111 = por %p109, %p110
      %s113 = sadd.s32 %s112, 1
      %p116 = scmp.eq.s32.totalorder %s15, 1
      %p117 = scmp.ne.s32.totalorder %s112, %s114
      %p118 = scmp.eq.s32.totalorder %s15, 0
      %p119 = por %p117, %p118
      %p120 = scmp.ne.s32.totalorder %s112, %s114
      %p121 = scmp.eq.s32.totalorder %s20, 1
      %p122 = por %p120, %p121
      %p123 = scmp.ne.s32.totalorder %s114, %s115
      %p124 = scmp.eq.s32.totalorder %s20, 0
      %p125 = por %p123, %p124
      %p126 = scmp.ne.s32.totalorder %s114, %s115
      %p127 = scmp.eq.s32.totalorder %s21, 1
      %p128 = por %p126, %p127
      %p130 = scmp.ne.s32.totalorder %s115, %s129
      %p131 = scmp.eq.s32.totalorder %s21, 0
      %p132 = por %p130, %p131
      %s134 = sadd.s32 %s133, 1
      %p137 = scmp.eq.s32.totalorder %s15, 1
      %p138 = scmp.ne.s32.totalorder %s133, %s135
      %p139 = scmp.eq.s32.totalorder %s15, 0
      %p140 = por %p138, %p139
      %p141 = scmp.ne.s32.totalorder %s133, %s135
      %p142 = scmp.eq.s32.totalorder %s20, 1
      %p143 = por %p141, %p142
      %p144 = scmp.ne.s32.totalorder %s135, %s136
      %p145 = scmp.eq.s32.totalorder %s20, 0
      %p146 = por %p144, %p145
      %p147 = scmp.ne.s32.totalorder %s135, %s136
      %p148 = scmp.eq.s32.totalorder %s21, 1
      %p149 = por %p147, %p148
      %p151 = scmp.ne.s32.totalorder %s136, %s150
      %p152 = scmp.eq.s32.totalorder %s21, 0
      %p153 = por %p151, %p152
      %s154 = ssub.s32 %s15, %s22
      %p155 = scmp.eq.s32.totalorder %s154, 0
      %s157 = sadd.s32 %s156, 1
      %s158 = scalar_select %p155, %s156, %s157
      %p161 = pneg %p155
      %p162 = scmp.eq.s32.totalorder %s15, 1
      %p163 = por %p161, %p162
      %p164 = scmp.ne.s32.totalorder %s156, %s159
      %p165 = scmp.eq.s32.totalorder %s15, 0
      %p166 = por %p164, %p165
      %p167 = scmp.ne.s32.totalorder %s156, %s159
      %p168 = scmp.eq.s32.totalorder %s20, 1
      %p169 = por %p167, %p168
      %p170 = scmp.ne.s32.totalorder %s159, %s160
      %p171 = scmp.eq.s32.totalorder %s20, 0
      %p172 = por %p170, %p171
      %p173 = scmp.ne.s32.totalorder %s159, %s160
      %p174 = scmp.eq.s32.totalorder %s21, 1
      %p175 = por %p173, %p174
      %p177 = scmp.ne.s32.totalorder %s160, %s176
      %p178 = scmp.eq.s32.totalorder %s21, 0
      %p179 = por %p177, %p178
      %p180 = scmp.le.s32.totalorder 1, %s15
      %p181 = scmp.lt.s32.totalorder %s15, 3
      %p182 = pnand %p180, %p181
      %p183 = pneg %p182
      // Predicated region
      $region9: #{tpu_custom_call.1} parent=5 // pred_check
        _
      $region10: #{tpu_custom_call.1} parent=5 // pred_check_branch
        %185 = sbr.rel (%p182) target = $region12
      $region11: #{tpu_custom_call.1} parent=5 // pred_region
        %s186 = ssub.s32 %s15, 1
        // Predicated region
        $region13: #{tpu_custom_call.1} parent=11 // pred_check
          %p187 = pneg %p62
        $region14: #{tpu_custom_call.1} parent=11 // pred_check_branch
          %189 = sbr.rel (%p187) target = $region16
        $region15: #{tpu_custom_call.1} parent=11 // pred_region
          _
        $region16: #{tpu_custom_call.1} parent=11 // pred_fallthru
          _
        // Predicated region
        $region17: #{tpu_custom_call.1} parent=11 // pred_check
          %p190 = pneg %p83
        $region18: #{tpu_custom_call.1} parent=11 // pred_check_branch
          %192 = sbr.rel (%p190) target = $region20
        $region19: #{tpu_custom_call.1} parent=11 // pred_region
          _
        $region20: #{tpu_custom_call.1} parent=11 // pred_fallthru
          _
        // Predicated region
        $region21: #{tpu_custom_call.1} parent=11 // pred_check
          %p193 = pneg %p104
        $region22: #{tpu_custom_call.1} parent=11 // pred_check_branch
          %195 = sbr.rel (%p193) target = $region24
        $region23: #{tpu_custom_call.1} parent=11 // pred_region
          _
        $region24: #{tpu_custom_call.1} parent=11 // pred_fallthru
          _
        // Predicated region
        $region25: #{tpu_custom_call.1} parent=11 // pred_check
          %p196 = pneg %p125
        $region26: #{tpu_custom_call.1} parent=11 // pred_check_branch
          %198 = sbr.rel (%p196) target = $region28
        $region27: #{tpu_custom_call.1} parent=11 // pred_region
          _
        $region28: #{tpu_custom_call.1} parent=11 // pred_fallthru
          _
        // Predicated region
        $region29: #{tpu_custom_call.1} parent=11 // pred_check
          %p199 = pneg %p146
        $region30: #{tpu_custom_call.1} parent=11 // pred_check_branch
          %201 = sbr.rel (%p199) target = $region32
        $region31: #{tpu_custom_call.1} parent=11 // pred_region
          _
        $region32: #{tpu_custom_call.1} parent=11 // pred_fallthru
          _
      $region12: #{tpu_custom_call.1} parent=5 // pred_fallthru
        _
      %p202 = scmp.lt.s32.totalorder %s15, 2
      // Predicated region
      $region33: #{tpu_custom_call.1} parent=5 // pred_check
        %p203 = pneg %p202
      $region34: #{tpu_custom_call.1} parent=5 // pred_check_branch
        %205 = sbr.rel (%p203) target = $region36
      $region35: #{tpu_custom_call.1} parent=5 // pred_region
        // Predicated region
        $region37: #{tpu_custom_call.1} parent=35 // pred_check
          %p206 = pneg %p35
        $region38: #{tpu_custom_call.1} parent=35 // pred_check_branch
          %208 = sbr.rel (%p206) target = $region40
        $region39: #{tpu_custom_call.1} parent=35 // pred_region
          %p209 = scmp.lt.s32.totalorder %s15, 1
          %s210 = scalar_select %p209, %s15, 1
          %s211 = smul.addr %s210, 2
          %s212 = smul.addr %s211, 2
          %s213 = scalar_lea.vmem %s0, %s212
        $region40: #{tpu_custom_call.1} parent=35 // pred_fallthru
          _
      $region36: #{tpu_custom_call.1} parent=5 // pred_fallthru
        _
      %p214 = scmp.le.s32.totalorder 1, %s15
      %p215 = scmp.lt.s32.totalorder %s15, 3
      %p216 = pnand %p214, %p215
      %p217 = pneg %p216
      // Predicated region
      $region41: #{tpu_custom_call.1} parent=5 // pred_check
        _
      $region42: #{tpu_custom_call.1} parent=5 // pred_check_branch
        %219 = sbr.rel (%p216) target = $region44
      $region43: #{tpu_custom_call.1} parent=5 // pred_region
        %s220 = ssub.s32 %s15, 1
        %p221 = scmp.lt.s32.totalorder %s20, 1
        %s222 = scalar_select %p221, %s20, 1
        %s223 = smul.addr %s222, 2
        %s224 = smul.addr %s223, 2
        %s225 = scalar_lea.vmem %s0, %s224
        %p226 = pneg %p41
        %p227 = pneg %p38
        %p228 = pneg %p62
        %p229 = pneg %p59
        %p230 = pneg %p83
        %p231 = pneg %p80
        %p232 = pneg %p104
        %p233 = pneg %p101
        %p234 = pneg %p125
        %p235 = pneg %p122
        %p236 = pneg %p146
        %p237 = pneg %p143
        %p238 = pneg %p172
        %p239 = pneg %p169
        %s240 = sand.u32 %s159, 1
        %s241 = scalar_lea.sflag [#allocation3], %s240
        %s242 = sand.u32 %s159, 1
        %s243 = smul.addr %s242, 2
        %s244 = scalar_lea.vmem [#allocation2], %s243
        %p245 = scmp.lt.s32.totalorder %s20, 1
        %s246 = scalar_select %p245, %s20, 1
        %s247 = smul.addr %s246, 2
        %s248 = smul.addr %s247, 2
        %s249 = scalar_lea.vmem %s0, %s248
        %v251 = vld [vmem:[%s249] sm:$0x3]
        %v252 = vld [vmem:[%s249 + $0x2] sm:$0x3]
        %v253 = vld [vmem:[%s1] sm:$0x1]
        %s254 = scalar_lea.vmem %s1, 1
        %v255 = vld [vmem:[%s254] sm:$0x1]
        %v258 = vunpack.c.l.s4 1983009808
        %v259 = vunpack.c.0.s8 %v258
        %v260 = vlaneseq
        %v261 = vshrl.u32 %v260, 7
        %v262 = vsub.s32 %v259, %v261
        %v263 = vrot.slane %v251, %v262
        %264 = vrot.lane.b32.xlu0 %v263, 127
        %v265 = vpop.permute.xlu0 %264
        %vm266 = vcmask 31744
        %v268 = vsel %vm266, %v255, 0
        %vm270 = vcmask 1041408
        %v272 = vsel %vm270, %v265, 0
        %274 = vmatprep.subr.bf16.mxu0 0
        %275 = vmatpush1.bf16.msra.mxu0 %v272
        %276 = vmatprep.subr.bf16.mxu0 0
        %277 = vmatpush1.bf16.msra.mxu0 0
        %278 = vmatprep.subr.bf16.mxu0 0
        %279 = vmatpush1.bf16.msra.mxu0 0
        %280 = vmatprep.subr.bf16.mxu0 0
        %281 = vmatpush1.bf16.msra.mxu0 0
        %282 = vmatprep.subr.bf16.mxu0 0
        %283 = vmatpush1.bf16.msra.mxu0 0
        %284 = vmatprep.subr.bf16.mxu0 0
        %285 = vmatpush1.bf16.msra.mxu0 0
        %286 = vmatprep.subr.bf16.mxu0 0
        %287 = vmatpush1.bf16.msra.mxu0 0
        %288 = vmatprep.subr.bf16.mxu0 0
        %289 = vmatpush1.bf16.msra.mxu0 0
        %290 = vmatprep.subr.bf16.mxu0 0
        %291 = vmatpush1.bf16.msra.mxu0 0
        %292 = vmatprep.subr.bf16.mxu0 0
        %293 = vmatpush1.bf16.msra.mxu0 0
        %294 = vmatprep.subr.bf16.mxu0 0
        %295 = vmatpush1.bf16.msra.mxu0 0
        %296 = vmatprep.subr.bf16.mxu0 0
        %297 = vmatpush1.bf16.msra.mxu0 0
        %298 = vmatprep.subr.bf16.mxu0 0
        %299 = vmatpush1.bf16.msra.mxu0 0
        %300 = vmatprep.subr.bf16.mxu0 0
        %301 = vmatpush1.bf16.msra.mxu0 0
        %302 = vmatprep.subr.bf16.mxu0 0
        %303 = vmatpush1.bf16.msra.mxu0 0
        %304 = vmatprep.subr.bf16.mxu0 0
        %305 = vmatpush1.bf16.msra.mxu0 0
        %306 = vmatprep.mubr.bf16.mxu0 0
        %307 = vmatmul.mubr.bf16.gmra.mrb[0].mxu0 %v268
        %v308 = vpop.f32.mrb[0].mxu0
        %v309 = vadd.f32 0.0, %v308
        %v310 = vpop.f32.mrb[0].mxu0
        %v311 = vpop.f32.mrb[0].mxu0
        %v312 = vpop.f32.mrb[0].mxu0
        %313 = vdwg.mxu0
        %v316 = vunpack.c.l.s4 1983009808
        %v317 = vunpack.c.0.s8 %v316
        %v318 = vlaneseq
        %v319 = vshrl.u32 %v318, 7
        %v320 = vsub.s32 %v317, %v319
        %v321 = vrot.slane %v252, %v320
        %322 = vrot.lane.b32.xlu0 %v321, 127
        %v323 = vpop.permute.xlu0 %322
        %v325 = vsel %vm270, %v323, 0
        %327 = vmatprep.subr.bf16.mxu0 0
        %328 = vmatpush1.bf16.msra.mxu0 %v325
        %329 = vmatprep.subr.bf16.mxu0 0
        %330 = vmatpush1.bf16.msra.mxu0 0
        %331 = vmatprep.subr.bf16.mxu0 0
        %332 = vmatpush1.bf16.msra.mxu0 0
        %333 = vmatprep.subr.bf16.mxu0 0
        %334 = vmatpush1.bf16.msra.mxu0 0
        %335 = vmatprep.subr.bf16.mxu0 0
        %336 = vmatpush1.bf16.msra.mxu0 0
        %337 = vmatprep.subr.bf16.mxu0 0
        %338 = vmatpush1.bf16.msra.mxu0 0
        %339 = vmatprep.subr.bf16.mxu0 0
        %340 = vmatpush1.bf16.msra.mxu0 0
        %341 = vmatprep.subr.bf16.mxu0 0
        %342 = vmatpush1.bf16.msra.mxu0 0
        %343 = vmatprep.subr.bf16.mxu0 0
        %344 = vmatpush1.bf16.msra.mxu0 0
        %345 = vmatprep.subr.bf16.mxu0 0
        %346 = vmatpush1.bf16.msra.mxu0 0
        %347 = vmatprep.subr.bf16.mxu0 0
        %348 = vmatpush1.bf16.msra.mxu0 0
        %349 = vmatprep.subr.bf16.mxu0 0
        %350 = vmatpush1.bf16.msra.mxu0 0
        %351 = vmatprep.subr.bf16.mxu0 0
        %352 = vmatpush1.bf16.msra.mxu0 0
        %353 = vmatprep.subr.bf16.mxu0 0
        %354 = vmatpush1.bf16.msra.mxu0 0
        %355 = vmatprep.subr.bf16.mxu0 0
        %356 = vmatpush1.bf16.msra.mxu0 0
        %357 = vmatprep.subr.bf16.mxu0 0
        %358 = vmatpush1.bf16.msra.mxu0 0
        %359 = vmatprep.mubr.bf16.mxu0 0
        %360 = vmatmul.mubr.bf16.gmra.mrb[0].mxu0 %v268
        %v361 = vpop.f32.mrb[0].mxu0
        %v362 = vadd.f32 0.0, %v361
        %v363 = vpop.f32.mrb[0].mxu0
        %v364 = vpop.f32.mrb[0].mxu0
        %v365 = vpop.f32.mrb[0].mxu0
        %366 = vdwg.mxu0
        %v368 = vsel %vm266, %v253, 0
        %v371 = vsel %vm270, %v251, 0
        %373 = vmatprep.subr.bf16.mxu0 0
        %374 = vmatpush1.bf16.msra.mxu0 %v371
        %375 = vmatprep.subr.bf16.mxu0 0
        %376 = vmatpush1.bf16.msra.mxu0 0
        %377 = vmatprep.subr.bf16.mxu0 0
        %378 = vmatpush1.bf16.msra.mxu0 0
        %379 = vmatprep.subr.bf16.mxu0 0
        %380 = vmatpush1.bf16.msra.mxu0 0
        %381 = vmatprep.subr.bf16.mxu0 0
        %382 = vmatpush1.bf16.msra.mxu0 0
        %383 = vmatprep.subr.bf16.mxu0 0
        %384 = vmatpush1.bf16.msra.mxu0 0
        %385 = vmatprep.subr.bf16.mxu0 0
        %386 = vmatpush1.bf16.msra.mxu0 0
        %387 = vmatprep.subr.bf16.mxu0 0
        %388 = vmatpush1.bf16.msra.mxu0 0
        %389 = vmatprep.subr.bf16.mxu0 0
        %390 = vmatpush1.bf16.msra.mxu0 0
        %391 = vmatprep.subr.bf16.mxu0 0
        %392 = vmatpush1.bf16.msra.mxu0 0
        %393 = vmatprep.subr.bf16.mxu0 0
        %394 = vmatpush1.bf16.msra.mxu0 0
        %395 = vmatprep.subr.bf16.mxu0 0
        %396 = vmatpush1.bf16.msra.mxu0 0
        %397 = vmatprep.subr.bf16.mxu0 0
        %398 = vmatpush1.bf16.msra.mxu0 0
        %399 = vmatprep.subr.bf16.mxu0 0
        %400 = vmatpush1.bf16.msra.mxu0 0
        %401 = vmatprep.subr.bf16.mxu0 0
        %402 = vmatpush1.bf16.msra.mxu0 0
        %403 = vmatprep.subr.bf16.mxu0 0
        %404 = vmatpush1.bf16.msra.mxu0 0
        %405 = vmatprep.mubr.bf16.mxu0 0
        %406 = vmatmul.mubr.bf16.gmra.mrb[0].mxu0 %v368
        %v407 = vpop.f32.mrb[0].mxu0
        %v408 = vadd.f32 %v309, %v407
        %v409 = vpop.f32.mrb[0].mxu0
        %v410 = vpop.f32.mrb[0].mxu0
        %v411 = vpop.f32.mrb[0].mxu0
        %412 = vdwg.mxu0
        %v414 = vsel %vm270, %v252, 0
        %416 = vmatprep.subr.bf16.mxu0 0
        %417 = vmatpush1.bf16.msra.mxu0 %v414
        %418 = vmatprep.subr.bf16.mxu0 0
        %419 = vmatpush1.bf16.msra.mxu0 0
        %420 = vmatprep.subr.bf16.mxu0 0
        %421 = vmatpush1.bf16.msra.mxu0 0
        %422 = vmatprep.subr.bf16.mxu0 0
        %423 = vmatpush1.bf16.msra.mxu0 0
        %424 = vmatprep.subr.bf16.mxu0 0
        %425 = vmatpush1.bf16.msra.mxu0 0
        %426 = vmatprep.subr.bf16.mxu0 0
        %427 = vmatpush1.bf16.msra.mxu0 0
        %428 = vmatprep.subr.bf16.mxu0 0
        %429 = vmatpush1.bf16.msra.mxu0 0
        %430 = vmatprep.subr.bf16.mxu0 0
        %431 = vmatpush1.bf16.msra.mxu0 0
        %432 = vmatprep.subr.bf16.mxu0 0
        %433 = vmatpush1.bf16.msra.mxu0 0
        %434 = vmatprep.subr.bf16.mxu0 0
        %435 = vmatpush1.bf16.msra.mxu0 0
        %436 = vmatprep.subr.bf16.mxu0 0
        %437 = vmatpush1.bf16.msra.mxu0 0
        %438 = vmatprep.subr.bf16.mxu0 0
        %439 = vmatpush1.bf16.msra.mxu0 0
        %440 = vmatprep.subr.bf16.mxu0 0
        %441 = vmatpush1.bf16.msra.mxu0 0
        %442 = vmatprep.subr.bf16.mxu0 0
        %443 = vmatpush1.bf16.msra.mxu0 0
        %444 = vmatprep.subr.bf16.mxu0 0
        %445 = vmatpush1.bf16.msra.mxu0 0
        %446 = vmatprep.subr.bf16.mxu0 0
        %447 = vmatpush1.bf16.msra.mxu0 0
        %448 = vmatprep.mubr.bf16.mxu0 0
        %449 = vmatmul.mubr.bf16.gmra.mrb[0].mxu0 %v368
        %v450 = vpop.f32.mrb[0].mxu0
        %v451 = vadd.f32 %v362, %v450
        %v452 = vpop.f32.mrb[0].mxu0
        %v453 = vpop.f32.mrb[0].mxu0
        %v454 = vpop.f32.mrb[0].mxu0
        %455 = vdwg.mxu0
        %s456 = scalar_lea.vmem %s1, 2
        %v457 = vld [vmem:[%s456] sm:$0x1]
        %458 = vrot.lane.b32.xlu0 %v263, 126
        %v459 = vpop.permute.xlu0 %458
        %v461 = vsel %vm266, %v457, 0
        %v464 = vsel %vm270, %v459, 0
        %466 = vmatprep.subr.bf16.mxu0 0
        %467 = vmatpush1.bf16.msra.mxu0 %v464
        %468 = vmatprep.subr.bf16.mxu0 0
        %469 = vmatpush1.bf16.msra.mxu0 0
        %470 = vmatprep.subr.bf16.mxu0 0
        %471 = vmatpush1.bf16.msra.mxu0 0
        %472 = vmatprep.subr.bf16.mxu0 0
        %473 = vmatpush1.bf16.msra.mxu0 0
        %474 = vmatprep.subr.bf16.mxu0 0
        %475 = vmatpush1.bf16.msra.mxu0 0
        %476 = vmatprep.subr.bf16.mxu0 0
        %477 = vmatpush1.bf16.msra.mxu0 0
        %478 = vmatprep.subr.bf16.mxu0 0
        %479 = vmatpush1.bf16.msra.mxu0 0
        %480 = vmatprep.subr.bf16.mxu0 0
        %481 = vmatpush1.bf16.msra.mxu0 0
        %482 = vmatprep.subr.bf16.mxu0 0
        %483 = vmatpush1.bf16.msra.mxu0 0
        %484 = vmatprep.subr.bf16.mxu0 0
        %485 = vmatpush1.bf16.msra.mxu0 0
        %486 = vmatprep.subr.bf16.mxu0 0
        %487 = vmatpush1.bf16.msra.mxu0 0
        %488 = vmatprep.subr.bf16.mxu0 0
        %489 = vmatpush1.bf16.msra.mxu0 0
        %490 = vmatprep.subr.bf16.mxu0 0
        %491 = vmatpush1.bf16.msra.mxu0 0
        %492 = vmatprep.subr.bf16.mxu0 0
        %493 = vmatpush1.bf16.msra.mxu0 0
        %494 = vmatprep.subr.bf16.mxu0 0
        %495 = vmatpush1.bf16.msra.mxu0 0
        %496 = vmatprep.subr.bf16.mxu0 0
        %497 = vmatpush1.bf16.msra.mxu0 0
        %498 = vmatprep.mubr.bf16.mxu0 0
        %499 = vmatmul.mubr.bf16.gmra.mrb[0].mxu0 %v461
        %v500 = vpop.f32.mrb[0].mxu0
        %v501 = vadd.f32 0.0, %v500
        %v502 = vpop.f32.mrb[0].mxu0
        %v503 = vpop.f32.mrb[0].mxu0
        %v504 = vpop.f32.mrb[0].mxu0
        %505 = vdwg.mxu0
        %506 = vrot.lane.b32.xlu0 %v321, 126
        %v507 = vpop.permute.xlu0 %506
        %v509 = vsel %vm270, %v507, 0
        %511 = vmatprep.subr.bf16.mxu0 0
        %512 = vmatpush1.bf16.msra.mxu0 %v509
        %513 = vmatprep.subr.bf16.mxu0 0
        %514 = vmatpush1.bf16.msra.mxu0 0
        %515 = vmatprep.subr.bf16.mxu0 0
        %516 = vmatpush1.bf16.msra.mxu0 0
        %517 = vmatprep.subr.bf16.mxu0 0
        %518 = vmatpush1.bf16.msra.mxu0 0
        %519 = vmatprep.subr.bf16.mxu0 0
        %520 = vmatpush1.bf16.msra.mxu0 0
        %521 = vmatprep.subr.bf16.mxu0 0
        %522 = vmatpush1.bf16.msra.mxu0 0
        %523 = vmatprep.subr.bf16.mxu0 0
        %524 = vmatpush1.bf16.msra.mxu0 0
        %525 = vmatprep.subr.bf16.mxu0 0
        %526 = vmatpush1.bf16.msra.mxu0 0
        %527 = vmatprep.subr.bf16.mxu0 0
        %528 = vmatpush1.bf16.msra.mxu0 0
        %529 = vmatprep.subr.bf16.mxu0 0
        %530 = vmatpush1.bf16.msra.mxu0 0
        %531 = vmatprep.subr.bf16.mxu0 0
        %532 = vmatpush1.bf16.msra.mxu0 0
        %533 = vmatprep.subr.bf16.mxu0 0
        %534 = vmatpush1.bf16.msra.mxu0 0
        %535 = vmatprep.subr.bf16.mxu0 0
        %536 = vmatpush1.bf16.msra.mxu0 0
        %537 = vmatprep.subr.bf16.mxu0 0
        %538 = vmatpush1.bf16.msra.mxu0 0
        %539 = vmatprep.subr.bf16.mxu0 0
        %540 = vmatpush1.bf16.msra.mxu0 0
        %541 = vmatprep.subr.bf16.mxu0 0
        %542 = vmatpush1.bf16.msra.mxu0 0
        %543 = vmatprep.mubr.bf16.mxu0 0
        %544 = vmatmul.mubr.bf16.gmra.mrb[0].mxu0 %v461
        %v545 = vpop.f32.mrb[0].mxu0
        %v546 = vadd.f32 0.0, %v545
        %v547 = vpop.f32.mrb[0].mxu0
        %v548 = vpop.f32.mrb[0].mxu0
        %v549 = vpop.f32.mrb[0].mxu0
        %550 = vdwg.mxu0
        %v551 = vadd.f32 %v408, %v501
        %v552 = vadd.f32 %v451, %v546
        %s553 = scalar_lea.vmem %s1, 3
        %v554 = vld [vmem:[%s553] sm:$0x1]
        %555 = vrot.lane.b32.xlu0 %v263, 125
        %v556 = vpop.permute.xlu0 %555
        %v558 = vsel %vm266, %v554, 0
        %v561 = vsel %vm270, %v556, 0
        %563 = vmatprep.subr.bf16.mxu0 0
        %564 = vmatpush1.bf16.msra.mxu0 %v561
        %565 = vmatprep.subr.bf16.mxu0 0
        %566 = vmatpush1.bf16.msra.mxu0 0
        %567 = vmatprep.subr.bf16.mxu0 0
        %568 = vmatpush1.bf16.msra.mxu0 0
        %569 = vmatprep.subr.bf16.mxu0 0
        %570 = vmatpush1.bf16.msra.mxu0 0
        %571 = vmatprep.subr.bf16.mxu0 0
        %572 = vmatpush1.bf16.msra.mxu0 0
        %573 = vmatprep.subr.bf16.mxu0 0
        %574 = vmatpush1.bf16.msra.mxu0 0
        %575 = vmatprep.subr.bf16.mxu0 0
        %576 = vmatpush1.bf16.msra.mxu0 0
        %577 = vmatprep.subr.bf16.mxu0 0
        %578 = vmatpush1.bf16.msra.mxu0 0
        %579 = vmatprep.subr.bf16.mxu0 0
        %580 = vmatpush1.bf16.msra.mxu0 0
        %581 = vmatprep.subr.bf16.mxu0 0
        %582 = vmatpush1.bf16.msra.mxu0 0
        %583 = vmatprep.subr.bf16.mxu0 0
        %584 = vmatpush1.bf16.msra.mxu0 0
        %585 = vmatprep.subr.bf16.mxu0 0
        %586 = vmatpush1.bf16.msra.mxu0 0
        %587 = vmatprep.subr.bf16.mxu0 0
        %588 = vmatpush1.bf16.msra.mxu0 0
        %589 = vmatprep.subr.bf16.mxu0 0
        %590 = vmatpush1.bf16.msra.mxu0 0
        %591 = vmatprep.subr.bf16.mxu0 0
        %592 = vmatpush1.bf16.msra.mxu0 0
        %593 = vmatprep.subr.bf16.mxu0 0
        %594 = vmatpush1.bf16.msra.mxu0 0
        %595 = vmatprep.mubr.bf16.mxu0 0
        %596 = vmatmul.mubr.bf16.gmra.mrb[0].mxu0 %v558
        %v597 = vpop.f32.mrb[0].mxu0
        %v598 = vadd.f32 0.0, %v597
        %v599 = vpop.f32.mrb[0].mxu0
        %v600 = vpop.f32.mrb[0].mxu0
        %v601 = vpop.f32.mrb[0].mxu0
        %602 = vdwg.mxu0
        %603 = vrot.lane.b32.xlu0 %v321, 125
        %v604 = vpop.permute.xlu0 %603
        %v606 = vsel %vm270, %v604, 0
        %608 = vmatprep.subr.bf16.mxu0 0
        %609 = vmatpush1.bf16.msra.mxu0 %v606
        %610 = vmatprep.subr.bf16.mxu0 0
        %611 = vmatpush1.bf16.msra.mxu0 0
        %612 = vmatprep.subr.bf16.mxu0 0
        %613 = vmatpush1.bf16.msra.mxu0 0
        %614 = vmatprep.subr.bf16.mxu0 0
        %615 = vmatpush1.bf16.msra.mxu0 0
        %616 = vmatprep.subr.bf16.mxu0 0
        %617 = vmatpush1.bf16.msra.mxu0 0
        %618 = vmatprep.subr.bf16.mxu0 0
        %619 = vmatpush1.bf16.msra.mxu0 0
        %620 = vmatprep.subr.bf16.mxu0 0
        %621 = vmatpush1.bf16.msra.mxu0 0
        %622 = vmatprep.subr.bf16.mxu0 0
        %623 = vmatpush1.bf16.msra.mxu0 0
        %624 = vmatprep.subr.bf16.mxu0 0
        %625 = vmatpush1.bf16.msra.mxu0 0
        %626 = vmatprep.subr.bf16.mxu0 0
        %627 = vmatpush1.bf16.msra.mxu0 0
        %628 = vmatprep.subr.bf16.mxu0 0
        %629 = vmatpush1.bf16.msra.mxu0 0
        %630 = vmatprep.subr.bf16.mxu0 0
        %631 = vmatpush1.bf16.msra.mxu0 0
        %632 = vmatprep.subr.bf16.mxu0 0
        %633 = vmatpush1.bf16.msra.mxu0 0
        %634 = vmatprep.subr.bf16.mxu0 0
        %635 = vmatpush1.bf16.msra.mxu0 0
        %636 = vmatprep.subr.bf16.mxu0 0
        %637 = vmatpush1.bf16.msra.mxu0 0
        %638 = vmatprep.subr.bf16.mxu0 0
        %639 = vmatpush1.bf16.msra.mxu0 0
        %640 = vmatprep.mubr.bf16.mxu0 0
        %641 = vmatmul.mubr.bf16.gmra.mrb[0].mxu0 %v558
        %v642 = vpop.f32.mrb[0].mxu0
        %v643 = vadd.f32 0.0, %v642
        %v644 = vpop.f32.mrb[0].mxu0
        %v645 = vpop.f32.mrb[0].mxu0
        %v646 = vpop.f32.mrb[0].mxu0
        %647 = vdwg.mxu0
        %v648 = vadd.f32 %v551, %v598
        %v649 = vadd.f32 %v552, %v643
        %s650 = scalar_lea.vmem %s1, 4
        %v651 = vld [vmem:[%s650] sm:$0x1]
        %652 = vrot.lane.b32.xlu0 %v263, 124
        %v653 = vpop.permute.xlu0 %652
        %v655 = vsel %vm266, %v651, 0
        %v658 = vsel %vm270, %v653, 0
        %660 = vmatprep.subr.bf16.mxu0 0
        %661 = vmatpush1.bf16.msra.mxu0 %v658
        %662 = vmatprep.subr.bf16.mxu0 0
        %663 = vmatpush1.bf16.msra.mxu0 0
        %664 = vmatprep.subr.bf16.mxu0 0
        %665 = vmatpush1.bf16.msra.mxu0 0
        %666 = vmatprep.subr.bf16.mxu0 0
        %667 = vmatpush1.bf16.msra.mxu0 0
        %668 = vmatprep.subr.bf16.mxu0 0
        %669 = vmatpush1.bf16.msra.mxu0 0
        %670 = vmatprep.subr.bf16.mxu0 0
        %671 = vmatpush1.bf16.msra.mxu0 0
        %672 = vmatprep.subr.bf16.mxu0 0
        %673 = vmatpush1.bf16.msra.mxu0 0
        %674 = vmatprep.subr.bf16.mxu0 0
        %675 = vmatpush1.bf16.msra.mxu0 0
        %676 = vmatprep.subr.bf16.mxu0 0
        %677 = vmatpush1.bf16.msra.mxu0 0
        %678 = vmatprep.subr.bf16.mxu0 0
        %679 = vmatpush1.bf16.msra.mxu0 0
        %680 = vmatprep.subr.bf16.mxu0 0
        %681 = vmatpush1.bf16.msra.mxu0 0
        %682 = vmatprep.subr.bf16.mxu0 0
        %683 = vmatpush1.bf16.msra.mxu0 0
        %684 = vmatprep.subr.bf16.mxu0 0
        %685 = vmatpush1.bf16.msra.mxu0 0
        %686 = vmatprep.subr.bf16.mxu0 0
        %687 = vmatpush1.bf16.msra.mxu0 0
        %688 = vmatprep.subr.bf16.mxu0 0
        %689 = vmatpush1.bf16.msra.mxu0 0
        %690 = vmatprep.subr.bf16.mxu0 0
        %691 = vmatpush1.bf16.msra.mxu0 0
        %692 = vmatprep.mubr.bf16.mxu0 0
        %693 = vmatmul.mubr.bf16.gmra.mrb[0].mxu0 %v655
        %v694 = vpop.f32.mrb[0].mxu0
        %v695 = vadd.f32 0.0, %v694
        %v696 = vpop.f32.mrb[0].mxu0
        %v697 = vpop.f32.mrb[0].mxu0
        %v698 = vpop.f32.mrb[0].mxu0
        %699 = vdwg.mxu0
        %700 = vrot.lane.b32.xlu0 %v321, 124
        %v701 = vpop.permute.xlu0 %700
        %v703 = vsel %vm270, %v701, 0
        %705 = vmatprep.subr.bf16.mxu0 0
        %706 = vmatpush1.bf16.msra.mxu0 %v703
        %707 = vmatprep.subr.bf16.mxu0 0
        %708 = vmatpush1.bf16.msra.mxu0 0
        %709 = vmatprep.subr.bf16.mxu0 0
        %710 = vmatpush1.bf16.msra.mxu0 0
        %711 = vmatprep.subr.bf16.mxu0 0
        %712 = vmatpush1.bf16.msra.mxu0 0
        %713 = vmatprep.subr.bf16.mxu0 0
        %714 = vmatpush1.bf16.msra.mxu0 0
        %715 = vmatprep.subr.bf16.mxu0 0
        %716 = vmatpush1.bf16.msra.mxu0 0
        %717 = vmatprep.subr.bf16.mxu0 0
        %718 = vmatpush1.bf16.msra.mxu0 0
        %719 = vmatprep.subr.bf16.mxu0 0
        %720 = vmatpush1.bf16.msra.mxu0 0
        %721 = vmatprep.subr.bf16.mxu0 0
        %722 = vmatpush1.bf16.msra.mxu0 0
        %723 = vmatprep.subr.bf16.mxu0 0
        %724 = vmatpush1.bf16.msra.mxu0 0
        %725 = vmatprep.subr.bf16.mxu0 0
        %726 = vmatpush1.bf16.msra.mxu0 0
        %727 = vmatprep.subr.bf16.mxu0 0
        %728 = vmatpush1.bf16.msra.mxu0 0
        %729 = vmatprep.subr.bf16.mxu0 0
        %730 = vmatpush1.bf16.msra.mxu0 0
        %731 = vmatprep.subr.bf16.mxu0 0
        %732 = vmatpush1.bf16.msra.mxu0 0
        %733 = vmatprep.subr.bf16.mxu0 0
        %734 = vmatpush1.bf16.msra.mxu0 0
        %735 = vmatprep.subr.bf16.mxu0 0
        %736 = vmatpush1.bf16.msra.mxu0 0
        %737 = vmatprep.mubr.bf16.mxu0 0
        %738 = vmatmul.mubr.bf16.gmra.mrb[0].mxu0 %v655
        %v739 = vpop.f32.mrb[0].mxu0
        %v740 = vadd.f32 0.0, %v739
        %v741 = vpop.f32.mrb[0].mxu0
        %v742 = vpop.f32.mrb[0].mxu0
        %v743 = vpop.f32.mrb[0].mxu0
        %744 = vdwg.mxu0
        %v745 = vadd.f32 %v648, %v695
        %v746 = vadd.f32 %v649, %v740
        %s747 = scalar_lea.vmem %s1, 5
        %v748 = vld [vmem:[%s747] sm:$0x1]
        %749 = vrot.lane.b32.xlu0 %v263, 123
        %v750 = vpop.permute.xlu0 %749
        %v752 = vsel %vm266, %v748, 0
        %v755 = vsel %vm270, %v750, 0
        %757 = vmatprep.subr.bf16.mxu0 0
        %758 = vmatpush1.bf16.msra.mxu0 %v755
        %759 = vmatprep.subr.bf16.mxu0 0
        %760 = vmatpush1.bf16.msra.mxu0 0
        %761 = vmatprep.subr.bf16.mxu0 0
        %762 = vmatpush1.bf16.msra.mxu0 0
        %763 = vmatprep.subr.bf16.mxu0 0
        %764 = vmatpush1.bf16.msra.mxu0 0
        %765 = vmatprep.subr.bf16.mxu0 0
        %766 = vmatpush1.bf16.msra.mxu0 0
        %767 = vmatprep.subr.bf16.mxu0 0
        %768 = vmatpush1.bf16.msra.mxu0 0
        %769 = vmatprep.subr.bf16.mxu0 0
        %770 = vmatpush1.bf16.msra.mxu0 0
        %771 = vmatprep.subr.bf16.mxu0 0
        %772 = vmatpush1.bf16.msra.mxu0 0
        %773 = vmatprep.subr.bf16.mxu0 0
        %774 = vmatpush1.bf16.msra.mxu0 0
        %775 = vmatprep.subr.bf16.mxu0 0
        %776 = vmatpush1.bf16.msra.mxu0 0
        %777 = vmatprep.subr.bf16.mxu0 0
        %778 = vmatpush1.bf16.msra.mxu0 0
        %779 = vmatprep.subr.bf16.mxu0 0
        %780 = vmatpush1.bf16.msra.mxu0 0
        %781 = vmatprep.subr.bf16.mxu0 0
        %782 = vmatpush1.bf16.msra.mxu0 0
        %783 = vmatprep.subr.bf16.mxu0 0
        %784 = vmatpush1.bf16.msra.mxu0 0
        %785 = vmatprep.subr.bf16.mxu0 0
        %786 = vmatpush1.bf16.msra.mxu0 0
        %787 = vmatprep.subr.bf16.mxu0 0
        %788 = vmatpush1.bf16.msra.mxu0 0
        %789 = vmatprep.mubr.bf16.mxu0 0
        %790 = vmatmul.mubr.bf16.gmra.mrb[0].mxu0 %v752
        %v791 = vpop.f32.mrb[0].mxu0
        %v792 = vadd.f32 0.0, %v791
        %v793 = vpop.f32.mrb[0].mxu0
        %v794 = vpop.f32.mrb[0].mxu0
        %v795 = vpop.f32.mrb[0].mxu0
        %796 = vdwg.mxu0
        %797 = vrot.lane.b32.xlu0 %v321, 123
        %v798 = vpop.permute.xlu0 %797
        %v800 = vsel %vm270, %v798, 0
        %802 = vmatprep.subr.bf16.mxu0 0
        %803 = vmatpush1.bf16.msra.mxu0 %v800
        %804 = vmatprep.subr.bf16.mxu0 0
        %805 = vmatpush1.bf16.msra.mxu0 0
        %806 = vmatprep.subr.bf16.mxu0 0
        %807 = vmatpush1.bf16.msra.mxu0 0
        %808 = vmatprep.subr.bf16.mxu0 0
        %809 = vmatpush1.bf16.msra.mxu0 0
        %810 = vmatprep.subr.bf16.mxu0 0
        %811 = vmatpush1.bf16.msra.mxu0 0
        %812 = vmatprep.subr.bf16.mxu0 0
        %813 = vmatpush1.bf16.msra.mxu0 0
        %814 = vmatprep.subr.bf16.mxu0 0
        %815 = vmatpush1.bf16.msra.mxu0 0
        %816 = vmatprep.subr.bf16.mxu0 0
        %817 = vmatpush1.bf16.msra.mxu0 0
        %818 = vmatprep.subr.bf16.mxu0 0
        %819 = vmatpush1.bf16.msra.mxu0 0
        %820 = vmatprep.subr.bf16.mxu0 0
        %821 = vmatpush1.bf16.msra.mxu0 0
        %822 = vmatprep.subr.bf16.mxu0 0
        %823 = vmatpush1.bf16.msra.mxu0 0
        %824 = vmatprep.subr.bf16.mxu0 0
        %825 = vmatpush1.bf16.msra.mxu0 0
        %826 = vmatprep.subr.bf16.mxu0 0
        %827 = vmatpush1.bf16.msra.mxu0 0
        %828 = vmatprep.subr.bf16.mxu0 0
        %829 = vmatpush1.bf16.msra.mxu0 0
        %830 = vmatprep.subr.bf16.mxu0 0
        %831 = vmatpush1.bf16.msra.mxu0 0
        %832 = vmatprep.subr.bf16.mxu0 0
        %833 = vmatpush1.bf16.msra.mxu0 0
        %834 = vmatprep.mubr.bf16.mxu0 0
        %835 = vmatmul.mubr.bf16.gmra.mrb[0].mxu0 %v752
        %v836 = vpop.f32.mrb[0].mxu0
        %v837 = vadd.f32 0.0, %v836
        %v838 = vpop.f32.mrb[0].mxu0
        %v839 = vpop.f32.mrb[0].mxu0
        %v840 = vpop.f32.mrb[0].mxu0
        %841 = vdwg.mxu0
        %v842 = vadd.f32 %v745, %v792
        %v843 = vadd.f32 %v746, %v837
        %s844 = scalar_lea.vmem %s1, 6
        %v845 = vld [vmem:[%s844] sm:$0x1]
        %846 = vrot.lane.b32.xlu0 %v263, 122
        %v847 = vpop.permute.xlu0 %846
        %v849 = vsel %vm266, %v845, 0
        %v852 = vsel %vm270, %v847, 0
        %854 = vmatprep.subr.bf16.mxu0 0
        %855 = vmatpush1.bf16.msra.mxu0 %v852
        %856 = vmatprep.subr.bf16.mxu0 0
        %857 = vmatpush1.bf16.msra.mxu0 0
        %858 = vmatprep.subr.bf16.mxu0 0
        %859 = vmatpush1.bf16.msra.mxu0 0
        %860 = vmatprep.subr.bf16.mxu0 0
        %861 = vmatpush1.bf16.msra.mxu0 0
        %862 = vmatprep.subr.bf16.mxu0 0
        %863 = vmatpush1.bf16.msra.mxu0 0
        %864 = vmatprep.subr.bf16.mxu0 0
        %865 = vmatpush1.bf16.msra.mxu0 0
        %866 = vmatprep.subr.bf16.mxu0 0
        %867 = vmatpush1.bf16.msra.mxu0 0
        %868 = vmatprep.subr.bf16.mxu0 0
        %869 = vmatpush1.bf16.msra.mxu0 0
        %870 = vmatprep.subr.bf16.mxu0 0
        %871 = vmatpush1.bf16.msra.mxu0 0
        %872 = vmatprep.subr.bf16.mxu0 0
        %873 = vmatpush1.bf16.msra.mxu0 0
        %874 = vmatprep.subr.bf16.mxu0 0
        %875 = vmatpush1.bf16.msra.mxu0 0
        %876 = vmatprep.subr.bf16.mxu0 0
        %877 = vmatpush1.bf16.msra.mxu0 0
        %878 = vmatprep.subr.bf16.mxu0 0
        %879 = vmatpush1.bf16.msra.mxu0 0
        %880 = vmatprep.subr.bf16.mxu0 0
        %881 = vmatpush1.bf16.msra.mxu0 0
        %882 = vmatprep.subr.bf16.mxu0 0
        %883 = vmatpush1.bf16.msra.mxu0 0
        %884 = vmatprep.subr.bf16.mxu0 0
        %885 = vmatpush1.bf16.msra.mxu0 0
        %886 = vmatprep.mubr.bf16.mxu0 0
        %887 = vmatmul.mubr.bf16.gmra.mrb[0].mxu0 %v849
        %v888 = vpop.f32.mrb[0].mxu0
        %v889 = vadd.f32 0.0, %v888
        %v890 = vpop.f32.mrb[0].mxu0
        %v891 = vpop.f32.mrb[0].mxu0
        %v892 = vpop.f32.mrb[0].mxu0
        %893 = vdwg.mxu0
        %894 = vrot.lane.b32.xlu0 %v321, 122
        %v895 = vpop.permute.xlu0 %894
        %v897 = vsel %vm270, %v895, 0
        %899 = vmatprep.subr.bf16.mxu0 0
        %900 = vmatpush1.bf16.msra.mxu0 %v897
        %901 = vmatprep.subr.bf16.mxu0 0
        %902 = vmatpush1.bf16.msra.mxu0 0
        %903 = vmatprep.subr.bf16.mxu0 0
        %904 = vmatpush1.bf16.msra.mxu0 0
        %905 = vmatprep.subr.bf16.mxu0 0
        %906 = vmatpush1.bf16.msra.mxu0 0
        %907 = vmatprep.subr.bf16.mxu0 0
        %908 = vmatpush1.bf16.msra.mxu0 0
        %909 = vmatprep.subr.bf16.mxu0 0
        %910 = vmatpush1.bf16.msra.mxu0 0
        %911 = vmatprep.subr.bf16.mxu0 0
        %912 = vmatpush1.bf16.msra.mxu0 0
        %913 = vmatprep.subr.bf16.mxu0 0
        %914 = vmatpush1.bf16.msra.mxu0 0
        %915 = vmatprep.subr.bf16.mxu0 0
        %916 = vmatpush1.bf16.msra.mxu0 0
        %917 = vmatprep.subr.bf16.mxu0 0
        %918 = vmatpush1.bf16.msra.mxu0 0
        %919 = vmatprep.subr.bf16.mxu0 0
        %920 = vmatpush1.bf16.msra.mxu0 0
        %921 = vmatprep.subr.bf16.mxu0 0
        %922 = vmatpush1.bf16.msra.mxu0 0
        %923 = vmatprep.subr.bf16.mxu0 0
        %924 = vmatpush1.bf16.msra.mxu0 0
        %925 = vmatprep.subr.bf16.mxu0 0
        %926 = vmatpush1.bf16.msra.mxu0 0
        %927 = vmatprep.subr.bf16.mxu0 0
        %928 = vmatpush1.bf16.msra.mxu0 0
        %929 = vmatprep.subr.bf16.mxu0 0
        %930 = vmatpush1.bf16.msra.mxu0 0
        %931 = vmatprep.mubr.bf16.mxu0 0
        %932 = vmatmul.mubr.bf16.gmra.mrb[0].mxu0 %v849
        %v933 = vpop.f32.mrb[0].mxu0
        %v934 = vadd.f32 0.0, %v933
        %v935 = vpop.f32.mrb[0].mxu0
        %v936 = vpop.f32.mrb[0].mxu0
        %v937 = vpop.f32.mrb[0].mxu0
        %938 = vdwg.mxu0
        %v939 = vadd.f32 %v842, %v889
        %v940 = vadd.f32 %v843, %v934
        %s941 = scalar_lea.vmem %s1, 7
        %v942 = vld [vmem:[%s941] sm:$0x1]
        %943 = vrot.lane.b32.xlu0 %v263, 121
        %v944 = vpop.permute.xlu0 %943
        %v946 = vsel %vm266, %v942, 0
        %v949 = vsel %vm270, %v944, 0
        %951 = vmatprep.subr.bf16.mxu0 0
        %952 = vmatpush1.bf16.msra.mxu0 %v949
        %953 = vmatprep.subr.bf16.mxu0 0
        %954 = vmatpush1.bf16.msra.mxu0 0
        %955 = vmatprep.subr.bf16.mxu0 0
        %956 = vmatpush1.bf16.msra.mxu0 0
        %957 = vmatprep.subr.bf16.mxu0 0
        %958 = vmatpush1.bf16.msra.mxu0 0
        %959 = vmatprep.subr.bf16.mxu0 0
        %960 = vmatpush1.bf16.msra.mxu0 0
        %961 = vmatprep.subr.bf16.mxu0 0
        %962 = vmatpush1.bf16.msra.mxu0 0
        %963 = vmatprep.subr.bf16.mxu0 0
        %964 = vmatpush1.bf16.msra.mxu0 0
        %965 = vmatprep.subr.bf16.mxu0 0
        %966 = vmatpush1.bf16.msra.mxu0 0
        %967 = vmatprep.subr.bf16.mxu0 0
        %968 = vmatpush1.bf16.msra.mxu0 0
        %969 = vmatprep.subr.bf16.mxu0 0
        %970 = vmatpush1.bf16.msra.mxu0 0
        %971 = vmatprep.subr.bf16.mxu0 0
        %972 = vmatpush1.bf16.msra.mxu0 0
        %973 = vmatprep.subr.bf16.mxu0 0
        %974 = vmatpush1.bf16.msra.mxu0 0
        %975 = vmatprep.subr.bf16.mxu0 0
        %976 = vmatpush1.bf16.msra.mxu0 0
        %977 = vmatprep.subr.bf16.mxu0 0
        %978 = vmatpush1.bf16.msra.mxu0 0
        %979 = vmatprep.subr.bf16.mxu0 0
        %980 = vmatpush1.bf16.msra.mxu0 0
        %981 = vmatprep.subr.bf16.mxu0 0
        %982 = vmatpush1.bf16.msra.mxu0 0
        %983 = vmatprep.mubr.bf16.mxu0 0
        %984 = vmatmul.mubr.bf16.gmra.mrb[0].mxu0 %v946
        %v985 = vpop.f32.mrb[0].mxu0
        %v986 = vadd.f32 0.0, %v985
        %v987 = vpop.f32.mrb[0].mxu0
        %v988 = vpop.f32.mrb[0].mxu0
        %v989 = vpop.f32.mrb[0].mxu0
        %990 = vdwg.mxu0
        %991 = vrot.lane.b32.xlu0 %v321, 121
        %v992 = vpop.permute.xlu0 %991
        %v994 = vsel %vm270, %v992, 0
        %996 = vmatprep.subr.bf16.mxu0 0
        %997 = vmatpush1.bf16.msra.mxu0 %v994
        %998 = vmatprep.subr.bf16.mxu0 0
        %999 = vmatpush1.bf16.msra.mxu0 0
        %1000 = vmatprep.subr.bf16.mxu0 0
        %1001 = vmatpush1.bf16.msra.mxu0 0
        %1002 = vmatprep.subr.bf16.mxu0 0
        %1003 = vmatpush1.bf16.msra.mxu0 0
        %1004 = vmatprep.subr.bf16.mxu0 0
        %1005 = vmatpush1.bf16.msra.mxu0 0
        %1006 = vmatprep.subr.bf16.mxu0 0
        %1007 = vmatpush1.bf16.msra.mxu0 0
        %1008 = vmatprep.subr.bf16.mxu0 0
        %1009 = vmatpush1.bf16.msra.mxu0 0
        %1010 = vmatprep.subr.bf16.mxu0 0
        %1011 = vmatpush1.bf16.msra.mxu0 0
        %1012 = vmatprep.subr.bf16.mxu0 0
        %1013 = vmatpush1.bf16.msra.mxu0 0
        %1014 = vmatprep.subr.bf16.mxu0 0
        %1015 = vmatpush1.bf16.msra.mxu0 0
        %1016 = vmatprep.subr.bf16.mxu0 0
        %1017 = vmatpush1.bf16.msra.mxu0 0
        %1018 = vmatprep.subr.bf16.mxu0 0
        %1019 = vmatpush1.bf16.msra.mxu0 0
        %1020 = vmatprep.subr.bf16.mxu0 0
        %1021 = vmatpush1.bf16.msra.mxu0 0
        %1022 = vmatprep.subr.bf16.mxu0 0
        %1023 = vmatpush1.bf16.msra.mxu0 0
        %1024 = vmatprep.subr.bf16.mxu0 0
        %1025 = vmatpush1.bf16.msra.mxu0 0
        %1026 = vmatprep.subr.bf16.mxu0 0
        %1027 = vmatpush1.bf16.msra.mxu0 0
        %1028 = vmatprep.mubr.bf16.mxu0 0
        %1029 = vmatmul.mubr.bf16.gmra.mrb[0].mxu0 %v946
        %v1030 = vpop.f32.mrb[0].mxu0
        %v1031 = vadd.f32 0.0, %v1030
        %v1032 = vpop.f32.mrb[0].mxu0
        %v1033 = vpop.f32.mrb[0].mxu0
        %v1034 = vpop.f32.mrb[0].mxu0
        %1035 = vdwg.mxu0
        %v1036 = vadd.f32 %v939, %v986
        %v1037 = vadd.f32 %v940, %v1031
        %s1038 = scalar_lea.vmem %s1, 8
        %v1039 = vld [vmem:[%s1038] sm:$0x1]
        %1040 = vrot.lane.b32.xlu0 %v263, 120
        %v1041 = vpop.permute.xlu0 %1040
        %v1043 = vsel %vm266, %v1039, 0
        %v1046 = vsel %vm270, %v1041, 0
        %1048 = vmatprep.subr.bf16.mxu0 0
        %1049 = vmatpush1.bf16.msra.mxu0 %v1046
        %1050 = vmatprep.subr.bf16.mxu0 0
        %1051 = vmatpush1.bf16.msra.mxu0 0
        %1052 = vmatprep.subr.bf16.mxu0 0
        %1053 = vmatpush1.bf16.msra.mxu0 0
        %1054 = vmatprep.subr.bf16.mxu0 0
        %1055 = vmatpush1.bf16.msra.mxu0 0
        %1056 = vmatprep.subr.bf16.mxu0 0
        %1057 = vmatpush1.bf16.msra.mxu0 0
        %1058 = vmatprep.subr.bf16.mxu0 0
        %1059 = vmatpush1.bf16.msra.mxu0 0
        %1060 = vmatprep.subr.bf16.mxu0 0
        %1061 = vmatpush1.bf16.msra.mxu0 0
        %1062 = vmatprep.subr.bf16.mxu0 0
        %1063 = vmatpush1.bf16.msra.mxu0 0
        %1064 = vmatprep.subr.bf16.mxu0 0
        %1065 = vmatpush1.bf16.msra.mxu0 0
        %1066 = vmatprep.subr.bf16.mxu0 0
        %1067 = vmatpush1.bf16.msra.mxu0 0
        %1068 = vmatprep.subr.bf16.mxu0 0
        %1069 = vmatpush1.bf16.msra.mxu0 0
        %1070 = vmatprep.subr.bf16.mxu0 0
        %1071 = vmatpush1.bf16.msra.mxu0 0
        %1072 = vmatprep.subr.bf16.mxu0 0
        %1073 = vmatpush1.bf16.msra.mxu0 0
        %1074 = vmatprep.subr.bf16.mxu0 0
        %1075 = vmatpush1.bf16.msra.mxu0 0
        %1076 = vmatprep.subr.bf16.mxu0 0
        %1077 = vmatpush1.bf16.msra.mxu0 0
        %1078 = vmatprep.subr.bf16.mxu0 0
        %1079 = vmatpush1.bf16.msra.mxu0 0
        %1080 = vmatprep.mubr.bf16.mxu0 0
        %1081 = vmatmul.mubr.bf16.gmra.mrb[0].mxu0 %v1043
        %v1082 = vpop.f32.mrb[0].mxu0
        %v1083 = vadd.f32 0.0, %v1082
        %v1084 = vpop.f32.mrb[0].mxu0
        %v1085 = vpop.f32.mrb[0].mxu0
        %v1086 = vpop.f32.mrb[0].mxu0
        %1087 = vdwg.mxu0
        %1088 = vrot.lane.b32.xlu0 %v321, 120
        %v1089 = vpop.permute.xlu0 %1088
        %v1091 = vsel %vm270, %v1089, 0
        %1093 = vmatprep.subr.bf16.mxu0 0
        %1094 = vmatpush1.bf16.msra.mxu0 %v1091
        %1095 = vmatprep.subr.bf16.mxu0 0
        %1096 = vmatpush1.bf16.msra.mxu0 0
        %1097 = vmatprep.subr.bf16.mxu0 0
        %1098 = vmatpush1.bf16.msra.mxu0 0
        %1099 = vmatprep.subr.bf16.mxu0 0
        %1100 = vmatpush1.bf16.msra.mxu0 0
        %1101 = vmatprep.subr.bf16.mxu0 0
        %1102 = vmatpush1.bf16.msra.mxu0 0
        %1103 = vmatprep.subr.bf16.mxu0 0
        %1104 = vmatpush1.bf16.msra.mxu0 0
        %1105 = vmatprep.subr.bf16.mxu0 0
        %1106 = vmatpush1.bf16.msra.mxu0 0
        %1107 = vmatprep.subr.bf16.mxu0 0
        %1108 = vmatpush1.bf16.msra.mxu0 0
        %1109 = vmatprep.subr.bf16.mxu0 0
        %1110 = vmatpush1.bf16.msra.mxu0 0
        %1111 = vmatprep.subr.bf16.mxu0 0
        %1112 = vmatpush1.bf16.msra.mxu0 0
        %1113 = vmatprep.subr.bf16.mxu0 0
        %1114 = vmatpush1.bf16.msra.mxu0 0
        %1115 = vmatprep.subr.bf16.mxu0 0
        %1116 = vmatpush1.bf16.msra.mxu0 0
        %1117 = vmatprep.subr.bf16.mxu0 0
        %1118 = vmatpush1.bf16.msra.mxu0 0
        %1119 = vmatprep.subr.bf16.mxu0 0
        %1120 = vmatpush1.bf16.msra.mxu0 0
        %1121 = vmatprep.subr.bf16.mxu0 0
        %1122 = vmatpush1.bf16.msra.mxu0 0
        %1123 = vmatprep.subr.bf16.mxu0 0
        %1124 = vmatpush1.bf16.msra.mxu0 0
        %1125 = vmatprep.mubr.bf16.mxu0 0
        %1126 = vmatmul.mubr.bf16.gmra.mrb[0].mxu0 %v1043
        %v1127 = vpop.f32.mrb[0].mxu0
        %v1128 = vadd.f32 0.0, %v1127
        %v1129 = vpop.f32.mrb[0].mxu0
        %v1130 = vpop.f32.mrb[0].mxu0
        %v1131 = vpop.f32.mrb[0].mxu0
        %1132 = vdwg.mxu0
        %v1133 = vadd.f32 %v1036, %v1083
        %v1134 = vadd.f32 %v1037, %v1128
        %s1135 = scalar_lea.vmem %s1, 9
        %v1136 = vld [vmem:[%s1135] sm:$0x1]
        %1137 = vrot.lane.b32.xlu0 %v263, 119
        %v1138 = vpop.permute.xlu0 %1137
        %v1140 = vsel %vm266, %v1136, 0
        %v1143 = vsel %vm270, %v1138, 0
        %1145 = vmatprep.subr.bf16.mxu0 0
        %1146 = vmatpush1.bf16.msra.mxu0 %v1143
        %1147 = vmatprep.subr.bf16.mxu0 0
        %1148 = vmatpush1.bf16.msra.mxu0 0
        %1149 = vmatprep.subr.bf16.mxu0 0
        %1150 = vmatpush1.bf16.msra.mxu0 0
        %1151 = vmatprep.subr.bf16.mxu0 0
        %1152 = vmatpush1.bf16.msra.mxu0 0
        %1153 = vmatprep.subr.bf16.mxu0 0
        %1154 = vmatpush1.bf16.msra.mxu0 0
        %1155 = vmatprep.subr.bf16.mxu0 0
        %1156 = vmatpush1.bf16.msra.mxu0 0
        %1157 = vmatprep.subr.bf16.mxu0 0
        %1158 = vmatpush1.bf16.msra.mxu0 0
        %1159 = vmatprep.subr.bf16.mxu0 0
        %1160 = vmatpush1.bf16.msra.mxu0 0
        %1161 = vmatprep.subr.bf16.mxu0 0
        %1162 = vmatpush1.bf16.msra.mxu0 0
        %1163 = vmatprep.subr.bf16.mxu0 0
        %1164 = vmatpush1.bf16.msra.mxu0 0
        %1165 = vmatprep.subr.bf16.mxu0 0
        %1166 = vmatpush1.bf16.msra.mxu0 0
        %1167 = vmatprep.subr.bf16.mxu0 0
        %1168 = vmatpush1.bf16.msra.mxu0 0
        %1169 = vmatprep.subr.bf16.mxu0 0
        %1170 = vmatpush1.bf16.msra.mxu0 0
        %1171 = vmatprep.subr.bf16.mxu0 0
        %1172 = vmatpush1.bf16.msra.mxu0 0
        %1173 = vmatprep.subr.bf16.mxu0 0
        %1174 = vmatpush1.bf16.msra.mxu0 0
        %1175 = vmatprep.subr.bf16.mxu0 0
        %1176 = vmatpush1.bf16.msra.mxu0 0
        %1177 = vmatprep.mubr.bf16.mxu0 0
        %1178 = vmatmul.mubr.bf16.gmra.mrb[0].mxu0 %v1140
        %v1179 = vpop.f32.mrb[0].mxu0
        %v1180 = vadd.f32 0.0, %v1179
        %v1181 = vpop.f32.mrb[0].mxu0
        %v1182 = vpop.f32.mrb[0].mxu0
        %v1183 = vpop.f32.mrb[0].mxu0
        %1184 = vdwg.mxu0
        %1185 = vrot.lane.b32.xlu0 %v321, 119
        %v1186 = vpop.permute.xlu0 %1185
        %v1188 = vsel %vm270, %v1186, 0
        %1190 = vmatprep.subr.bf16.mxu0 0
        %1191 = vmatpush1.bf16.msra.mxu0 %v1188
        %1192 = vmatprep.subr.bf16.mxu0 0
        %1193 = vmatpush1.bf16.msra.mxu0 0
        %1194 = vmatprep.subr.bf16.mxu0 0
        %1195 = vmatpush1.bf16.msra.mxu0 0
        %1196 = vmatprep.subr.bf16.mxu0 0
        %1197 = vmatpush1.bf16.msra.mxu0 0
        %1198 = vmatprep.subr.bf16.mxu0 0
        %1199 = vmatpush1.bf16.msra.mxu0 0
        %1200 = vmatprep.subr.bf16.mxu0 0
        %1201 = vmatpush1.bf16.msra.mxu0 0
        %1202 = vmatprep.subr.bf16.mxu0 0
        %1203 = vmatpush1.bf16.msra.mxu0 0
        %1204 = vmatprep.subr.bf16.mxu0 0
        %1205 = vmatpush1.bf16.msra.mxu0 0
        %1206 = vmatprep.subr.bf16.mxu0 0
        %1207 = vmatpush1.bf16.msra.mxu0 0
        %1208 = vmatprep.subr.bf16.mxu0 0
        %1209 = vmatpush1.bf16.msra.mxu0 0
        %1210 = vmatprep.subr.bf16.mxu0 0
        %1211 = vmatpush1.bf16.msra.mxu0 0
        %1212 = vmatprep.subr.bf16.mxu0 0
        %1213 = vmatpush1.bf16.msra.mxu0 0
        %1214 = vmatprep.subr.bf16.mxu0 0
        %1215 = vmatpush1.bf16.msra.mxu0 0
        %1216 = vmatprep.subr.bf16.mxu0 0
        %1217 = vmatpush1.bf16.msra.mxu0 0
        %1218 = vmatprep.subr.bf16.mxu0 0
        %1219 = vmatpush1.bf16.msra.mxu0 0
        %1220 = vmatprep.subr.bf16.mxu0 0
        %1221 = vmatpush1.bf16.msra.mxu0 0
        %1222 = vmatprep.mubr.bf16.mxu0 0
        %1223 = vmatmul.mubr.bf16.gmra.mrb[0].mxu0 %v1140
        %v1224 = vpop.f32.mrb[0].mxu0
        %v1225 = vadd.f32 0.0, %v1224
        %v1226 = vpop.f32.mrb[0].mxu0
        %v1227 = vpop.f32.mrb[0].mxu0
        %v1228 = vpop.f32.mrb[0].mxu0
        %1229 = vdwg.mxu0
        %v1230 = vadd.f32 %v1133, %v1180
        %v1231 = vadd.f32 %v1134, %v1225
        %s1232 = scalar_lea.vmem %s1, 10
        %v1233 = vld [vmem:[%s1232] sm:$0x1]
        %1234 = vrot.lane.b32.xlu0 %v263, 118
        %v1235 = vpop.permute.xlu0 %1234
        %v1237 = vsel %vm266, %v1233, 0
        %v1240 = vsel %vm270, %v1235, 0
        %1242 = vmatprep.subr.bf16.mxu0 0
        %1243 = vmatpush1.bf16.msra.mxu0 %v1240
        %1244 = vmatprep.subr.bf16.mxu0 0
        %1245 = vmatpush1.bf16.msra.mxu0 0
        %1246 = vmatprep.subr.bf16.mxu0 0
        %1247 = vmatpush1.bf16.msra.mxu0 0
        %1248 = vmatprep.subr.bf16.mxu0 0
        %1249 = vmatpush1.bf16.msra.mxu0 0
        %1250 = vmatprep.subr.bf16.mxu0 0
        %1251 = vmatpush1.bf16.msra.mxu0 0
        %1252 = vmatprep.subr.bf16.mxu0 0
        %1253 = vmatpush1.bf16.msra.mxu0 0
        %1254 = vmatprep.subr.bf16.mxu0 0
        %1255 = vmatpush1.bf16.msra.mxu0 0
        %1256 = vmatprep.subr.bf16.mxu0 0
        %1257 = vmatpush1.bf16.msra.mxu0 0
        %1258 = vmatprep.subr.bf16.mxu0 0
        %1259 = vmatpush1.bf16.msra.mxu0 0
        %1260 = vmatprep.subr.bf16.mxu0 0
        %1261 = vmatpush1.bf16.msra.mxu0 0
        %1262 = vmatprep.subr.bf16.mxu0 0
        %1263 = vmatpush1.bf16.msra.mxu0 0
        %1264 = vmatprep.subr.bf16.mxu0 0
        %1265 = vmatpush1.bf16.msra.mxu0 0
        %1266 = vmatprep.subr.bf16.mxu0 0
        %1267 = vmatpush1.bf16.msra.mxu0 0
        %1268 = vmatprep.subr.bf16.mxu0 0
        %1269 = vmatpush1.bf16.msra.mxu0 0
        %1270 = vmatprep.subr.bf16.mxu0 0
        %1271 = vmatpush1.bf16.msra.mxu0 0
        %1272 = vmatprep.subr.bf16.mxu0 0
        %1273 = vmatpush1.bf16.msra.mxu0 0
        %1274 = vmatprep.mubr.bf16.mxu0 0
        %1275 = vmatmul.mubr.bf16.gmra.mrb[0].mxu0 %v1237
        %v1276 = vpop.f32.mrb[0].mxu0
        %v1277 = vadd.f32 0.0, %v1276
        %v1278 = vpop.f32.mrb[0].mxu0
        %v1279 = vpop.f32.mrb[0].mxu0
        %v1280 = vpop.f32.mrb[0].mxu0
        %1281 = vdwg.mxu0
        %1282 = vrot.lane.b32.xlu0 %v321, 118
        %v1283 = vpop.permute.xlu0 %1282
        %v1285 = vsel %vm270, %v1283, 0
        %1287 = vmatprep.subr.bf16.mxu0 0
        %1288 = vmatpush1.bf16.msra.mxu0 %v1285
        %1289 = vmatprep.subr.bf16.mxu0 0
        %1290 = vmatpush1.bf16.msra.mxu0 0
        %1291 = vmatprep.subr.bf16.mxu0 0
        %1292 = vmatpush1.bf16.msra.mxu0 0
        %1293 = vmatprep.subr.bf16.mxu0 0
        %1294 = vmatpush1.bf16.msra.mxu0 0
        %1295 = vmatprep.subr.bf16.mxu0 0
        %1296 = vmatpush1.bf16.msra.mxu0 0
        %1297 = vmatprep.subr.bf16.mxu0 0
        %1298 = vmatpush1.bf16.msra.mxu0 0
        %1299 = vmatprep.subr.bf16.mxu0 0
        %1300 = vmatpush1.bf16.msra.mxu0 0
        %1301 = vmatprep.subr.bf16.mxu0 0
        %1302 = vmatpush1.bf16.msra.mxu0 0
        %1303 = vmatprep.subr.bf16.mxu0 0
        %1304 = vmatpush1.bf16.msra.mxu0 0
        %1305 = vmatprep.subr.bf16.mxu0 0
        %1306 = vmatpush1.bf16.msra.mxu0 0
        %1307 = vmatprep.subr.bf16.mxu0 0
        %1308 = vmatpush1.bf16.msra.mxu0 0
        %1309 = vmatprep.subr.bf16.mxu0 0
        %1310 = vmatpush1.bf16.msra.mxu0 0
        %1311 = vmatprep.subr.bf16.mxu0 0
        %1312 = vmatpush1.bf16.msra.mxu0 0
        %1313 = vmatprep.subr.bf16.mxu0 0
        %1314 = vmatpush1.bf16.msra.mxu0 0
        %1315 = vmatprep.subr.bf16.mxu0 0
        %1316 = vmatpush1.bf16.msra.mxu0 0
        %1317 = vmatprep.subr.bf16.mxu0 0
        %1318 = vmatpush1.bf16.msra.mxu0 0
        %1319 = vmatprep.mubr.bf16.mxu0 0
        %1320 = vmatmul.mubr.bf16.gmra.mrb[0].mxu0 %v1237
        %v1321 = vpop.f32.mrb[0].mxu0
        %v1322 = vadd.f32 0.0, %v1321
        %v1323 = vpop.f32.mrb[0].mxu0
        %v1324 = vpop.f32.mrb[0].mxu0
        %v1325 = vpop.f32.mrb[0].mxu0
        %1326 = vdwg.mxu0
        %v1327 = vadd.f32 %v1230, %v1277
        %v1328 = vadd.f32 %v1231, %v1322
        %s1329 = scalar_lea.vmem %s1, 11
        %v1330 = vld [vmem:[%s1329] sm:$0x1]
        %1331 = vrot.lane.b32.xlu0 %v263, 117
        %v1332 = vpop.permute.xlu0 %1331
        %v1334 = vsel %vm266, %v1330, 0
        %v1337 = vsel %vm270, %v1332, 0
        %1339 = vmatprep.subr.bf16.mxu0 0
        %1340 = vmatpush1.bf16.msra.mxu0 %v1337
        %1341 = vmatprep.subr.bf16.mxu0 0
        %1342 = vmatpush1.bf16.msra.mxu0 0
        %1343 = vmatprep.subr.bf16.mxu0 0
        %1344 = vmatpush1.bf16.msra.mxu0 0
        %1345 = vmatprep.subr.bf16.mxu0 0
        %1346 = vmatpush1.bf16.msra.mxu0 0
        %1347 = vmatprep.subr.bf16.mxu0 0
        %1348 = vmatpush1.bf16.msra.mxu0 0
        %1349 = vmatprep.subr.bf16.mxu0 0
        %1350 = vmatpush1.bf16.msra.mxu0 0
        %1351 = vmatprep.subr.bf16.mxu0 0
        %1352 = vmatpush1.bf16.msra.mxu0 0
        %1353 = vmatprep.subr.bf16.mxu0 0
        %1354 = vmatpush1.bf16.msra.mxu0 0
        %1355 = vmatprep.subr.bf16.mxu0 0
        %1356 = vmatpush1.bf16.msra.mxu0 0
        %1357 = vmatprep.subr.bf16.mxu0 0
        %1358 = vmatpush1.bf16.msra.mxu0 0
        %1359 = vmatprep.subr.bf16.mxu0 0
        %1360 = vmatpush1.bf16.msra.mxu0 0
        %1361 = vmatprep.subr.bf16.mxu0 0
        %1362 = vmatpush1.bf16.msra.mxu0 0
        %1363 = vmatprep.subr.bf16.mxu0 0
        %1364 = vmatpush1.bf16.msra.mxu0 0
        %1365 = vmatprep.subr.bf16.mxu0 0
        %1366 = vmatpush1.bf16.msra.mxu0 0
        %1367 = vmatprep.subr.bf16.mxu0 0
        %1368 = vmatpush1.bf16.msra.mxu0 0
        %1369 = vmatprep.subr.bf16.mxu0 0
        %1370 = vmatpush1.bf16.msra.mxu0 0
        %1371 = vmatprep.mubr.bf16.mxu0 0
        %1372 = vmatmul.mubr.bf16.gmra.mrb[0].mxu0 %v1334
        %v1373 = vpop.f32.mrb[0].mxu0
        %v1374 = vadd.f32 0.0, %v1373
        %v1375 = vpop.f32.mrb[0].mxu0
        %v1376 = vpop.f32.mrb[0].mxu0
        %v1377 = vpop.f32.mrb[0].mxu0
        %1378 = vdwg.mxu0
        %1379 = vrot.lane.b32.xlu0 %v321, 117
        %v1380 = vpop.permute.xlu0 %1379
        %v1382 = vsel %vm270, %v1380, 0
        %1384 = vmatprep.subr.bf16.mxu0 0
        %1385 = vmatpush1.bf16.msra.mxu0 %v1382
        %1386 = vmatprep.subr.bf16.mxu0 0
        %1387 = vmatpush1.bf16.msra.mxu0 0
        %1388 = vmatprep.subr.bf16.mxu0 0
        %1389 = vmatpush1.bf16.msra.mxu0 0
        %1390 = vmatprep.subr.bf16.mxu0 0
        %1391 = vmatpush1.bf16.msra.mxu0 0
        %1392 = vmatprep.subr.bf16.mxu0 0
        %1393 = vmatpush1.bf16.msra.mxu0 0
        %1394 = vmatprep.subr.bf16.mxu0 0
        %1395 = vmatpush1.bf16.msra.mxu0 0
        %1396 = vmatprep.subr.bf16.mxu0 0
        %1397 = vmatpush1.bf16.msra.mxu0 0
        %1398 = vmatprep.subr.bf16.mxu0 0
        %1399 = vmatpush1.bf16.msra.mxu0 0
        %1400 = vmatprep.subr.bf16.mxu0 0
        %1401 = vmatpush1.bf16.msra.mxu0 0
        %1402 = vmatprep.subr.bf16.mxu0 0
        %1403 = vmatpush1.bf16.msra.mxu0 0
        %1404 = vmatprep.subr.bf16.mxu0 0
        %1405 = vmatpush1.bf16.msra.mxu0 0
        %1406 = vmatprep.subr.bf16.mxu0 0
        %1407 = vmatpush1.bf16.msra.mxu0 0
        %1408 = vmatprep.subr.bf16.mxu0 0
        %1409 = vmatpush1.bf16.msra.mxu0 0
        %1410 = vmatprep.subr.bf16.mxu0 0
        %1411 = vmatpush1.bf16.msra.mxu0 0
        %1412 = vmatprep.subr.bf16.mxu0 0
        %1413 = vmatpush1.bf16.msra.mxu0 0
        %1414 = vmatprep.subr.bf16.mxu0 0
        %1415 = vmatpush1.bf16.msra.mxu0 0
        %1416 = vmatprep.mubr.bf16.mxu0 0
        %1417 = vmatmul.mubr.bf16.gmra.mrb[0].mxu0 %v1334
        %v1418 = vpop.f32.mrb[0].mxu0
        %v1419 = vadd.f32 0.0, %v1418
        %v1420 = vpop.f32.mrb[0].mxu0
        %v1421 = vpop.f32.mrb[0].mxu0
        %v1422 = vpop.f32.mrb[0].mxu0
        %1423 = vdwg.mxu0
        %v1424 = vadd.f32 %v1327, %v1374
        %v1425 = vadd.f32 %v1328, %v1419
        %s1426 = scalar_lea.vmem %s1, 12
        %v1427 = vld [vmem:[%s1426] sm:$0x1]
        %1428 = vrot.lane.b32.xlu0 %v263, 116
        %v1429 = vpop.permute.xlu0 %1428
        %v1431 = vsel %vm266, %v1427, 0
        %v1434 = vsel %vm270, %v1429, 0
        %1436 = vmatprep.subr.bf16.mxu0 0
        %1437 = vmatpush1.bf16.msra.mxu0 %v1434
        %1438 = vmatprep.subr.bf16.mxu0 0
        %1439 = vmatpush1.bf16.msra.mxu0 0
        %1440 = vmatprep.subr.bf16.mxu0 0
        %1441 = vmatpush1.bf16.msra.mxu0 0
        %1442 = vmatprep.subr.bf16.mxu0 0
        %1443 = vmatpush1.bf16.msra.mxu0 0
        %1444 = vmatprep.subr.bf16.mxu0 0
        %1445 = vmatpush1.bf16.msra.mxu0 0
        %1446 = vmatprep.subr.bf16.mxu0 0
        %1447 = vmatpush1.bf16.msra.mxu0 0
        %1448 = vmatprep.subr.bf16.mxu0 0
        %1449 = vmatpush1.bf16.msra.mxu0 0
        %1450 = vmatprep.subr.bf16.mxu0 0
        %1451 = vmatpush1.bf16.msra.mxu0 0
        %1452 = vmatprep.subr.bf16.mxu0 0
        %1453 = vmatpush1.bf16.msra.mxu0 0
        %1454 = vmatprep.subr.bf16.mxu0 0
        %1455 = vmatpush1.bf16.msra.mxu0 0
        %1456 = vmatprep.subr.bf16.mxu0 0
        %1457 = vmatpush1.bf16.msra.mxu0 0
        %1458 = vmatprep.subr.bf16.mxu0 0
        %1459 = vmatpush1.bf16.msra.mxu0 0
        %1460 = vmatprep.subr.bf16.mxu0 0
        %1461 = vmatpush1.bf16.msra.mxu0 0
        %1462 = vmatprep.subr.bf16.mxu0 0
        %1463 = vmatpush1.bf16.msra.mxu0 0
        %1464 = vmatprep.subr.bf16.mxu0 0
        %1465 = vmatpush1.bf16.msra.mxu0 0
        %1466 = vmatprep.subr.bf16.mxu0 0
        %1467 = vmatpush1.bf16.msra.mxu0 0
        %1468 = vmatprep.mubr.bf16.mxu0 0
        %1469 = vmatmul.mubr.bf16.gmra.mrb[0].mxu0 %v1431
        %v1470 = vpop.f32.mrb[0].mxu0
        %v1471 = vadd.f32 0.0, %v1470
        %v1472 = vpop.f32.mrb[0].mxu0
        %v1473 = vpop.f32.mrb[0].mxu0
        %v1474 = vpop.f32.mrb[0].mxu0
        %1475 = vdwg.mxu0
        %1476 = vrot.lane.b32.xlu0 %v321, 116
        %v1477 = vpop.permute.xlu0 %1476
        %v1479 = vsel %vm270, %v1477, 0
        %1481 = vmatprep.subr.bf16.mxu0 0
        %1482 = vmatpush1.bf16.msra.mxu0 %v1479
        %1483 = vmatprep.subr.bf16.mxu0 0
        %1484 = vmatpush1.bf16.msra.mxu0 0
        %1485 = vmatprep.subr.bf16.mxu0 0
        %1486 = vmatpush1.bf16.msra.mxu0 0
        %1487 = vmatprep.subr.bf16.mxu0 0
        %1488 = vmatpush1.bf16.msra.mxu0 0
        %1489 = vmatprep.subr.bf16.mxu0 0
        %1490 = vmatpush1.bf16.msra.mxu0 0
        %1491 = vmatprep.subr.bf16.mxu0 0
        %1492 = vmatpush1.bf16.msra.mxu0 0
        %1493 = vmatprep.subr.bf16.mxu0 0
        %1494 = vmatpush1.bf16.msra.mxu0 0
        %1495 = vmatprep.subr.bf16.mxu0 0
        %1496 = vmatpush1.bf16.msra.mxu0 0
        %1497 = vmatprep.subr.bf16.mxu0 0
        %1498 = vmatpush1.bf16.msra.mxu0 0
        %1499 = vmatprep.subr.bf16.mxu0 0
        %1500 = vmatpush1.bf16.msra.mxu0 0
        %1501 = vmatprep.subr.bf16.mxu0 0
        %1502 = vmatpush1.bf16.msra.mxu0 0
        %1503 = vmatprep.subr.bf16.mxu0 0
        %1504 = vmatpush1.bf16.msra.mxu0 0
        %1505 = vmatprep.subr.bf16.mxu0 0
        %1506 = vmatpush1.bf16.msra.mxu0 0
        %1507 = vmatprep.subr.bf16.mxu0 0
        %1508 = vmatpush1.bf16.msra.mxu0 0
        %1509 = vmatprep.subr.bf16.mxu0 0
        %1510 = vmatpush1.bf16.msra.mxu0 0
        %1511 = vmatprep.subr.bf16.mxu0 0
        %1512 = vmatpush1.bf16.msra.mxu0 0
        %1513 = vmatprep.mubr.bf16.mxu0 0
        %1514 = vmatmul.mubr.bf16.gmra.mrb[0].mxu0 %v1431
        %v1515 = vpop.f32.mrb[0].mxu0
        %v1516 = vadd.f32 0.0, %v1515
        %v1517 = vpop.f32.mrb[0].mxu0
        %v1518 = vpop.f32.mrb[0].mxu0
        %v1519 = vpop.f32.mrb[0].mxu0
        %1520 = vdwg.mxu0
        %v1521 = vadd.f32 %v1424, %v1471
        %v1522 = vadd.f32 %v1425, %v1516
        %s1523 = scalar_lea.vmem %s1, 13
        %v1524 = vld [vmem:[%s1523] sm:$0x1]
        %1525 = vrot.lane.b32.xlu0 %v263, 115
        %v1526 = vpop.permute.xlu0 %1525
        %v1528 = vsel %vm266, %v1524, 0
        %v1531 = vsel %vm270, %v1526, 0
        %1533 = vmatprep.subr.bf16.mxu0 0
        %1534 = vmatpush1.bf16.msra.mxu0 %v1531
        %1535 = vmatprep.subr.bf16.mxu0 0
        %1536 = vmatpush1.bf16.msra.mxu0 0
        %1537 = vmatprep.subr.bf16.mxu0 0
        %1538 = vmatpush1.bf16.msra.mxu0 0
        %1539 = vmatprep.subr.bf16.mxu0 0
        %1540 = vmatpush1.bf16.msra.mxu0 0
        %1541 = vmatprep.subr.bf16.mxu0 0
        %1542 = vmatpush1.bf16.msra.mxu0 0
        %1543 = vmatprep.subr.bf16.mxu0 0
        %1544 = vmatpush1.bf16.msra.mxu0 0
        %1545 = vmatprep.subr.bf16.mxu0 0
        %1546 = vmatpush1.bf16.msra.mxu0 0
        %1547 = vmatprep.subr.bf16.mxu0 0
        %1548 = vmatpush1.bf16.msra.mxu0 0
        %1549 = vmatprep.subr.bf16.mxu0 0
        %1550 = vmatpush1.bf16.msra.mxu0 0
        %1551 = vmatprep.subr.bf16.mxu0 0
        %1552 = vmatpush1.bf16.msra.mxu0 0
        %1553 = vmatprep.subr.bf16.mxu0 0
        %1554 = vmatpush1.bf16.msra.mxu0 0
        %1555 = vmatprep.subr.bf16.mxu0 0
        %1556 = vmatpush1.bf16.msra.mxu0 0
        %1557 = vmatprep.subr.bf16.mxu0 0
        %1558 = vmatpush1.bf16.msra.mxu0 0
        %1559 = vmatprep.subr.bf16.mxu0 0
        %1560 = vmatpush1.bf16.msra.mxu0 0
        %1561 = vmatprep.subr.bf16.mxu0 0
        %1562 = vmatpush1.bf16.msra.mxu0 0
        %1563 = vmatprep.subr.bf16.mxu0 0
        %1564 = vmatpush1.bf16.msra.mxu0 0
        %1565 = vmatprep.mubr.bf16.mxu0 0
        %1566 = vmatmul.mubr.bf16.gmra.mrb[0].mxu0 %v1528
        %v1567 = vpop.f32.mrb[0].mxu0
        %v1568 = vadd.f32 0.0, %v1567
        %v1569 = vpop.f32.mrb[0].mxu0
        %v1570 = vpop.f32.mrb[0].mxu0
        %v1571 = vpop.f32.mrb[0].mxu0
        %1572 = vdwg.mxu0
        %1573 = vrot.lane.b32.xlu0 %v321, 115
        %v1574 = vpop.permute.xlu0 %1573
        %v1576 = vsel %vm270, %v1574, 0
        %1578 = vmatprep.subr.bf16.mxu0 0
        %1579 = vmatpush1.bf16.msra.mxu0 %v1576
        %1580 = vmatprep.subr.bf16.mxu0 0
        %1581 = vmatpush1.bf16.msra.mxu0 0
        %1582 = vmatprep.subr.bf16.mxu0 0
        %1583 = vmatpush1.bf16.msra.mxu0 0
        %1584 = vmatprep.subr.bf16.mxu0 0
        %1585 = vmatpush1.bf16.msra.mxu0 0
        %1586 = vmatprep.subr.bf16.mxu0 0
        %1587 = vmatpush1.bf16.msra.mxu0 0
        %1588 = vmatprep.subr.bf16.mxu0 0
        %1589 = vmatpush1.bf16.msra.mxu0 0
        %1590 = vmatprep.subr.bf16.mxu0 0
        %1591 = vmatpush1.bf16.msra.mxu0 0
        %1592 = vmatprep.subr.bf16.mxu0 0
        %1593 = vmatpush1.bf16.msra.mxu0 0
        %1594 = vmatprep.subr.bf16.mxu0 0
        %1595 = vmatpush1.bf16.msra.mxu0 0
        %1596 = vmatprep.subr.bf16.mxu0 0
        %1597 = vmatpush1.bf16.msra.mxu0 0
        %1598 = vmatprep.subr.bf16.mxu0 0
        %1599 = vmatpush1.bf16.msra.mxu0 0
        %1600 = vmatprep.subr.bf16.mxu0 0
        %1601 = vmatpush1.bf16.msra.mxu0 0
        %1602 = vmatprep.subr.bf16.mxu0 0
        %1603 = vmatpush1.bf16.msra.mxu0 0
        %1604 = vmatprep.subr.bf16.mxu0 0
        %1605 = vmatpush1.bf16.msra.mxu0 0
        %1606 = vmatprep.subr.bf16.mxu0 0
        %1607 = vmatpush1.bf16.msra.mxu0 0
        %1608 = vmatprep.subr.bf16.mxu0 0
        %1609 = vmatpush1.bf16.msra.mxu0 0
        %1610 = vmatprep.mubr.bf16.mxu0 0
        %1611 = vmatmul.mubr.bf16.gmra.mrb[0].mxu0 %v1528
        %v1612 = vpop.f32.mrb[0].mxu0
        %v1613 = vadd.f32 0.0, %v1612
        %v1614 = vpop.f32.mrb[0].mxu0
        %v1615 = vpop.f32.mrb[0].mxu0
        %v1616 = vpop.f32.mrb[0].mxu0
        %1617 = vdwg.mxu0
        %v1618 = vadd.f32 %v1521, %v1568
        %v1619 = vadd.f32 %v1522, %v1613
        %s1620 = scalar_lea.vmem %s1, 14
        %v1621 = vld [vmem:[%s1620] sm:$0x1]
        %1622 = vrot.lane.b32.xlu0 %v263, 114
        %v1623 = vpop.permute.xlu0 %1622
        %v1625 = vsel %vm266, %v1621, 0
        %v1628 = vsel %vm270, %v1623, 0
        %1630 = vmatprep.subr.bf16.mxu0 0
        %1631 = vmatpush1.bf16.msra.mxu0 %v1628
        %1632 = vmatprep.subr.bf16.mxu0 0
        %1633 = vmatpush1.bf16.msra.mxu0 0
        %1634 = vmatprep.subr.bf16.mxu0 0
        %1635 = vmatpush1.bf16.msra.mxu0 0
        %1636 = vmatprep.subr.bf16.mxu0 0
        %1637 = vmatpush1.bf16.msra.mxu0 0
        %1638 = vmatprep.subr.bf16.mxu0 0
        %1639 = vmatpush1.bf16.msra.mxu0 0
        %1640 = vmatprep.subr.bf16.mxu0 0
        %1641 = vmatpush1.bf16.msra.mxu0 0
        %1642 = vmatprep.subr.bf16.mxu0 0
        %1643 = vmatpush1.bf16.msra.mxu0 0
        %1644 = vmatprep.subr.bf16.mxu0 0
        %1645 = vmatpush1.bf16.msra.mxu0 0
        %1646 = vmatprep.subr.bf16.mxu0 0
        %1647 = vmatpush1.bf16.msra.mxu0 0
        %1648 = vmatprep.subr.bf16.mxu0 0
        %1649 = vmatpush1.bf16.msra.mxu0 0
        %1650 = vmatprep.subr.bf16.mxu0 0
        %1651 = vmatpush1.bf16.msra.mxu0 0
        %1652 = vmatprep.subr.bf16.mxu0 0
        %1653 = vmatpush1.bf16.msra.mxu0 0
        %1654 = vmatprep.subr.bf16.mxu0 0
        %1655 = vmatpush1.bf16.msra.mxu0 0
        %1656 = vmatprep.subr.bf16.mxu0 0
        %1657 = vmatpush1.bf16.msra.mxu0 0
        %1658 = vmatprep.subr.bf16.mxu0 0
        %1659 = vmatpush1.bf16.msra.mxu0 0
        %1660 = vmatprep.subr.bf16.mxu0 0
        %1661 = vmatpush1.bf16.msra.mxu0 0
        %1662 = vmatprep.mubr.bf16.mxu0 0
        %1663 = vmatmul.mubr.bf16.gmra.mrb[0].mxu0 %v1625
        %v1664 = vpop.f32.mrb[0].mxu0
        %v1665 = vadd.f32 0.0, %v1664
        %v1666 = vpop.f32.mrb[0].mxu0
        %v1667 = vpop.f32.mrb[0].mxu0
        %v1668 = vpop.f32.mrb[0].mxu0
        %1669 = vdwg.mxu0
        %1670 = vrot.lane.b32.xlu0 %v321, 114
        %v1671 = vpop.permute.xlu0 %1670
        %v1673 = vsel %vm270, %v1671, 0
        %1675 = vmatprep.subr.bf16.mxu0 0
        %1676 = vmatpush1.bf16.msra.mxu0 %v1673
        %1677 = vmatprep.subr.bf16.mxu0 0
        %1678 = vmatpush1.bf16.msra.mxu0 0
        %1679 = vmatprep.subr.bf16.mxu0 0
        %1680 = vmatpush1.bf16.msra.mxu0 0
        %1681 = vmatprep.subr.bf16.mxu0 0
        %1682 = vmatpush1.bf16.msra.mxu0 0
        %1683 = vmatprep.subr.bf16.mxu0 0
        %1684 = vmatpush1.bf16.msra.mxu0 0
        %1685 = vmatprep.subr.bf16.mxu0 0
        %1686 = vmatpush1.bf16.msra.mxu0 0
        %1687 = vmatprep.subr.bf16.mxu0 0
        %1688 = vmatpush1.bf16.msra.mxu0 0
        %1689 = vmatprep.subr.bf16.mxu0 0
        %1690 = vmatpush1.bf16.msra.mxu0 0
        %1691 = vmatprep.subr.bf16.mxu0 0
        %1692 = vmatpush1.bf16.msra.mxu0 0
        %1693 = vmatprep.subr.bf16.mxu0 0
        %1694 = vmatpush1.bf16.msra.mxu0 0
        %1695 = vmatprep.subr.bf16.mxu0 0
        %1696 = vmatpush1.bf16.msra.mxu0 0
        %1697 = vmatprep.subr.bf16.mxu0 0
        %1698 = vmatpush1.bf16.msra.mxu0 0
        %1699 = vmatprep.subr.bf16.mxu0 0
        %1700 = vmatpush1.bf16.msra.mxu0 0
        %1701 = vmatprep.subr.bf16.mxu0 0
        %1702 = vmatpush1.bf16.msra.mxu0 0
        %1703 = vmatprep.subr.bf16.mxu0 0
        %1704 = vmatpush1.bf16.msra.mxu0 0
        %1705 = vmatprep.subr.bf16.mxu0 0
        %1706 = vmatpush1.bf16.msra.mxu0 0
        %1707 = vmatprep.mubr.bf16.mxu0 0
        %1708 = vmatmul.mubr.bf16.gmra.mrb[0].mxu0 %v1625
        %v1709 = vpop.f32.mrb[0].mxu0
        %v1710 = vadd.f32 0.0, %v1709
        %v1711 = vpop.f32.mrb[0].mxu0
        %v1712 = vpop.f32.mrb[0].mxu0
        %v1713 = vpop.f32.mrb[0].mxu0
        %1714 = vdwg.mxu0
        %v1715 = vadd.f32 %v1618, %v1665
        %v1716 = vadd.f32 %v1619, %v1710
        %s1717 = scalar_lea.vmem %s1, 15
        %v1718 = vld [vmem:[%s1717] sm:$0x1]
        %1719 = vrot.lane.b32.xlu0 %v263, 113
        %v1720 = vpop.permute.xlu0 %1719
        %v1722 = vsel %vm266, %v1718, 0
        %v1725 = vsel %vm270, %v1720, 0
        %1727 = vmatprep.subr.bf16.mxu0 0
        %1728 = vmatpush1.bf16.msra.mxu0 %v1725
        %1729 = vmatprep.subr.bf16.mxu0 0
        %1730 = vmatpush1.bf16.msra.mxu0 0
        %1731 = vmatprep.subr.bf16.mxu0 0
        %1732 = vmatpush1.bf16.msra.mxu0 0
        %1733 = vmatprep.subr.bf16.mxu0 0
        %1734 = vmatpush1.bf16.msra.mxu0 0
        %1735 = vmatprep.subr.bf16.mxu0 0
        %1736 = vmatpush1.bf16.msra.mxu0 0
        %1737 = vmatprep.subr.bf16.mxu0 0
        %1738 = vmatpush1.bf16.msra.mxu0 0
        %1739 = vmatprep.subr.bf16.mxu0 0
        %1740 = vmatpush1.bf16.msra.mxu0 0
        %1741 = vmatprep.subr.bf16.mxu0 0
        %1742 = vmatpush1.bf16.msra.mxu0 0
        %1743 = vmatprep.subr.bf16.mxu0 0
        %1744 = vmatpush1.bf16.msra.mxu0 0
        %1745 = vmatprep.subr.bf16.mxu0 0
        %1746 = vmatpush1.bf16.msra.mxu0 0
        %1747 = vmatprep.subr.bf16.mxu0 0
        %1748 = vmatpush1.bf16.msra.mxu0 0
        %1749 = vmatprep.subr.bf16.mxu0 0
        %1750 = vmatpush1.bf16.msra.mxu0 0
        %1751 = vmatprep.subr.bf16.mxu0 0
        %1752 = vmatpush1.bf16.msra.mxu0 0
        %1753 = vmatprep.subr.bf16.mxu0 0
        %1754 = vmatpush1.bf16.msra.mxu0 0
        %1755 = vmatprep.subr.bf16.mxu0 0
        %1756 = vmatpush1.bf16.msra.mxu0 0
        %1757 = vmatprep.subr.bf16.mxu0 0
        %1758 = vmatpush1.bf16.msra.mxu0 0
        %1759 = vmatprep.mubr.bf16.mxu0 0
        %1760 = vmatmul.mubr.bf16.gmra.mrb[0].mxu0 %v1722
        %v1761 = vpop.f32.mrb[0].mxu0
        %v1762 = vadd.f32 0.0, %v1761
        %v1763 = vpop.f32.mrb[0].mxu0
        %v1764 = vpop.f32.mrb[0].mxu0
        %v1765 = vpop.f32.mrb[0].mxu0
        %1766 = vdwg.mxu0
        %1767 = vrot.lane.b32.xlu0 %v321, 113
        %v1768 = vpop.permute.xlu0 %1767
        %v1770 = vsel %vm270, %v1768, 0
        %1772 = vmatprep.subr.bf16.mxu0 0
        %1773 = vmatpush1.bf16.msra.mxu0 %v1770
        %1774 = vmatprep.subr.bf16.mxu0 0
        %1775 = vmatpush1.bf16.msra.mxu0 0
        %1776 = vmatprep.subr.bf16.mxu0 0
        %1777 = vmatpush1.bf16.msra.mxu0 0
        %1778 = vmatprep.subr.bf16.mxu0 0
        %1779 = vmatpush1.bf16.msra.mxu0 0
        %1780 = vmatprep.subr.bf16.mxu0 0
        %1781 = vmatpush1.bf16.msra.mxu0 0
        %1782 = vmatprep.subr.bf16.mxu0 0
        %1783 = vmatpush1.bf16.msra.mxu0 0
        %1784 = vmatprep.subr.bf16.mxu0 0
        %1785 = vmatpush1.bf16.msra.mxu0 0
        %1786 = vmatprep.subr.bf16.mxu0 0
        %1787 = vmatpush1.bf16.msra.mxu0 0
        %1788 = vmatprep.subr.bf16.mxu0 0
        %1789 = vmatpush1.bf16.msra.mxu0 0
        %1790 = vmatprep.subr.bf16.mxu0 0
        %1791 = vmatpush1.bf16.msra.mxu0 0
        %1792 = vmatprep.subr.bf16.mxu0 0
        %1793 = vmatpush1.bf16.msra.mxu0 0
        %1794 = vmatprep.subr.bf16.mxu0 0
        %1795 = vmatpush1.bf16.msra.mxu0 0
        %1796 = vmatprep.subr.bf16.mxu0 0
        %1797 = vmatpush1.bf16.msra.mxu0 0
        %1798 = vmatprep.subr.bf16.mxu0 0
        %1799 = vmatpush1.bf16.msra.mxu0 0
        %1800 = vmatprep.subr.bf16.mxu0 0
        %1801 = vmatpush1.bf16.msra.mxu0 0
        %1802 = vmatprep.subr.bf16.mxu0 0
        %1803 = vmatpush1.bf16.msra.mxu0 0
        %1804 = vmatprep.mubr.bf16.mxu0 0
        %1805 = vmatmul.mubr.bf16.gmra.mrb[0].mxu0 %v1722
        %v1806 = vpop.f32.mrb[0].mxu0
        %v1807 = vadd.f32 0.0, %v1806
        %v1808 = vpop.f32.mrb[0].mxu0
        %v1809 = vpop.f32.mrb[0].mxu0
        %v1810 = vpop.f32.mrb[0].mxu0
        %1811 = vdwg.mxu0
        %v1812 = vadd.f32 %v1715, %v1762
        %v1813 = vadd.f32 %v1716, %v1807
        %s1814 = scalar_lea.vmem %s1, 16
        %v1815 = vld [vmem:[%s1814] sm:$0x1]
        %1816 = vrot.lane.b32.xlu0 %v263, 112
        %v1817 = vpop.permute.xlu0 %1816
        %v1819 = vsel %vm266, %v1815, 0
        %v1822 = vsel %vm270, %v1817, 0
        %1824 = vmatprep.subr.bf16.mxu0 0
        %1825 = vmatpush1.bf16.msra.mxu0 %v1822
        %1826 = vmatprep.subr.bf16.mxu0 0
        %1827 = vmatpush1.bf16.msra.mxu0 0
        %1828 = vmatprep.subr.bf16.mxu0 0
        %1829 = vmatpush1.bf16.msra.mxu0 0
        %1830 = vmatprep.subr.bf16.mxu0 0
        %1831 = vmatpush1.bf16.msra.mxu0 0
        %1832 = vmatprep.subr.bf16.mxu0 0
        %1833 = vmatpush1.bf16.msra.mxu0 0
        %1834 = vmatprep.subr.bf16.mxu0 0
        %1835 = vmatpush1.bf16.msra.mxu0 0
        %1836 = vmatprep.subr.bf16.mxu0 0
        %1837 = vmatpush1.bf16.msra.mxu0 0
        %1838 = vmatprep.subr.bf16.mxu0 0
        %1839 = vmatpush1.bf16.msra.mxu0 0
        %1840 = vmatprep.subr.bf16.mxu0 0
        %1841 = vmatpush1.bf16.msra.mxu0 0
        %1842 = vmatprep.subr.bf16.mxu0 0
        %1843 = vmatpush1.bf16.msra.mxu0 0
        %1844 = vmatprep.subr.bf16.mxu0 0
        %1845 = vmatpush1.bf16.msra.mxu0 0
        %1846 = vmatprep.subr.bf16.mxu0 0
        %1847 = vmatpush1.bf16.msra.mxu0 0
        %1848 = vmatprep.subr.bf16.mxu0 0
        %1849 = vmatpush1.bf16.msra.mxu0 0
        %1850 = vmatprep.subr.bf16.mxu0 0
        %1851 = vmatpush1.bf16.msra.mxu0 0
        %1852 = vmatprep.subr.bf16.mxu0 0
        %1853 = vmatpush1.bf16.msra.mxu0 0
        %1854 = vmatprep.subr.bf16.mxu0 0
        %1855 = vmatpush1.bf16.msra.mxu0 0
        %1856 = vmatprep.mubr.bf16.mxu0 0
        %1857 = vmatmul.mubr.bf16.gmra.mrb[0].mxu0 %v1819
        %v1858 = vpop.f32.mrb[0].mxu0
        %v1859 = vadd.f32 0.0, %v1858
        %v1860 = vpop.f32.mrb[0].mxu0
        %v1861 = vpop.f32.mrb[0].mxu0
        %v1862 = vpop.f32.mrb[0].mxu0
        %1863 = vdwg.mxu0
        %1864 = vrot.lane.b32.xlu0 %v321, 112
        %v1865 = vpop.permute.xlu0 %1864
        %v1867 = vsel %vm270, %v1865, 0
        %1869 = vmatprep.subr.bf16.mxu0 0
        %1870 = vmatpush1.bf16.msra.mxu0 %v1867
        %1871 = vmatprep.subr.bf16.mxu0 0
        %1872 = vmatpush1.bf16.msra.mxu0 0
        %1873 = vmatprep.subr.bf16.mxu0 0
        %1874 = vmatpush1.bf16.msra.mxu0 0
        %1875 = vmatprep.subr.bf16.mxu0 0
        %1876 = vmatpush1.bf16.msra.mxu0 0
        %1877 = vmatprep.subr.bf16.mxu0 0
        %1878 = vmatpush1.bf16.msra.mxu0 0
        %1879 = vmatprep.subr.bf16.mxu0 0
        %1880 = vmatpush1.bf16.msra.mxu0 0
        %1881 = vmatprep.subr.bf16.mxu0 0
        %1882 = vmatpush1.bf16.msra.mxu0 0
        %1883 = vmatprep.subr.bf16.mxu0 0
        %1884 = vmatpush1.bf16.msra.mxu0 0
        %1885 = vmatprep.subr.bf16.mxu0 0
        %1886 = vmatpush1.bf16.msra.mxu0 0
        %1887 = vmatprep.subr.bf16.mxu0 0
        %1888 = vmatpush1.bf16.msra.mxu0 0
        %1889 = vmatprep.subr.bf16.mxu0 0
        %1890 = vmatpush1.bf16.msra.mxu0 0
        %1891 = vmatprep.subr.bf16.mxu0 0
        %1892 = vmatpush1.bf16.msra.mxu0 0
        %1893 = vmatprep.subr.bf16.mxu0 0
        %1894 = vmatpush1.bf16.msra.mxu0 0
        %1895 = vmatprep.subr.bf16.mxu0 0
        %1896 = vmatpush1.bf16.msra.mxu0 0
        %1897 = vmatprep.subr.bf16.mxu0 0
        %1898 = vmatpush1.bf16.msra.mxu0 0
        %1899 = vmatprep.subr.bf16.mxu0 0
        %1900 = vmatpush1.bf16.msra.mxu0 0
        %1901 = vmatprep.mubr.bf16.mxu0 0
        %1902 = vmatmul.mubr.bf16.gmra.mrb[0].mxu0 %v1819
        %v1903 = vpop.f32.mrb[0].mxu0
        %v1904 = vadd.f32 0.0, %v1903
        %v1905 = vpop.f32.mrb[0].mxu0
        %v1906 = vpop.f32.mrb[0].mxu0
        %v1907 = vpop.f32.mrb[0].mxu0
        %1908 = vdwg.mxu0
        %v1909 = vadd.f32 %v1812, %v1859
        %v1910 = vadd.f32 %v1813, %v1904
        %s1911 = scalar_lea.vmem %s1, 17
        %v1912 = vld [vmem:[%s1911] sm:$0x1]
        %1913 = vrot.lane.b32.xlu0 %v263, 111
        %v1914 = vpop.permute.xlu0 %1913
        %v1916 = vsel %vm266, %v1912, 0
        %v1919 = vsel %vm270, %v1914, 0
        %1921 = vmatprep.subr.bf16.mxu0 0
        %1922 = vmatpush1.bf16.msra.mxu0 %v1919
        %1923 = vmatprep.subr.bf16.mxu0 0
        %1924 = vmatpush1.bf16.msra.mxu0 0
        %1925 = vmatprep.subr.bf16.mxu0 0
        %1926 = vmatpush1.bf16.msra.mxu0 0
        %1927 = vmatprep.subr.bf16.mxu0 0
        %1928 = vmatpush1.bf16.msra.mxu0 0
        %1929 = vmatprep.subr.bf16.mxu0 0
        %1930 = vmatpush1.bf16.msra.mxu0 0
        %1931 = vmatprep.subr.bf16.mxu0 0
        %1932 = vmatpush1.bf16.msra.mxu0 0
        %1933 = vmatprep.subr.bf16.mxu0 0
        %1934 = vmatpush1.bf16.msra.mxu0 0
        %1935 = vmatprep.subr.bf16.mxu0 0
        %1936 = vmatpush1.bf16.msra.mxu0 0
        %1937 = vmatprep.subr.bf16.mxu0 0
        %1938 = vmatpush1.bf16.msra.mxu0 0
        %1939 = vmatprep.subr.bf16.mxu0 0
        %1940 = vmatpush1.bf16.msra.mxu0 0
        %1941 = vmatprep.subr.bf16.mxu0 0
        %1942 = vmatpush1.bf16.msra.mxu0 0
        %1943 = vmatprep.subr.bf16.mxu0 0
        %1944 = vmatpush1.bf16.msra.mxu0 0
        %1945 = vmatprep.subr.bf16.mxu0 0
        %1946 = vmatpush1.bf16.msra.mxu0 0
        %1947 = vmatprep.subr.bf16.mxu0 0
        %1948 = vmatpush1.bf16.msra.mxu0 0
        %1949 = vmatprep.subr.bf16.mxu0 0
        %1950 = vmatpush1.bf16.msra.mxu0 0
        %1951 = vmatprep.subr.bf16.mxu0 0
        %1952 = vmatpush1.bf16.msra.mxu0 0
        %1953 = vmatprep.mubr.bf16.mxu0 0
        %1954 = vmatmul.mubr.bf16.gmra.mrb[0].mxu0 %v1916
        %v1955 = vpop.f32.mrb[0].mxu0
        %v1956 = vadd.f32 0.0, %v1955
        %v1957 = vpop.f32.mrb[0].mxu0
        %v1958 = vpop.f32.mrb[0].mxu0
        %v1959 = vpop.f32.mrb[0].mxu0
        %1960 = vdwg.mxu0
        %1961 = vrot.lane.b32.xlu0 %v321, 111
        %v1962 = vpop.permute.xlu0 %1961
        %v1964 = vsel %vm270, %v1962, 0
        %1966 = vmatprep.subr.bf16.mxu0 0
        %1967 = vmatpush1.bf16.msra.mxu0 %v1964
        %1968 = vmatprep.subr.bf16.mxu0 0
        %1969 = vmatpush1.bf16.msra.mxu0 0
        %1970 = vmatprep.subr.bf16.mxu0 0
        %1971 = vmatpush1.bf16.msra.mxu0 0
        %1972 = vmatprep.subr.bf16.mxu0 0
        %1973 = vmatpush1.bf16.msra.mxu0 0
        %1974 = vmatprep.subr.bf16.mxu0 0
        %1975 = vmatpush1.bf16.msra.mxu0 0
        %1976 = vmatprep.subr.bf16.mxu0 0
        %1977 = vmatpush1.bf16.msra.mxu0 0
        %1978 = vmatprep.subr.bf16.mxu0 0
        %1979 = vmatpush1.bf16.msra.mxu0 0
        %1980 = vmatprep.subr.bf16.mxu0 0
        %1981 = vmatpush1.bf16.msra.mxu0 0
        %1982 = vmatprep.subr.bf16.mxu0 0
        %1983 = vmatpush1.bf16.msra.mxu0 0
        %1984 = vmatprep.subr.bf16.mxu0 0
        %1985 = vmatpush1.bf16.msra.mxu0 0
        %1986 = vmatprep.subr.bf16.mxu0 0
        %1987 = vmatpush1.bf16.msra.mxu0 0
        %1988 = vmatprep.subr.bf16.mxu0 0
        %1989 = vmatpush1.bf16.msra.mxu0 0
        %1990 = vmatprep.subr.bf16.mxu0 0
        %1991 = vmatpush1.bf16.msra.mxu0 0
        %1992 = vmatprep.subr.bf16.mxu0 0
        %1993 = vmatpush1.bf16.msra.mxu0 0
        %1994 = vmatprep.subr.bf16.mxu0 0
        %1995 = vmatpush1.bf16.msra.mxu0 0
        %1996 = vmatprep.subr.bf16.mxu0 0
        %1997 = vmatpush1.bf16.msra.mxu0 0
        %1998 = vmatprep.mubr.bf16.mxu0 0
        %1999 = vmatmul.mubr.bf16.gmra.mrb[0].mxu0 %v1916
        %v2000 = vpop.f32.mrb[0].mxu0
        %v2001 = vadd.f32 0.0, %v2000
        %v2002 = vpop.f32.mrb[0].mxu0
        %v2003 = vpop.f32.mrb[0].mxu0
        %v2004 = vpop.f32.mrb[0].mxu0
        %2005 = vdwg.mxu0
        %v2006 = vadd.f32 %v1909, %v1956
        %v2007 = vadd.f32 %v1910, %v2001
        %s2008 = scalar_lea.vmem %s1, 18
        %v2009 = vld [vmem:[%s2008] sm:$0x1]
        %2010 = vrot.lane.b32.xlu0 %v263, 110
        %v2011 = vpop.permute.xlu0 %2010
        %v2013 = vsel %vm266, %v2009, 0
        %v2016 = vsel %vm270, %v2011, 0
        %2018 = vmatprep.subr.bf16.mxu0 0
        %2019 = vmatpush1.bf16.msra.mxu0 %v2016
        %2020 = vmatprep.subr.bf16.mxu0 0
        %2021 = vmatpush1.bf16.msra.mxu0 0
        %2022 = vmatprep.subr.bf16.mxu0 0
        %2023 = vmatpush1.bf16.msra.mxu0 0
        %2024 = vmatprep.subr.bf16.mxu0 0
        %2025 = vmatpush1.bf16.msra.mxu0 0
        %2026 = vmatprep.subr.bf16.mxu0 0
        %2027 = vmatpush1.bf16.msra.mxu0 0
        %2028 = vmatprep.subr.bf16.mxu0 0
        %2029 = vmatpush1.bf16.msra.mxu0 0
        %2030 = vmatprep.subr.bf16.mxu0 0
        %2031 = vmatpush1.bf16.msra.mxu0 0
        %2032 = vmatprep.subr.bf16.mxu0 0
        %2033 = vmatpush1.bf16.msra.mxu0 0
        %2034 = vmatprep.subr.bf16.mxu0 0
        %2035 = vmatpush1.bf16.msra.mxu0 0
        %2036 = vmatprep.subr.bf16.mxu0 0
        %2037 = vmatpush1.bf16.msra.mxu0 0
        %2038 = vmatprep.subr.bf16.mxu0 0
        %2039 = vmatpush1.bf16.msra.mxu0 0
        %2040 = vmatprep.subr.bf16.mxu0 0
        %2041 = vmatpush1.bf16.msra.mxu0 0
        %2042 = vmatprep.subr.bf16.mxu0 0
        %2043 = vmatpush1.bf16.msra.mxu0 0
        %2044 = vmatprep.subr.bf16.mxu0 0
        %2045 = vmatpush1.bf16.msra.mxu0 0
        %2046 = vmatprep.subr.bf16.mxu0 0
        %2047 = vmatpush1.bf16.msra.mxu0 0
        %2048 = vmatprep.subr.bf16.mxu0 0
        %2049 = vmatpush1.bf16.msra.mxu0 0
        %2050 = vmatprep.mubr.bf16.mxu0 0
        %2051 = vmatmul.mubr.bf16.gmra.mrb[0].mxu0 %v2013
        %v2052 = vpop.f32.mrb[0].mxu0
        %v2053 = vadd.f32 0.0, %v2052
        %v2054 = vpop.f32.mrb[0].mxu0
        %v2055 = vpop.f32.mrb[0].mxu0
        %v2056 = vpop.f32.mrb[0].mxu0
        %2057 = vdwg.mxu0
        %2058 = vrot.lane.b32.xlu0 %v321, 110
        %v2059 = vpop.permute.xlu0 %2058
        %v2061 = vsel %vm270, %v2059, 0
        %2063 = vmatprep.subr.bf16.mxu0 0
        %2064 = vmatpush1.bf16.msra.mxu0 %v2061
        %2065 = vmatprep.subr.bf16.mxu0 0
        %2066 = vmatpush1.bf16.msra.mxu0 0
        %2067 = vmatprep.subr.bf16.mxu0 0
        %2068 = vmatpush1.bf16.msra.mxu0 0
        %2069 = vmatprep.subr.bf16.mxu0 0
        %2070 = vmatpush1.bf16.msra.mxu0 0
        %2071 = vmatprep.subr.bf16.mxu0 0
        %2072 = vmatpush1.bf16.msra.mxu0 0
        %2073 = vmatprep.subr.bf16.mxu0 0
        %2074 = vmatpush1.bf16.msra.mxu0 0
        %2075 = vmatprep.subr.bf16.mxu0 0
        %2076 = vmatpush1.bf16.msra.mxu0 0
        %2077 = vmatprep.subr.bf16.mxu0 0
        %2078 = vmatpush1.bf16.msra.mxu0 0
        %2079 = vmatprep.subr.bf16.mxu0 0
        %2080 = vmatpush1.bf16.msra.mxu0 0
        %2081 = vmatprep.subr.bf16.mxu0 0
        %2082 = vmatpush1.bf16.msra.mxu0 0
        %2083 = vmatprep.subr.bf16.mxu0 0
        %2084 = vmatpush1.bf16.msra.mxu0 0
        %2085 = vmatprep.subr.bf16.mxu0 0
        %2086 = vmatpush1.bf16.msra.mxu0 0
        %2087 = vmatprep.subr.bf16.mxu0 0
        %2088 = vmatpush1.bf16.msra.mxu0 0
        %2089 = vmatprep.subr.bf16.mxu0 0
        %2090 = vmatpush1.bf16.msra.mxu0 0
        %2091 = vmatprep.subr.bf16.mxu0 0
        %2092 = vmatpush1.bf16.msra.mxu0 0
        %2093 = vmatprep.subr.bf16.mxu0 0
        %2094 = vmatpush1.bf16.msra.mxu0 0
        %2095 = vmatprep.mubr.bf16.mxu0 0
        %2096 = vmatmul.mubr.bf16.gmra.mrb[0].mxu0 %v2013
        %v2097 = vpop.f32.mrb[0].mxu0
        %v2098 = vadd.f32 0.0, %v2097
        %v2099 = vpop.f32.mrb[0].mxu0
        %v2100 = vpop.f32.mrb[0].mxu0
        %v2101 = vpop.f32.mrb[0].mxu0
        %2102 = vdwg.mxu0
        %v2103 = vadd.f32 %v2006, %v2053
        %v2104 = vadd.f32 %v2007, %v2098
        %s2105 = scalar_lea.vmem %s1, 19
        %v2106 = vld [vmem:[%s2105] sm:$0x1]
        %2107 = vrot.lane.b32.xlu0 %v263, 109
        %v2108 = vpop.permute.xlu0 %2107
        %v2110 = vsel %vm266, %v2106, 0
        %v2113 = vsel %vm270, %v2108, 0
        %2115 = vmatprep.subr.bf16.mxu0 0
        %2116 = vmatpush1.bf16.msra.mxu0 %v2113
        %2117 = vmatprep.subr.bf16.mxu0 0
        %2118 = vmatpush1.bf16.msra.mxu0 0
        %2119 = vmatprep.subr.bf16.mxu0 0
        %2120 = vmatpush1.bf16.msra.mxu0 0
        %2121 = vmatprep.subr.bf16.mxu0 0
        %2122 = vmatpush1.bf16.msra.mxu0 0
        %2123 = vmatprep.subr.bf16.mxu0 0
        %2124 = vmatpush1.bf16.msra.mxu0 0
        %2125 = vmatprep.subr.bf16.mxu0 0
        %2126 = vmatpush1.bf16.msra.mxu0 0
        %2127 = vmatprep.subr.bf16.mxu0 0
        %2128 = vmatpush1.bf16.msra.mxu0 0
        %2129 = vmatprep.subr.bf16.mxu0 0
        %2130 = vmatpush1.bf16.msra.mxu0 0
        %2131 = vmatprep.subr.bf16.mxu0 0
        %2132 = vmatpush1.bf16.msra.mxu0 0
        %2133 = vmatprep.subr.bf16.mxu0 0
        %2134 = vmatpush1.bf16.msra.mxu0 0
        %2135 = vmatprep.subr.bf16.mxu0 0
        %2136 = vmatpush1.bf16.msra.mxu0 0
        %2137 = vmatprep.subr.bf16.mxu0 0
        %2138 = vmatpush1.bf16.msra.mxu0 0
        %2139 = vmatprep.subr.bf16.mxu0 0
        %2140 = vmatpush1.bf16.msra.mxu0 0
        %2141 = vmatprep.subr.bf16.mxu0 0
        %2142 = vmatpush1.bf16.msra.mxu0 0
        %2143 = vmatprep.subr.bf16.mxu0 0
        %2144 = vmatpush1.bf16.msra.mxu0 0
        %2145 = vmatprep.subr.bf16.mxu0 0
        %2146 = vmatpush1.bf16.msra.mxu0 0
        %2147 = vmatprep.mubr.bf16.mxu0 0
        %2148 = vmatmul.mubr.bf16.gmra.mrb[0].mxu0 %v2110
        %v2149 = vpop.f32.mrb[0].mxu0
        %v2150 = vadd.f32 0.0, %v2149
        %v2151 = vpop.f32.mrb[0].mxu0
        %v2152 = vpop.f32.mrb[0].mxu0
        %v2153 = vpop.f32.mrb[0].mxu0
        %2154 = vdwg.mxu0
        %2155 = vrot.lane.b32.xlu0 %v321, 109
        %v2156 = vpop.permute.xlu0 %2155
        %v2158 = vsel %vm270, %v2156, 0
        %2160 = vmatprep.subr.bf16.mxu0 0
        %2161 = vmatpush1.bf16.msra.mxu0 %v2158
        %2162 = vmatprep.subr.bf16.mxu0 0
        %2163 = vmatpush1.bf16.msra.mxu0 0
        %2164 = vmatprep.subr.bf16.mxu0 0
        %2165 = vmatpush1.bf16.msra.mxu0 0
        %2166 = vmatprep.subr.bf16.mxu0 0
        %2167 = vmatpush1.bf16.msra.mxu0 0
        %2168 = vmatprep.subr.bf16.mxu0 0
        %2169 = vmatpush1.bf16.msra.mxu0 0
        %2170 = vmatprep.subr.bf16.mxu0 0
        %2171 = vmatpush1.bf16.msra.mxu0 0
        %2172 = vmatprep.subr.bf16.mxu0 0
        %2173 = vmatpush1.bf16.msra.mxu0 0
        %2174 = vmatprep.subr.bf16.mxu0 0
        %2175 = vmatpush1.bf16.msra.mxu0 0
        %2176 = vmatprep.subr.bf16.mxu0 0
        %2177 = vmatpush1.bf16.msra.mxu0 0
        %2178 = vmatprep.subr.bf16.mxu0 0
        %2179 = vmatpush1.bf16.msra.mxu0 0
        %2180 = vmatprep.subr.bf16.mxu0 0
        %2181 = vmatpush1.bf16.msra.mxu0 0
        %2182 = vmatprep.subr.bf16.mxu0 0
        %2183 = vmatpush1.bf16.msra.mxu0 0
        %2184 = vmatprep.subr.bf16.mxu0 0
        %2185 = vmatpush1.bf16.msra.mxu0 0
        %2186 = vmatprep.subr.bf16.mxu0 0
        %2187 = vmatpush1.bf16.msra.mxu0 0
        %2188 = vmatprep.subr.bf16.mxu0 0
        %2189 = vmatpush1.bf16.msra.mxu0 0
        %2190 = vmatprep.subr.bf16.mxu0 0
        %2191 = vmatpush1.bf16.msra.mxu0 0
        %2192 = vmatprep.mubr.bf16.mxu0 0
        %2193 = vmatmul.mubr.bf16.gmra.mrb[0].mxu0 %v2110
        %v2194 = vpop.f32.mrb[0].mxu0
        %v2195 = vadd.f32 0.0, %v2194
        %v2196 = vpop.f32.mrb[0].mxu0
        %v2197 = vpop.f32.mrb[0].mxu0
        %v2198 = vpop.f32.mrb[0].mxu0
        %2199 = vdwg.mxu0
        %v2200 = vadd.f32 %v2103, %v2150
        %v2201 = vadd.f32 %v2104, %v2195
        %s2202 = scalar_lea.vmem %s1, 20
        %v2203 = vld [vmem:[%s2202] sm:$0x1]
        %2204 = vrot.lane.b32.xlu0 %v263, 108
        %v2205 = vpop.permute.xlu0 %2204
        %v2207 = vsel %vm266, %v2203, 0
        %v2210 = vsel %vm270, %v2205, 0
        %2212 = vmatprep.subr.bf16.mxu0 0
        %2213 = vmatpush1.bf16.msra.mxu0 %v2210
        %2214 = vmatprep.subr.bf16.mxu0 0
        %2215 = vmatpush1.bf16.msra.mxu0 0
        %2216 = vmatprep.subr.bf16.mxu0 0
        %2217 = vmatpush1.bf16.msra.mxu0 0
        %2218 = vmatprep.subr.bf16.mxu0 0
        %2219 = vmatpush1.bf16.msra.mxu0 0
        %2220 = vmatprep.subr.bf16.mxu0 0
        %2221 = vmatpush1.bf16.msra.mxu0 0
        %2222 = vmatprep.subr.bf16.mxu0 0
        %2223 = vmatpush1.bf16.msra.mxu0 0
        %2224 = vmatprep.subr.bf16.mxu0 0
        %2225 = vmatpush1.bf16.msra.mxu0 0
        %2226 = vmatprep.subr.bf16.mxu0 0
        %2227 = vmatpush1.bf16.msra.mxu0 0
        %2228 = vmatprep.subr.bf16.mxu0 0
        %2229 = vmatpush1.bf16.msra.mxu0 0
        %2230 = vmatprep.subr.bf16.mxu0 0
        %2231 = vmatpush1.bf16.msra.mxu0 0
        %2232 = vmatprep.subr.bf16.mxu0 0
        %2233 = vmatpush1.bf16.msra.mxu0 0
        %2234 = vmatprep.subr.bf16.mxu0 0
        %2235 = vmatpush1.bf16.msra.mxu0 0
        %2236 = vmatprep.subr.bf16.mxu0 0
        %2237 = vmatpush1.bf16.msra.mxu0 0
        %2238 = vmatprep.subr.bf16.mxu0 0
        %2239 = vmatpush1.bf16.msra.mxu0 0
        %2240 = vmatprep.subr.bf16.mxu0 0
        %2241 = vmatpush1.bf16.msra.mxu0 0
        %2242 = vmatprep.subr.bf16.mxu0 0
        %2243 = vmatpush1.bf16.msra.mxu0 0
        %2244 = vmatprep.mubr.bf16.mxu0 0
        %2245 = vmatmul.mubr.bf16.gmra.mrb[0].mxu0 %v2207
        %v2246 = vpop.f32.mrb[0].mxu0
        %v2247 = vadd.f32 0.0, %v2246
        %v2248 = vpop.f32.mrb[0].mxu0
        %v2249 = vpop.f32.mrb[0].mxu0
        %v2250 = vpop.f32.mrb[0].mxu0
        %2251 = vdwg.mxu0
        %2252 = vrot.lane.b32.xlu0 %v321, 108
        %v2253 = vpop.permute.xlu0 %2252
        %v2255 = vsel %vm270, %v2253, 0
        %2257 = vmatprep.subr.bf16.mxu0 0
        %2258 = vmatpush1.bf16.msra.mxu0 %v2255
        %2259 = vmatprep.subr.bf16.mxu0 0
        %2260 = vmatpush1.bf16.msra.mxu0 0
        %2261 = vmatprep.subr.bf16.mxu0 0
        %2262 = vmatpush1.bf16.msra.mxu0 0
        %2263 = vmatprep.subr.bf16.mxu0 0
        %2264 = vmatpush1.bf16.msra.mxu0 0
        %2265 = vmatprep.subr.bf16.mxu0 0
        %2266 = vmatpush1.bf16.msra.mxu0 0
        %2267 = vmatprep.subr.bf16.mxu0 0
        %2268 = vmatpush1.bf16.msra.mxu0 0
        %2269 = vmatprep.subr.bf16.mxu0 0
        %2270 = vmatpush1.bf16.msra.mxu0 0
        %2271 = vmatprep.subr.bf16.mxu0 0
        %2272 = vmatpush1.bf16.msra.mxu0 0
        %2273 = vmatprep.subr.bf16.mxu0 0
        %2274 = vmatpush1.bf16.msra.mxu0 0
        %2275 = vmatprep.subr.bf16.mxu0 0
        %2276 = vmatpush1.bf16.msra.mxu0 0
        %2277 = vmatprep.subr.bf16.mxu0 0
        %2278 = vmatpush1.bf16.msra.mxu0 0
        %2279 = vmatprep.subr.bf16.mxu0 0
        %2280 = vmatpush1.bf16.msra.mxu0 0
        %2281 = vmatprep.subr.bf16.mxu0 0
        %2282 = vmatpush1.bf16.msra.mxu0 0
        %2283 = vmatprep.subr.bf16.mxu0 0
        %2284 = vmatpush1.bf16.msra.mxu0 0
        %2285 = vmatprep.subr.bf16.mxu0 0
        %2286 = vmatpush1.bf16.msra.mxu0 0
        %2287 = vmatprep.subr.bf16.mxu0 0
        %2288 = vmatpush1.bf16.msra.mxu0 0
        %2289 = vmatprep.mubr.bf16.mxu0 0
        %2290 = vmatmul.mubr.bf16.gmra.mrb[0].mxu0 %v2207
        %v2291 = vpop.f32.mrb[0].mxu0
        %v2292 = vadd.f32 0.0, %v2291
        %v2293 = vpop.f32.mrb[0].mxu0
        %v2294 = vpop.f32.mrb[0].mxu0
        %v2295 = vpop.f32.mrb[0].mxu0
        %2296 = vdwg.mxu0
        %v2297 = vadd.f32 %v2200, %v2247
        %v2298 = vadd.f32 %v2201, %v2292
        %s2299 = scalar_lea.vmem %s1, 21
        %v2300 = vld [vmem:[%s2299] sm:$0x1]
        %2301 = vrot.lane.b32.xlu0 %v263, 107
        %v2302 = vpop.permute.xlu0 %2301
        %v2304 = vsel %vm266, %v2300, 0
        %v2307 = vsel %vm270, %v2302, 0
        %2309 = vmatprep.subr.bf16.mxu0 0
        %2310 = vmatpush1.bf16.msra.mxu0 %v2307
        %2311 = vmatprep.subr.bf16.mxu0 0
        %2312 = vmatpush1.bf16.msra.mxu0 0
        %2313 = vmatprep.subr.bf16.mxu0 0
        %2314 = vmatpush1.bf16.msra.mxu0 0
        %2315 = vmatprep.subr.bf16.mxu0 0
        %2316 = vmatpush1.bf16.msra.mxu0 0
        %2317 = vmatprep.subr.bf16.mxu0 0
        %2318 = vmatpush1.bf16.msra.mxu0 0
        %2319 = vmatprep.subr.bf16.mxu0 0
        %2320 = vmatpush1.bf16.msra.mxu0 0
        %2321 = vmatprep.subr.bf16.mxu0 0
        %2322 = vmatpush1.bf16.msra.mxu0 0
        %2323 = vmatprep.subr.bf16.mxu0 0
        %2324 = vmatpush1.bf16.msra.mxu0 0
        %2325 = vmatprep.subr.bf16.mxu0 0
        %2326 = vmatpush1.bf16.msra.mxu0 0
        %2327 = vmatprep.subr.bf16.mxu0 0
        %2328 = vmatpush1.bf16.msra.mxu0 0
        %2329 = vmatprep.subr.bf16.mxu0 0
        %2330 = vmatpush1.bf16.msra.mxu0 0
        %2331 = vmatprep.subr.bf16.mxu0 0
        %2332 = vmatpush1.bf16.msra.mxu0 0
        %2333 = vmatprep.subr.bf16.mxu0 0
        %2334 = vmatpush1.bf16.msra.mxu0 0
        %2335 = vmatprep.subr.bf16.mxu0 0
        %2336 = vmatpush1.bf16.msra.mxu0 0
        %2337 = vmatprep.subr.bf16.mxu0 0
        %2338 = vmatpush1.bf16.msra.mxu0 0
        %2339 = vmatprep.subr.bf16.mxu0 0
        %2340 = vmatpush1.bf16.msra.mxu0 0
        %2341 = vmatprep.mubr.bf16.mxu0 0
        %2342 = vmatmul.mubr.bf16.gmra.mrb[0].mxu0 %v2304
        %v2343 = vpop.f32.mrb[0].mxu0
        %v2344 = vadd.f32 0.0, %v2343
        %v2345 = vpop.f32.mrb[0].mxu0
        %v2346 = vpop.f32.mrb[0].mxu0
        %v2347 = vpop.f32.mrb[0].mxu0
        %2348 = vdwg.mxu0
        %2349 = vrot.lane.b32.xlu0 %v321, 107
        %v2350 = vpop.permute.xlu0 %2349
        %v2352 = vsel %vm270, %v2350, 0
        %2354 = vmatprep.subr.bf16.mxu0 0
        %2355 = vmatpush1.bf16.msra.mxu0 %v2352
        %2356 = vmatprep.subr.bf16.mxu0 0
        %2357 = vmatpush1.bf16.msra.mxu0 0
        %2358 = vmatprep.subr.bf16.mxu0 0
        %2359 = vmatpush1.bf16.msra.mxu0 0
        %2360 = vmatprep.subr.bf16.mxu0 0
        %2361 = vmatpush1.bf16.msra.mxu0 0
        %2362 = vmatprep.subr.bf16.mxu0 0
        %2363 = vmatpush1.bf16.msra.mxu0 0
        %2364 = vmatprep.subr.bf16.mxu0 0
        %2365 = vmatpush1.bf16.msra.mxu0 0
        %2366 = vmatprep.subr.bf16.mxu0 0
        %2367 = vmatpush1.bf16.msra.mxu0 0
        %2368 = vmatprep.subr.bf16.mxu0 0
        %2369 = vmatpush1.bf16.msra.mxu0 0
        %2370 = vmatprep.subr.bf16.mxu0 0
        %2371 = vmatpush1.bf16.msra.mxu0 0
        %2372 = vmatprep.subr.bf16.mxu0 0
        %2373 = vmatpush1.bf16.msra.mxu0 0
        %2374 = vmatprep.subr.bf16.mxu0 0
        %2375 = vmatpush1.bf16.msra.mxu0 0
        %2376 = vmatprep.subr.bf16.mxu0 0
        %2377 = vmatpush1.bf16.msra.mxu0 0
        %2378 = vmatprep.subr.bf16.mxu0 0
        %2379 = vmatpush1.bf16.msra.mxu0 0
        %2380 = vmatprep.subr.bf16.mxu0 0
        %2381 = vmatpush1.bf16.msra.mxu0 0
        %2382 = vmatprep.subr.bf16.mxu0 0
        %2383 = vmatpush1.bf16.msra.mxu0 0
        %2384 = vmatprep.subr.bf16.mxu0 0
        %2385 = vmatpush1.bf16.msra.mxu0 0
        %2386 = vmatprep.mubr.bf16.mxu0 0
        %2387 = vmatmul.mubr.bf16.gmra.mrb[0].mxu0 %v2304
        %v2388 = vpop.f32.mrb[0].mxu0
        %v2389 = vadd.f32 0.0, %v2388
        %v2390 = vpop.f32.mrb[0].mxu0
        %v2391 = vpop.f32.mrb[0].mxu0
        %v2392 = vpop.f32.mrb[0].mxu0
        %2393 = vdwg.mxu0
        %v2394 = vadd.f32 %v2297, %v2344
        %v2395 = vadd.f32 %v2298, %v2389
        %s2396 = scalar_lea.vmem %s1, 22
        %v2397 = vld [vmem:[%s2396] sm:$0x1]
        %2398 = vrot.lane.b32.xlu0 %v263, 106
        %v2399 = vpop.permute.xlu0 %2398
        %v2401 = vsel %vm266, %v2397, 0
        %v2404 = vsel %vm270, %v2399, 0
        %2406 = vmatprep.subr.bf16.mxu0 0
        %2407 = vmatpush1.bf16.msra.mxu0 %v2404
        %2408 = vmatprep.subr.bf16.mxu0 0
        %2409 = vmatpush1.bf16.msra.mxu0 0
        %2410 = vmatprep.subr.bf16.mxu0 0
        %2411 = vmatpush1.bf16.msra.mxu0 0
        %2412 = vmatprep.subr.bf16.mxu0 0
        %2413 = vmatpush1.bf16.msra.mxu0 0
        %2414 = vmatprep.subr.bf16.mxu0 0
        %2415 = vmatpush1.bf16.msra.mxu0 0
        %2416 = vmatprep.subr.bf16.mxu0 0
        %2417 = vmatpush1.bf16.msra.mxu0 0
        %2418 = vmatprep.subr.bf16.mxu0 0
        %2419 = vmatpush1.bf16.msra.mxu0 0
        %2420 = vmatprep.subr.bf16.mxu0 0
        %2421 = vmatpush1.bf16.msra.mxu0 0
        %2422 = vmatprep.subr.bf16.mxu0 0
        %2423 = vmatpush1.bf16.msra.mxu0 0
        %2424 = vmatprep.subr.bf16.mxu0 0
        %2425 = vmatpush1.bf16.msra.mxu0 0
        %2426 = vmatprep.subr.bf16.mxu0 0
        %2427 = vmatpush1.bf16.msra.mxu0 0
        %2428 = vmatprep.subr.bf16.mxu0 0
        %2429 = vmatpush1.bf16.msra.mxu0 0
        %2430 = vmatprep.subr.bf16.mxu0 0
        %2431 = vmatpush1.bf16.msra.mxu0 0
        %2432 = vmatprep.subr.bf16.mxu0 0
        %2433 = vmatpush1.bf16.msra.mxu0 0
        %2434 = vmatprep.subr.bf16.mxu0 0
        %2435 = vmatpush1.bf16.msra.mxu0 0
        %2436 = vmatprep.subr.bf16.mxu0 0
        %2437 = vmatpush1.bf16.msra.mxu0 0
        %2438 = vmatprep.mubr.bf16.mxu0 0
        %2439 = vmatmul.mubr.bf16.gmra.mrb[0].mxu0 %v2401
        %v2440 = vpop.f32.mrb[0].mxu0
        %v2441 = vadd.f32 0.0, %v2440
        %v2442 = vpop.f32.mrb[0].mxu0
        %v2443 = vpop.f32.mrb[0].mxu0
        %v2444 = vpop.f32.mrb[0].mxu0
        %2445 = vdwg.mxu0
        %2446 = vrot.lane.b32.xlu0 %v321, 106
        %v2447 = vpop.permute.xlu0 %2446
        %v2449 = vsel %vm270, %v2447, 0
        %2451 = vmatprep.subr.bf16.mxu0 0
        %2452 = vmatpush1.bf16.msra.mxu0 %v2449
        %2453 = vmatprep.subr.bf16.mxu0 0
        %2454 = vmatpush1.bf16.msra.mxu0 0
        %2455 = vmatprep.subr.bf16.mxu0 0
        %2456 = vmatpush1.bf16.msra.mxu0 0
        %2457 = vmatprep.subr.bf16.mxu0 0
        %2458 = vmatpush1.bf16.msra.mxu0 0
        %2459 = vmatprep.subr.bf16.mxu0 0
        %2460 = vmatpush1.bf16.msra.mxu0 0
        %2461 = vmatprep.subr.bf16.mxu0 0
        %2462 = vmatpush1.bf16.msra.mxu0 0
        %2463 = vmatprep.subr.bf16.mxu0 0
        %2464 = vmatpush1.bf16.msra.mxu0 0
        %2465 = vmatprep.subr.bf16.mxu0 0
        %2466 = vmatpush1.bf16.msra.mxu0 0
        %2467 = vmatprep.subr.bf16.mxu0 0
        %2468 = vmatpush1.bf16.msra.mxu0 0
        %2469 = vmatprep.subr.bf16.mxu0 0
        %2470 = vmatpush1.bf16.msra.mxu0 0
        %2471 = vmatprep.subr.bf16.mxu0 0
        %2472 = vmatpush1.bf16.msra.mxu0 0
        %2473 = vmatprep.subr.bf16.mxu0 0
        %2474 = vmatpush1.bf16.msra.mxu0 0
        %2475 = vmatprep.subr.bf16.mxu0 0
        %2476 = vmatpush1.bf16.msra.mxu0 0
        %2477 = vmatprep.subr.bf16.mxu0 0
        %2478 = vmatpush1.bf16.msra.mxu0 0
        %2479 = vmatprep.subr.bf16.mxu0 0
        %2480 = vmatpush1.bf16.msra.mxu0 0
        %2481 = vmatprep.subr.bf16.mxu0 0
        %2482 = vmatpush1.bf16.msra.mxu0 0
        %2483 = vmatprep.mubr.bf16.mxu0 0
        %2484 = vmatmul.mubr.bf16.gmra.mrb[0].mxu0 %v2401
        %v2485 = vpop.f32.mrb[0].mxu0
        %v2486 = vadd.f32 0.0, %v2485
        %v2487 = vpop.f32.mrb[0].mxu0
        %v2488 = vpop.f32.mrb[0].mxu0
        %v2489 = vpop.f32.mrb[0].mxu0
        %2490 = vdwg.mxu0
        %v2491 = vadd.f32 %v2394, %v2441
        %v2492 = vadd.f32 %v2395, %v2486
        %s2493 = scalar_lea.vmem %s1, 23
        %v2494 = vld [vmem:[%s2493] sm:$0x1]
        %2495 = vrot.lane.b32.xlu0 %v263, 105
        %v2496 = vpop.permute.xlu0 %2495
        %v2498 = vsel %vm266, %v2494, 0
        %v2501 = vsel %vm270, %v2496, 0
        %2503 = vmatprep.subr.bf16.mxu0 0
        %2504 = vmatpush1.bf16.msra.mxu0 %v2501
        %2505 = vmatprep.subr.bf16.mxu0 0
        %2506 = vmatpush1.bf16.msra.mxu0 0
        %2507 = vmatprep.subr.bf16.mxu0 0
        %2508 = vmatpush1.bf16.msra.mxu0 0
        %2509 = vmatprep.subr.bf16.mxu0 0
        %2510 = vmatpush1.bf16.msra.mxu0 0
        %2511 = vmatprep.subr.bf16.mxu0 0
        %2512 = vmatpush1.bf16.msra.mxu0 0
        %2513 = vmatprep.subr.bf16.mxu0 0
        %2514 = vmatpush1.bf16.msra.mxu0 0
        %2515 = vmatprep.subr.bf16.mxu0 0
        %2516 = vmatpush1.bf16.msra.mxu0 0
        %2517 = vmatprep.subr.bf16.mxu0 0
        %2518 = vmatpush1.bf16.msra.mxu0 0
        %2519 = vmatprep.subr.bf16.mxu0 0
        %2520 = vmatpush1.bf16.msra.mxu0 0
        %2521 = vmatprep.subr.bf16.mxu0 0
        %2522 = vmatpush1.bf16.msra.mxu0 0
        %2523 = vmatprep.subr.bf16.mxu0 0
        %2524 = vmatpush1.bf16.msra.mxu0 0
        %2525 = vmatprep.subr.bf16.mxu0 0
        %2526 = vmatpush1.bf16.msra.mxu0 0
        %2527 = vmatprep.subr.bf16.mxu0 0
        %2528 = vmatpush1.bf16.msra.mxu0 0
        %2529 = vmatprep.subr.bf16.mxu0 0
        %2530 = vmatpush1.bf16.msra.mxu0 0
        %2531 = vmatprep.subr.bf16.mxu0 0
        %2532 = vmatpush1.bf16.msra.mxu0 0
        %2533 = vmatprep.subr.bf16.mxu0 0
        %2534 = vmatpush1.bf16.msra.mxu0 0
        %2535 = vmatprep.mubr.bf16.mxu0 0
        %2536 = vmatmul.mubr.bf16.gmra.mrb[0].mxu0 %v2498
        %v2537 = vpop.f32.mrb[0].mxu0
        %v2538 = vadd.f32 0.0, %v2537
        %v2539 = vpop.f32.mrb[0].mxu0
        %v2540 = vpop.f32.mrb[0].mxu0
        %v2541 = vpop.f32.mrb[0].mxu0
        %2542 = vdwg.mxu0
        %2543 = vrot.lane.b32.xlu0 %v321, 105
        %v2544 = vpop.permute.xlu0 %2543
        %v2546 = vsel %vm270, %v2544, 0
        %2548 = vmatprep.subr.bf16.mxu0 0
        %2549 = vmatpush1.bf16.msra.mxu0 %v2546
        %2550 = vmatprep.subr.bf16.mxu0 0
        %2551 = vmatpush1.bf16.msra.mxu0 0
        %2552 = vmatprep.subr.bf16.mxu0 0
        %2553 = vmatpush1.bf16.msra.mxu0 0
        %2554 = vmatprep.subr.bf16.mxu0 0
        %2555 = vmatpush1.bf16.msra.mxu0 0
        %2556 = vmatprep.subr.bf16.mxu0 0
        %2557 = vmatpush1.bf16.msra.mxu0 0
        %2558 = vmatprep.subr.bf16.mxu0 0
        %2559 = vmatpush1.bf16.msra.mxu0 0
        %2560 = vmatprep.subr.bf16.mxu0 0
        %2561 = vmatpush1.bf16.msra.mxu0 0
        %2562 = vmatprep.subr.bf16.mxu0 0
        %2563 = vmatpush1.bf16.msra.mxu0 0
        %2564 = vmatprep.subr.bf16.mxu0 0
        %2565 = vmatpush1.bf16.msra.mxu0 0
        %2566 = vmatprep.subr.bf16.mxu0 0
        %2567 = vmatpush1.bf16.msra.mxu0 0
        %2568 = vmatprep.subr.bf16.mxu0 0
        %2569 = vmatpush1.bf16.msra.mxu0 0
        %2570 = vmatprep.subr.bf16.mxu0 0
        %2571 = vmatpush1.bf16.msra.mxu0 0
        %2572 = vmatprep.subr.bf16.mxu0 0
        %2573 = vmatpush1.bf16.msra.mxu0 0
        %2574 = vmatprep.subr.bf16.mxu0 0
        %2575 = vmatpush1.bf16.msra.mxu0 0
        %2576 = vmatprep.subr.bf16.mxu0 0
        %2577 = vmatpush1.bf16.msra.mxu0 0
        %2578 = vmatprep.subr.bf16.mxu0 0
        %2579 = vmatpush1.bf16.msra.mxu0 0
        %2580 = vmatprep.mubr.bf16.mxu0 0
        %2581 = vmatmul.mubr.bf16.gmra.mrb[0].mxu0 %v2498
        %v2582 = vpop.f32.mrb[0].mxu0
        %v2583 = vadd.f32 0.0, %v2582
        %v2584 = vpop.f32.mrb[0].mxu0
        %v2585 = vpop.f32.mrb[0].mxu0
        %v2586 = vpop.f32.mrb[0].mxu0
        %2587 = vdwg.mxu0
        %v2588 = vadd.f32 %v2491, %v2538
        %v2589 = vadd.f32 %v2492, %v2583
        %s2590 = scalar_lea.vmem %s1, 24
        %v2591 = vld [vmem:[%s2590] sm:$0x1]
        %2592 = vrot.lane.b32.xlu0 %v263, 104
        %v2593 = vpop.permute.xlu0 %2592
        %v2595 = vsel %vm266, %v2591, 0
        %v2598 = vsel %vm270, %v2593, 0
        %2600 = vmatprep.subr.bf16.mxu0 0
        %2601 = vmatpush1.bf16.msra.mxu0 %v2598
        %2602 = vmatprep.subr.bf16.mxu0 0
        %2603 = vmatpush1.bf16.msra.mxu0 0
        %2604 = vmatprep.subr.bf16.mxu0 0
        %2605 = vmatpush1.bf16.msra.mxu0 0
        %2606 = vmatprep.subr.bf16.mxu0 0
        %2607 = vmatpush1.bf16.msra.mxu0 0
        %2608 = vmatprep.subr.bf16.mxu0 0
        %2609 = vmatpush1.bf16.msra.mxu0 0
        %2610 = vmatprep.subr.bf16.mxu0 0
        %2611 = vmatpush1.bf16.msra.mxu0 0
        %2612 = vmatprep.subr.bf16.mxu0 0
        %2613 = vmatpush1.bf16.msra.mxu0 0
        %2614 = vmatprep.subr.bf16.mxu0 0
        %2615 = vmatpush1.bf16.msra.mxu0 0
        %2616 = vmatprep.subr.bf16.mxu0 0
        %2617 = vmatpush1.bf16.msra.mxu0 0
        %2618 = vmatprep.subr.bf16.mxu0 0
        %2619 = vmatpush1.bf16.msra.mxu0 0
        %2620 = vmatprep.subr.bf16.mxu0 0
        %2621 = vmatpush1.bf16.msra.mxu0 0
        %2622 = vmatprep.subr.bf16.mxu0 0
        %2623 = vmatpush1.bf16.msra.mxu0 0
        %2624 = vmatprep.subr.bf16.mxu0 0
        %2625 = vmatpush1.bf16.msra.mxu0 0
        %2626 = vmatprep.subr.bf16.mxu0 0
        %2627 = vmatpush1.bf16.msra.mxu0 0
        %2628 = vmatprep.subr.bf16.mxu0 0
        %2629 = vmatpush1.bf16.msra.mxu0 0
        %2630 = vmatprep.subr.bf16.mxu0 0
        %2631 = vmatpush1.bf16.msra.mxu0 0
        %2632 = vmatprep.mubr.bf16.mxu0 0
        %2633 = vmatmul.mubr.bf16.gmra.mrb[0].mxu0 %v2595
        %v2634 = vpop.f32.mrb[0].mxu0
        %v2635 = vadd.f32 0.0, %v2634
        %v2636 = vpop.f32.mrb[0].mxu0
        %v2637 = vpop.f32.mrb[0].mxu0
        %v2638 = vpop.f32.mrb[0].mxu0
        %2639 = vdwg.mxu0
        %2640 = vrot.lane.b32.xlu0 %v321, 104
        %v2641 = vpop.permute.xlu0 %2640
        %v2643 = vsel %vm270, %v2641, 0
        %2645 = vmatprep.subr.bf16.mxu0 0
        %2646 = vmatpush1.bf16.msra.mxu0 %v2643
        %2647 = vmatprep.subr.bf16.mxu0 0
        %2648 = vmatpush1.bf16.msra.mxu0 0
        %2649 = vmatprep.subr.bf16.mxu0 0
        %2650 = vmatpush1.bf16.msra.mxu0 0
        %2651 = vmatprep.subr.bf16.mxu0 0
        %2652 = vmatpush1.bf16.msra.mxu0 0
        %2653 = vmatprep.subr.bf16.mxu0 0
        %2654 = vmatpush1.bf16.msra.mxu0 0
        %2655 = vmatprep.subr.bf16.mxu0 0
        %2656 = vmatpush1.bf16.msra.mxu0 0
        %2657 = vmatprep.subr.bf16.mxu0 0
        %2658 = vmatpush1.bf16.msra.mxu0 0
        %2659 = vmatprep.subr.bf16.mxu0 0
        %2660 = vmatpush1.bf16.msra.mxu0 0
        %2661 = vmatprep.subr.bf16.mxu0 0
        %2662 = vmatpush1.bf16.msra.mxu0 0
        %2663 = vmatprep.subr.bf16.mxu0 0
        %2664 = vmatpush1.bf16.msra.mxu0 0
        %2665 = vmatprep.subr.bf16.mxu0 0
        %2666 = vmatpush1.bf16.msra.mxu0 0
        %2667 = vmatprep.subr.bf16.mxu0 0
        %2668 = vmatpush1.bf16.msra.mxu0 0
        %2669 = vmatprep.subr.bf16.mxu0 0
        %2670 = vmatpush1.bf16.msra.mxu0 0
        %2671 = vmatprep.subr.bf16.mxu0 0
        %2672 = vmatpush1.bf16.msra.mxu0 0
        %2673 = vmatprep.subr.bf16.mxu0 0
        %2674 = vmatpush1.bf16.msra.mxu0 0
        %2675 = vmatprep.subr.bf16.mxu0 0
        %2676 = vmatpush1.bf16.msra.mxu0 0
        %2677 = vmatprep.mubr.bf16.mxu0 0
        %2678 = vmatmul.mubr.bf16.gmra.mrb[0].mxu0 %v2595
        %v2679 = vpop.f32.mrb[0].mxu0
        %v2680 = vadd.f32 0.0, %v2679
        %v2681 = vpop.f32.mrb[0].mxu0
        %v2682 = vpop.f32.mrb[0].mxu0
        %v2683 = vpop.f32.mrb[0].mxu0
        %2684 = vdwg.mxu0
        %v2685 = vadd.f32 %v2588, %v2635
        %v2686 = vadd.f32 %v2589, %v2680
        %s2687 = scalar_lea.vmem %s1, 25
        %v2688 = vld [vmem:[%s2687] sm:$0x1]
        %2689 = vrot.lane.b32.xlu0 %v263, 103
        %v2690 = vpop.permute.xlu0 %2689
        %v2692 = vsel %vm266, %v2688, 0
        %v2695 = vsel %vm270, %v2690, 0
        %2697 = vmatprep.subr.bf16.mxu0 0
        %2698 = vmatpush1.bf16.msra.mxu0 %v2695
        %2699 = vmatprep.subr.bf16.mxu0 0
        %2700 = vmatpush1.bf16.msra.mxu0 0
        %2701 = vmatprep.subr.bf16.mxu0 0
        %2702 = vmatpush1.bf16.msra.mxu0 0
        %2703 = vmatprep.subr.bf16.mxu0 0
        %2704 = vmatpush1.bf16.msra.mxu0 0
        %2705 = vmatprep.subr.bf16.mxu0 0
        %2706 = vmatpush1.bf16.msra.mxu0 0
        %2707 = vmatprep.subr.bf16.mxu0 0
        %2708 = vmatpush1.bf16.msra.mxu0 0
        %2709 = vmatprep.subr.bf16.mxu0 0
        %2710 = vmatpush1.bf16.msra.mxu0 0
        %2711 = vmatprep.subr.bf16.mxu0 0
        %2712 = vmatpush1.bf16.msra.mxu0 0
        %2713 = vmatprep.subr.bf16.mxu0 0
        %2714 = vmatpush1.bf16.msra.mxu0 0
        %2715 = vmatprep.subr.bf16.mxu0 0
        %2716 = vmatpush1.bf16.msra.mxu0 0
        %2717 = vmatprep.subr.bf16.mxu0 0
        %2718 = vmatpush1.bf16.msra.mxu0 0
        %2719 = vmatprep.subr.bf16.mxu0 0
        %2720 = vmatpush1.bf16.msra.mxu0 0
        %2721 = vmatprep.subr.bf16.mxu0 0
        %2722 = vmatpush1.bf16.msra.mxu0 0
        %2723 = vmatprep.subr.bf16.mxu0 0
        %2724 = vmatpush1.bf16.msra.mxu0 0
        %2725 = vmatprep.subr.bf16.mxu0 0
        %2726 = vmatpush1.bf16.msra.mxu0 0
        %2727 = vmatprep.subr.bf16.mxu0 0
        %2728 = vmatpush1.bf16.msra.mxu0 0
        %2729 = vmatprep.mubr.bf16.mxu0 0
        %2730 = vmatmul.mubr.bf16.gmra.mrb[0].mxu0 %v2692
        %v2731 = vpop.f32.mrb[0].mxu0
        %v2732 = vadd.f32 0.0, %v2731
        %v2733 = vpop.f32.mrb[0].mxu0
        %v2734 = vpop.f32.mrb[0].mxu0
        %v2735 = vpop.f32.mrb[0].mxu0
        %2736 = vdwg.mxu0
        %2737 = vrot.lane.b32.xlu0 %v321, 103
        %v2738 = vpop.permute.xlu0 %2737
        %v2740 = vsel %vm270, %v2738, 0
        %2742 = vmatprep.subr.bf16.mxu0 0
        %2743 = vmatpush1.bf16.msra.mxu0 %v2740
        %2744 = vmatprep.subr.bf16.mxu0 0
        %2745 = vmatpush1.bf16.msra.mxu0 0
        %2746 = vmatprep.subr.bf16.mxu0 0
        %2747 = vmatpush1.bf16.msra.mxu0 0
        %2748 = vmatprep.subr.bf16.mxu0 0
        %2749 = vmatpush1.bf16.msra.mxu0 0
        %2750 = vmatprep.subr.bf16.mxu0 0
        %2751 = vmatpush1.bf16.msra.mxu0 0
        %2752 = vmatprep.subr.bf16.mxu0 0
        %2753 = vmatpush1.bf16.msra.mxu0 0
        %2754 = vmatprep.subr.bf16.mxu0 0
        %2755 = vmatpush1.bf16.msra.mxu0 0
        %2756 = vmatprep.subr.bf16.mxu0 0
        %2757 = vmatpush1.bf16.msra.mxu0 0
        %2758 = vmatprep.subr.bf16.mxu0 0
        %2759 = vmatpush1.bf16.msra.mxu0 0
        %2760 = vmatprep.subr.bf16.mxu0 0
        %2761 = vmatpush1.bf16.msra.mxu0 0
        %2762 = vmatprep.subr.bf16.mxu0 0
        %2763 = vmatpush1.bf16.msra.mxu0 0
        %2764 = vmatprep.subr.bf16.mxu0 0
        %2765 = vmatpush1.bf16.msra.mxu0 0
        %2766 = vmatprep.subr.bf16.mxu0 0
        %2767 = vmatpush1.bf16.msra.mxu0 0
        %2768 = vmatprep.subr.bf16.mxu0 0
        %2769 = vmatpush1.bf16.msra.mxu0 0
        %2770 = vmatprep.subr.bf16.mxu0 0
        %2771 = vmatpush1.bf16.msra.mxu0 0
        %2772 = vmatprep.subr.bf16.mxu0 0
        %2773 = vmatpush1.bf16.msra.mxu0 0
        %2774 = vmatprep.mubr.bf16.mxu0 0
        %2775 = vmatmul.mubr.bf16.gmra.mrb[0].mxu0 %v2692
        %v2776 = vpop.f32.mrb[0].mxu0
        %v2777 = vadd.f32 0.0, %v2776
        %v2778 = vpop.f32.mrb[0].mxu0
        %v2779 = vpop.f32.mrb[0].mxu0
        %v2780 = vpop.f32.mrb[0].mxu0
        %2781 = vdwg.mxu0
        %v2782 = vadd.f32 %v2685, %v2732
        %v2783 = vadd.f32 %v2686, %v2777
        %s2784 = scalar_lea.vmem %s1, 26
        %v2785 = vld [vmem:[%s2784] sm:$0x1]
        %2786 = vrot.lane.b32.xlu0 %v263, 102
        %v2787 = vpop.permute.xlu0 %2786
        %v2789 = vsel %vm266, %v2785, 0
        %v2792 = vsel %vm270, %v2787, 0
        %2794 = vmatprep.subr.bf16.mxu0 0
        %2795 = vmatpush1.bf16.msra.mxu0 %v2792
        %2796 = vmatprep.subr.bf16.mxu0 0
        %2797 = vmatpush1.bf16.msra.mxu0 0
        %2798 = vmatprep.subr.bf16.mxu0 0
        %2799 = vmatpush1.bf16.msra.mxu0 0
        %2800 = vmatprep.subr.bf16.mxu0 0
        %2801 = vmatpush1.bf16.msra.mxu0 0
        %2802 = vmatprep.subr.bf16.mxu0 0
        %2803 = vmatpush1.bf16.msra.mxu0 0
        %2804 = vmatprep.subr.bf16.mxu0 0
        %2805 = vmatpush1.bf16.msra.mxu0 0
        %2806 = vmatprep.subr.bf16.mxu0 0
        %2807 = vmatpush1.bf16.msra.mxu0 0
        %2808 = vmatprep.subr.bf16.mxu0 0
        %2809 = vmatpush1.bf16.msra.mxu0 0
        %2810 = vmatprep.subr.bf16.mxu0 0
        %2811 = vmatpush1.bf16.msra.mxu0 0
        %2812 = vmatprep.subr.bf16.mxu0 0
        %2813 = vmatpush1.bf16.msra.mxu0 0
        %2814 = vmatprep.subr.bf16.mxu0 0
        %2815 = vmatpush1.bf16.msra.mxu0 0
        %2816 = vmatprep.subr.bf16.mxu0 0
        %2817 = vmatpush1.bf16.msra.mxu0 0
        %2818 = vmatprep.subr.bf16.mxu0 0
        %2819 = vmatpush1.bf16.msra.mxu0 0
        %2820 = vmatprep.subr.bf16.mxu0 0
        %2821 = vmatpush1.bf16.msra.mxu0 0
        %2822 = vmatprep.subr.bf16.mxu0 0
        %2823 = vmatpush1.bf16.msra.mxu0 0
        %2824 = vmatprep.subr.bf16.mxu0 0
        %2825 = vmatpush1.bf16.msra.mxu0 0
        %2826 = vmatprep.mubr.bf16.mxu0 0
        %2827 = vmatmul.mubr.bf16.gmra.mrb[0].mxu0 %v2789
        %v2828 = vpop.f32.mrb[0].mxu0
        %v2829 = vadd.f32 0.0, %v2828
        %v2830 = vpop.f32.mrb[0].mxu0
        %v2831 = vpop.f32.mrb[0].mxu0
        %v2832 = vpop.f32.mrb[0].mxu0
        %2833 = vdwg.mxu0
        %2834 = vrot.lane.b32.xlu0 %v321, 102
        %v2835 = vpop.permute.xlu0 %2834
        %v2837 = vsel %vm270, %v2835, 0
        %2839 = vmatprep.subr.bf16.mxu0 0
        %2840 = vmatpush1.bf16.msra.mxu0 %v2837
        %2841 = vmatprep.subr.bf16.mxu0 0
        %2842 = vmatpush1.bf16.msra.mxu0 0
        %2843 = vmatprep.subr.bf16.mxu0 0
        %2844 = vmatpush1.bf16.msra.mxu0 0
        %2845 = vmatprep.subr.bf16.mxu0 0
        %2846 = vmatpush1.bf16.msra.mxu0 0
        %2847 = vmatprep.subr.bf16.mxu0 0
        %2848 = vmatpush1.bf16.msra.mxu0 0
        %2849 = vmatprep.subr.bf16.mxu0 0
        %2850 = vmatpush1.bf16.msra.mxu0 0
        %2851 = vmatprep.subr.bf16.mxu0 0
        %2852 = vmatpush1.bf16.msra.mxu0 0
        %2853 = vmatprep.subr.bf16.mxu0 0
        %2854 = vmatpush1.bf16.msra.mxu0 0
        %2855 = vmatprep.subr.bf16.mxu0 0
        %2856 = vmatpush1.bf16.msra.mxu0 0
        %2857 = vmatprep.subr.bf16.mxu0 0
        %2858 = vmatpush1.bf16.msra.mxu0 0
        %2859 = vmatprep.subr.bf16.mxu0 0
        %2860 = vmatpush1.bf16.msra.mxu0 0
        %2861 = vmatprep.subr.bf16.mxu0 0
        %2862 = vmatpush1.bf16.msra.mxu0 0
        %2863 = vmatprep.subr.bf16.mxu0 0
        %2864 = vmatpush1.bf16.msra.mxu0 0
        %2865 = vmatprep.subr.bf16.mxu0 0
        %2866 = vmatpush1.bf16.msra.mxu0 0
        %2867 = vmatprep.subr.bf16.mxu0 0
        %2868 = vmatpush1.bf16.msra.mxu0 0
        %2869 = vmatprep.subr.bf16.mxu0 0
        %2870 = vmatpush1.bf16.msra.mxu0 0
        %2871 = vmatprep.mubr.bf16.mxu0 0
        %2872 = vmatmul.mubr.bf16.gmra.mrb[0].mxu0 %v2789
        %v2873 = vpop.f32.mrb[0].mxu0
        %v2874 = vadd.f32 0.0, %v2873
        %v2875 = vpop.f32.mrb[0].mxu0
        %v2876 = vpop.f32.mrb[0].mxu0
        %v2877 = vpop.f32.mrb[0].mxu0
        %2878 = vdwg.mxu0
        %v2879 = vadd.f32 %v2782, %v2829
        %v2880 = vadd.f32 %v2783, %v2874
        %s2881 = scalar_lea.vmem %s1, 27
        %v2882 = vld [vmem:[%s2881] sm:$0x1]
        %2883 = vrot.lane.b32.xlu0 %v263, 101
        %v2884 = vpop.permute.xlu0 %2883
        %v2886 = vsel %vm266, %v2882, 0
        %v2889 = vsel %vm270, %v2884, 0
        %2891 = vmatprep.subr.bf16.mxu0 0
        %2892 = vmatpush1.bf16.msra.mxu0 %v2889
        %2893 = vmatprep.subr.bf16.mxu0 0
        %2894 = vmatpush1.bf16.msra.mxu0 0
        %2895 = vmatprep.subr.bf16.mxu0 0
        %2896 = vmatpush1.bf16.msra.mxu0 0
        %2897 = vmatprep.subr.bf16.mxu0 0
        %2898 = vmatpush1.bf16.msra.mxu0 0
        %2899 = vmatprep.subr.bf16.mxu0 0
        %2900 = vmatpush1.bf16.msra.mxu0 0
        %2901 = vmatprep.subr.bf16.mxu0 0
        %2902 = vmatpush1.bf16.msra.mxu0 0
        %2903 = vmatprep.subr.bf16.mxu0 0
        %2904 = vmatpush1.bf16.msra.mxu0 0
        %2905 = vmatprep.subr.bf16.mxu0 0
        %2906 = vmatpush1.bf16.msra.mxu0 0
        %2907 = vmatprep.subr.bf16.mxu0 0
        %2908 = vmatpush1.bf16.msra.mxu0 0
        %2909 = vmatprep.subr.bf16.mxu0 0
        %2910 = vmatpush1.bf16.msra.mxu0 0
        %2911 = vmatprep.subr.bf16.mxu0 0
        %2912 = vmatpush1.bf16.msra.mxu0 0
        %2913 = vmatprep.subr.bf16.mxu0 0
        %2914 = vmatpush1.bf16.msra.mxu0 0
        %2915 = vmatprep.subr.bf16.mxu0 0
        %2916 = vmatpush1.bf16.msra.mxu0 0
        %2917 = vmatprep.subr.bf16.mxu0 0
        %2918 = vmatpush1.bf16.msra.mxu0 0
        %2919 = vmatprep.subr.bf16.mxu0 0
        %2920 = vmatpush1.bf16.msra.mxu0 0
        %2921 = vmatprep.subr.bf16.mxu0 0
        %2922 = vmatpush1.bf16.msra.mxu0 0
        %2923 = vmatprep.mubr.bf16.mxu0 0
        %2924 = vmatmul.mubr.bf16.gmra.mrb[0].mxu0 %v2886
        %v2925 = vpop.f32.mrb[0].mxu0
        %v2926 = vadd.f32 0.0, %v2925
        %v2927 = vpop.f32.mrb[0].mxu0
        %v2928 = vpop.f32.mrb[0].mxu0
        %v2929 = vpop.f32.mrb[0].mxu0
        %2930 = vdwg.mxu0
        %2931 = vrot.lane.b32.xlu0 %v321, 101
        %v2932 = vpop.permute.xlu0 %2931
        %v2934 = vsel %vm270, %v2932, 0
        %2936 = vmatprep.subr.bf16.mxu0 0
        %2937 = vmatpush1.bf16.msra.mxu0 %v2934
        %2938 = vmatprep.subr.bf16.mxu0 0
        %2939 = vmatpush1.bf16.msra.mxu0 0
        %2940 = vmatprep.subr.bf16.mxu0 0
        %2941 = vmatpush1.bf16.msra.mxu0 0
        %2942 = vmatprep.subr.bf16.mxu0 0
        %2943 = vmatpush1.bf16.msra.mxu0 0
        %2944 = vmatprep.subr.bf16.mxu0 0
        %2945 = vmatpush1.bf16.msra.mxu0 0
        %2946 = vmatprep.subr.bf16.mxu0 0
        %2947 = vmatpush1.bf16.msra.mxu0 0
        %2948 = vmatprep.subr.bf16.mxu0 0
        %2949 = vmatpush1.bf16.msra.mxu0 0
        %2950 = vmatprep.subr.bf16.mxu0 0
        %2951 = vmatpush1.bf16.msra.mxu0 0
        %2952 = vmatprep.subr.bf16.mxu0 0
        %2953 = vmatpush1.bf16.msra.mxu0 0
        %2954 = vmatprep.subr.bf16.mxu0 0
        %2955 = vmatpush1.bf16.msra.mxu0 0
        %2956 = vmatprep.subr.bf16.mxu0 0
        %2957 = vmatpush1.bf16.msra.mxu0 0
        %2958 = vmatprep.subr.bf16.mxu0 0
        %2959 = vmatpush1.bf16.msra.mxu0 0
        %2960 = vmatprep.subr.bf16.mxu0 0
        %2961 = vmatpush1.bf16.msra.mxu0 0
        %2962 = vmatprep.subr.bf16.mxu0 0
        %2963 = vmatpush1.bf16.msra.mxu0 0
        %2964 = vmatprep.subr.bf16.mxu0 0
        %2965 = vmatpush1.bf16.msra.mxu0 0
        %2966 = vmatprep.subr.bf16.mxu0 0
        %2967 = vmatpush1.bf16.msra.mxu0 0
        %2968 = vmatprep.mubr.bf16.mxu0 0
        %2969 = vmatmul.mubr.bf16.gmra.mrb[0].mxu0 %v2886
        %v2970 = vpop.f32.mrb[0].mxu0
        %v2971 = vadd.f32 0.0, %v2970
        %v2972 = vpop.f32.mrb[0].mxu0
        %v2973 = vpop.f32.mrb[0].mxu0
        %v2974 = vpop.f32.mrb[0].mxu0
        %2975 = vdwg.mxu0
        %v2976 = vadd.f32 %v2879, %v2926
        %v2977 = vadd.f32 %v2880, %v2971
        %s2978 = scalar_lea.vmem %s1, 28
        %v2979 = vld [vmem:[%s2978] sm:$0x1]
        %2980 = vrot.lane.b32.xlu0 %v263, 100
        %v2981 = vpop.permute.xlu0 %2980
        %v2983 = vsel %vm266, %v2979, 0
        %v2986 = vsel %vm270, %v2981, 0
        %2988 = vmatprep.subr.bf16.mxu0 0
        %2989 = vmatpush1.bf16.msra.mxu0 %v2986
        %2990 = vmatprep.subr.bf16.mxu0 0
        %2991 = vmatpush1.bf16.msra.mxu0 0
        %2992 = vmatprep.subr.bf16.mxu0 0
        %2993 = vmatpush1.bf16.msra.mxu0 0
        %2994 = vmatprep.subr.bf16.mxu0 0
        %2995 = vmatpush1.bf16.msra.mxu0 0
        %2996 = vmatprep.subr.bf16.mxu0 0
        %2997 = vmatpush1.bf16.msra.mxu0 0
        %2998 = vmatprep.subr.bf16.mxu0 0
        %2999 = vmatpush1.bf16.msra.mxu0 0
        %3000 = vmatprep.subr.bf16.mxu0 0
        %3001 = vmatpush1.bf16.msra.mxu0 0
        %3002 = vmatprep.subr.bf16.mxu0 0
        %3003 = vmatpush1.bf16.msra.mxu0 0
        %3004 = vmatprep.subr.bf16.mxu0 0
        %3005 = vmatpush1.bf16.msra.mxu0 0
        %3006 = vmatprep.subr.bf16.mxu0 0
        %3007 = vmatpush1.bf16.msra.mxu0 0
        %3008 = vmatprep.subr.bf16.mxu0 0
        %3009 = vmatpush1.bf16.msra.mxu0 0
        %3010 = vmatprep.subr.bf16.mxu0 0
        %3011 = vmatpush1.bf16.msra.mxu0 0
        %3012 = vmatprep.subr.bf16.mxu0 0
        %3013 = vmatpush1.bf16.msra.mxu0 0
        %3014 = vmatprep.subr.bf16.mxu0 0
        %3015 = vmatpush1.bf16.msra.mxu0 0
        %3016 = vmatprep.subr.bf16.mxu0 0
        %3017 = vmatpush1.bf16.msra.mxu0 0
        %3018 = vmatprep.subr.bf16.mxu0 0
        %3019 = vmatpush1.bf16.msra.mxu0 0
        %3020 = vmatprep.mubr.bf16.mxu0 0
        %3021 = vmatmul.mubr.bf16.gmra.mrb[0].mxu0 %v2983
        %v3022 = vpop.f32.mrb[0].mxu0
        %v3023 = vadd.f32 0.0, %v3022
        %v3024 = vpop.f32.mrb[0].mxu0
        %v3025 = vpop.f32.mrb[0].mxu0
        %v3026 = vpop.f32.mrb[0].mxu0
        %3027 = vdwg.mxu0
        %3028 = vrot.lane.b32.xlu0 %v321, 100
        %v3029 = vpop.permute.xlu0 %3028
        %v3031 = vsel %vm270, %v3029, 0
        %3033 = vmatprep.subr.bf16.mxu0 0
        %3034 = vmatpush1.bf16.msra.mxu0 %v3031
        %3035 = vmatprep.subr.bf16.mxu0 0
        %3036 = vmatpush1.bf16.msra.mxu0 0
        %3037 = vmatprep.subr.bf16.mxu0 0
        %3038 = vmatpush1.bf16.msra.mxu0 0
        %3039 = vmatprep.subr.bf16.mxu0 0
        %3040 = vmatpush1.bf16.msra.mxu0 0
        %3041 = vmatprep.subr.bf16.mxu0 0
        %3042 = vmatpush1.bf16.msra.mxu0 0
        %3043 = vmatprep.subr.bf16.mxu0 0
        %3044 = vmatpush1.bf16.msra.mxu0 0
        %3045 = vmatprep.subr.bf16.mxu0 0
        %3046 = vmatpush1.bf16.msra.mxu0 0
        %3047 = vmatprep.subr.bf16.mxu0 0
        %3048 = vmatpush1.bf16.msra.mxu0 0
        %3049 = vmatprep.subr.bf16.mxu0 0
        %3050 = vmatpush1.bf16.msra.mxu0 0
        %3051 = vmatprep.subr.bf16.mxu0 0
        %3052 = vmatpush1.bf16.msra.mxu0 0
        %3053 = vmatprep.subr.bf16.mxu0 0
        %3054 = vmatpush1.bf16.msra.mxu0 0
        %3055 = vmatprep.subr.bf16.mxu0 0
        %3056 = vmatpush1.bf16.msra.mxu0 0
        %3057 = vmatprep.subr.bf16.mxu0 0
        %3058 = vmatpush1.bf16.msra.mxu0 0
        %3059 = vmatprep.subr.bf16.mxu0 0
        %3060 = vmatpush1.bf16.msra.mxu0 0
        %3061 = vmatprep.subr.bf16.mxu0 0
        %3062 = vmatpush1.bf16.msra.mxu0 0
        %3063 = vmatprep.subr.bf16.mxu0 0
        %3064 = vmatpush1.bf16.msra.mxu0 0
        %3065 = vmatprep.mubr.bf16.mxu0 0
        %3066 = vmatmul.mubr.bf16.gmra.mrb[0].mxu0 %v2983
        %v3067 = vpop.f32.mrb[0].mxu0
        %v3068 = vadd.f32 0.0, %v3067
        %v3069 = vpop.f32.mrb[0].mxu0
        %v3070 = vpop.f32.mrb[0].mxu0
        %v3071 = vpop.f32.mrb[0].mxu0
        %3072 = vdwg.mxu0
        %v3073 = vadd.f32 %v2976, %v3023
        %v3074 = vadd.f32 %v2977, %v3068
        %s3075 = scalar_lea.vmem %s1, 29
        %v3076 = vld [vmem:[%s3075] sm:$0x1]
        %3077 = vrot.lane.b32.xlu0 %v263, 99
        %v3078 = vpop.permute.xlu0 %3077
        %v3080 = vsel %vm266, %v3076, 0
        %v3083 = vsel %vm270, %v3078, 0
        %3085 = vmatprep.subr.bf16.mxu0 0
        %3086 = vmatpush1.bf16.msra.mxu0 %v3083
        %3087 = vmatprep.subr.bf16.mxu0 0
        %3088 = vmatpush1.bf16.msra.mxu0 0
        %3089 = vmatprep.subr.bf16.mxu0 0
        %3090 = vmatpush1.bf16.msra.mxu0 0
        %3091 = vmatprep.subr.bf16.mxu0 0
        %3092 = vmatpush1.bf16.msra.mxu0 0
        %3093 = vmatprep.subr.bf16.mxu0 0
        %3094 = vmatpush1.bf16.msra.mxu0 0
        %3095 = vmatprep.subr.bf16.mxu0 0
        %3096 = vmatpush1.bf16.msra.mxu0 0
        %3097 = vmatprep.subr.bf16.mxu0 0
        %3098 = vmatpush1.bf16.msra.mxu0 0
        %3099 = vmatprep.subr.bf16.mxu0 0
        %3100 = vmatpush1.bf16.msra.mxu0 0
        %3101 = vmatprep.subr.bf16.mxu0 0
        %3102 = vmatpush1.bf16.msra.mxu0 0
        %3103 = vmatprep.subr.bf16.mxu0 0
        %3104 = vmatpush1.bf16.msra.mxu0 0
        %3105 = vmatprep.subr.bf16.mxu0 0
        %3106 = vmatpush1.bf16.msra.mxu0 0
        %3107 = vmatprep.subr.bf16.mxu0 0
        %3108 = vmatpush1.bf16.msra.mxu0 0
        %3109 = vmatprep.subr.bf16.mxu0 0
        %3110 = vmatpush1.bf16.msra.mxu0 0
        %3111 = vmatprep.subr.bf16.mxu0 0
        %3112 = vmatpush1.bf16.msra.mxu0 0
        %3113 = vmatprep.subr.bf16.mxu0 0
        %3114 = vmatpush1.bf16.msra.mxu0 0
        %3115 = vmatprep.subr.bf16.mxu0 0
        %3116 = vmatpush1.bf16.msra.mxu0 0
        %3117 = vmatprep.mubr.bf16.mxu0 0
        %3118 = vmatmul.mubr.bf16.gmra.mrb[0].mxu0 %v3080
        %v3119 = vpop.f32.mrb[0].mxu0
        %v3120 = vadd.f32 0.0, %v3119
        %v3121 = vpop.f32.mrb[0].mxu0
        %v3122 = vpop.f32.mrb[0].mxu0
        %v3123 = vpop.f32.mrb[0].mxu0
        %3124 = vdwg.mxu0
        %3125 = vrot.lane.b32.xlu0 %v321, 99
        %v3126 = vpop.permute.xlu0 %3125
        %v3128 = vsel %vm270, %v3126, 0
        %3130 = vmatprep.subr.bf16.mxu0 0
        %3131 = vmatpush1.bf16.msra.mxu0 %v3128
        %3132 = vmatprep.subr.bf16.mxu0 0
        %3133 = vmatpush1.bf16.msra.mxu0 0
        %3134 = vmatprep.subr.bf16.mxu0 0
        %3135 = vmatpush1.bf16.msra.mxu0 0
        %3136 = vmatprep.subr.bf16.mxu0 0
        %3137 = vmatpush1.bf16.msra.mxu0 0
        %3138 = vmatprep.subr.bf16.mxu0 0
        %3139 = vmatpush1.bf16.msra.mxu0 0
        %3140 = vmatprep.subr.bf16.mxu0 0
        %3141 = vmatpush1.bf16.msra.mxu0 0
        %3142 = vmatprep.subr.bf16.mxu0 0
        %3143 = vmatpush1.bf16.msra.mxu0 0
        %3144 = vmatprep.subr.bf16.mxu0 0
        %3145 = vmatpush1.bf16.msra.mxu0 0
        %3146 = vmatprep.subr.bf16.mxu0 0
        %3147 = vmatpush1.bf16.msra.mxu0 0
        %3148 = vmatprep.subr.bf16.mxu0 0
        %3149 = vmatpush1.bf16.msra.mxu0 0
        %3150 = vmatprep.subr.bf16.mxu0 0
        %3151 = vmatpush1.bf16.msra.mxu0 0
        %3152 = vmatprep.subr.bf16.mxu0 0
        %3153 = vmatpush1.bf16.msra.mxu0 0
        %3154 = vmatprep.subr.bf16.mxu0 0
        %3155 = vmatpush1.bf16.msra.mxu0 0
        %3156 = vmatprep.subr.bf16.mxu0 0
        %3157 = vmatpush1.bf16.msra.mxu0 0
        %3158 = vmatprep.subr.bf16.mxu0 0
        %3159 = vmatpush1.bf16.msra.mxu0 0
        %3160 = vmatprep.subr.bf16.mxu0 0
        %3161 = vmatpush1.bf16.msra.mxu0 0
        %3162 = vmatprep.mubr.bf16.mxu0 0
        %3163 = vmatmul.mubr.bf16.gmra.mrb[0].mxu0 %v3080
        %v3164 = vpop.f32.mrb[0].mxu0
        %v3165 = vadd.f32 0.0, %v3164
        %v3166 = vpop.f32.mrb[0].mxu0
        %v3167 = vpop.f32.mrb[0].mxu0
        %v3168 = vpop.f32.mrb[0].mxu0
        %3169 = vdwg.mxu0
        %v3170 = vadd.f32 %v3073, %v3120
        %v3171 = vadd.f32 %v3074, %v3165
        %s3172 = scalar_lea.vmem %s1, 30
        %v3173 = vld [vmem:[%s3172] sm:$0x1]
        %3174 = vrot.lane.b32.xlu0 %v263, 98
        %v3175 = vpop.permute.xlu0 %3174
        %v3177 = vsel %vm266, %v3173, 0
        %v3180 = vsel %vm270, %v3175, 0
        %3182 = vmatprep.subr.bf16.mxu0 0
        %3183 = vmatpush1.bf16.msra.mxu0 %v3180
        %3184 = vmatprep.subr.bf16.mxu0 0
        %3185 = vmatpush1.bf16.msra.mxu0 0
        %3186 = vmatprep.subr.bf16.mxu0 0
        %3187 = vmatpush1.bf16.msra.mxu0 0
        %3188 = vmatprep.subr.bf16.mxu0 0
        %3189 = vmatpush1.bf16.msra.mxu0 0
        %3190 = vmatprep.subr.bf16.mxu0 0
        %3191 = vmatpush1.bf16.msra.mxu0 0
        %3192 = vmatprep.subr.bf16.mxu0 0
        %3193 = vmatpush1.bf16.msra.mxu0 0
        %3194 = vmatprep.subr.bf16.mxu0 0
        %3195 = vmatpush1.bf16.msra.mxu0 0
        %3196 = vmatprep.subr.bf16.mxu0 0
        %3197 = vmatpush1.bf16.msra.mxu0 0
        %3198 = vmatprep.subr.bf16.mxu0 0
        %3199 = vmatpush1.bf16.msra.mxu0 0
        %3200 = vmatprep.subr.bf16.mxu0 0
        %3201 = vmatpush1.bf16.msra.mxu0 0
        %3202 = vmatprep.subr.bf16.mxu0 0
        %3203 = vmatpush1.bf16.msra.mxu0 0
        %3204 = vmatprep.subr.bf16.mxu0 0
        %3205 = vmatpush1.bf16.msra.mxu0 0
        %3206 = vmatprep.subr.bf16.mxu0 0
        %3207 = vmatpush1.bf16.msra.mxu0 0
        %3208 = vmatprep.subr.bf16.mxu0 0
        %3209 = vmatpush1.bf16.msra.mxu0 0
        %3210 = vmatprep.subr.bf16.mxu0 0
        %3211 = vmatpush1.bf16.msra.mxu0 0
        %3212 = vmatprep.subr.bf16.mxu0 0
        %3213 = vmatpush1.bf16.msra.mxu0 0
        %3214 = vmatprep.mubr.bf16.mxu0 0
        %3215 = vmatmul.mubr.bf16.gmra.mrb[0].mxu0 %v3177
        %v3216 = vpop.f32.mrb[0].mxu0
        %v3217 = vadd.f32 0.0, %v3216
        %v3218 = vpop.f32.mrb[0].mxu0
        %v3219 = vpop.f32.mrb[0].mxu0
        %v3220 = vpop.f32.mrb[0].mxu0
        %3221 = vdwg.mxu0
        %3222 = vrot.lane.b32.xlu0 %v321, 98
        %v3223 = vpop.permute.xlu0 %3222
        %v3225 = vsel %vm270, %v3223, 0
        %3227 = vmatprep.subr.bf16.mxu0 0
        %3228 = vmatpush1.bf16.msra.mxu0 %v3225
        %3229 = vmatprep.subr.bf16.mxu0 0
        %3230 = vmatpush1.bf16.msra.mxu0 0
        %3231 = vmatprep.subr.bf16.mxu0 0
        %3232 = vmatpush1.bf16.msra.mxu0 0
        %3233 = vmatprep.subr.bf16.mxu0 0
        %3234 = vmatpush1.bf16.msra.mxu0 0
        %3235 = vmatprep.subr.bf16.mxu0 0
        %3236 = vmatpush1.bf16.msra.mxu0 0
        %3237 = vmatprep.subr.bf16.mxu0 0
        %3238 = vmatpush1.bf16.msra.mxu0 0
        %3239 = vmatprep.subr.bf16.mxu0 0
        %3240 = vmatpush1.bf16.msra.mxu0 0
        %3241 = vmatprep.subr.bf16.mxu0 0
        %3242 = vmatpush1.bf16.msra.mxu0 0
        %3243 = vmatprep.subr.bf16.mxu0 0
        %3244 = vmatpush1.bf16.msra.mxu0 0
        %3245 = vmatprep.subr.bf16.mxu0 0
        %3246 = vmatpush1.bf16.msra.mxu0 0
        %3247 = vmatprep.subr.bf16.mxu0 0
        %3248 = vmatpush1.bf16.msra.mxu0 0
        %3249 = vmatprep.subr.bf16.mxu0 0
        %3250 = vmatpush1.bf16.msra.mxu0 0
        %3251 = vmatprep.subr.bf16.mxu0 0
        %3252 = vmatpush1.bf16.msra.mxu0 0
        %3253 = vmatprep.subr.bf16.mxu0 0
        %3254 = vmatpush1.bf16.msra.mxu0 0
        %3255 = vmatprep.subr.bf16.mxu0 0
        %3256 = vmatpush1.bf16.msra.mxu0 0
        %3257 = vmatprep.subr.bf16.mxu0 0
        %3258 = vmatpush1.bf16.msra.mxu0 0
        %3259 = vmatprep.mubr.bf16.mxu0 0
        %3260 = vmatmul.mubr.bf16.gmra.mrb[0].mxu0 %v3177
        %v3261 = vpop.f32.mrb[0].mxu0
        %v3262 = vadd.f32 0.0, %v3261
        %v3263 = vpop.f32.mrb[0].mxu0
        %v3264 = vpop.f32.mrb[0].mxu0
        %v3265 = vpop.f32.mrb[0].mxu0
        %3266 = vdwg.mxu0
        %v3267 = vadd.f32 %v3170, %v3217
        %v3268 = vadd.f32 %v3171, %v3262
        %s3269 = scalar_lea.vmem %s1, 31
        %v3270 = vld [vmem:[%s3269] sm:$0x1]
        %3271 = vrot.lane.b32.xlu0 %v263, 97
        %v3272 = vpop.permute.xlu0 %3271
        %v3274 = vsel %vm266, %v3270, 0
        %v3277 = vsel %vm270, %v3272, 0
        %3279 = vmatprep.subr.bf16.mxu0 0
        %3280 = vmatpush1.bf16.msra.mxu0 %v3277
        %3281 = vmatprep.subr.bf16.mxu0 0
        %3282 = vmatpush1.bf16.msra.mxu0 0
        %3283 = vmatprep.subr.bf16.mxu0 0
        %3284 = vmatpush1.bf16.msra.mxu0 0
        %3285 = vmatprep.subr.bf16.mxu0 0
        %3286 = vmatpush1.bf16.msra.mxu0 0
        %3287 = vmatprep.subr.bf16.mxu0 0
        %3288 = vmatpush1.bf16.msra.mxu0 0
        %3289 = vmatprep.subr.bf16.mxu0 0
        %3290 = vmatpush1.bf16.msra.mxu0 0
        %3291 = vmatprep.subr.bf16.mxu0 0
        %3292 = vmatpush1.bf16.msra.mxu0 0
        %3293 = vmatprep.subr.bf16.mxu0 0
        %3294 = vmatpush1.bf16.msra.mxu0 0
        %3295 = vmatprep.subr.bf16.mxu0 0
        %3296 = vmatpush1.bf16.msra.mxu0 0
        %3297 = vmatprep.subr.bf16.mxu0 0
        %3298 = vmatpush1.bf16.msra.mxu0 0
        %3299 = vmatprep.subr.bf16.mxu0 0
        %3300 = vmatpush1.bf16.msra.mxu0 0
        %3301 = vmatprep.subr.bf16.mxu0 0
        %3302 = vmatpush1.bf16.msra.mxu0 0
        %3303 = vmatprep.subr.bf16.mxu0 0
        %3304 = vmatpush1.bf16.msra.mxu0 0
        %3305 = vmatprep.subr.bf16.mxu0 0
        %3306 = vmatpush1.bf16.msra.mxu0 0
        %3307 = vmatprep.subr.bf16.mxu0 0
        %3308 = vmatpush1.bf16.msra.mxu0 0
        %3309 = vmatprep.subr.bf16.mxu0 0
        %3310 = vmatpush1.bf16.msra.mxu0 0
        %3311 = vmatprep.mubr.bf16.mxu0 0
        %3312 = vmatmul.mubr.bf16.gmra.mrb[0].mxu0 %v3274
        %v3313 = vpop.f32.mrb[0].mxu0
        %v3314 = vadd.f32 0.0, %v3313
        %v3315 = vpop.f32.mrb[0].mxu0
        %v3316 = vpop.f32.mrb[0].mxu0
        %v3317 = vpop.f32.mrb[0].mxu0
        %3318 = vdwg.mxu0
        %3319 = vrot.lane.b32.xlu0 %v321, 97
        %v3320 = vpop.permute.xlu0 %3319
        %v3322 = vsel %vm270, %v3320, 0
        %3324 = vmatprep.subr.bf16.mxu0 0
        %3325 = vmatpush1.bf16.msra.mxu0 %v3322
        %3326 = vmatprep.subr.bf16.mxu0 0
        %3327 = vmatpush1.bf16.msra.mxu0 0
        %3328 = vmatprep.subr.bf16.mxu0 0
        %3329 = vmatpush1.bf16.msra.mxu0 0
        %3330 = vmatprep.subr.bf16.mxu0 0
        %3331 = vmatpush1.bf16.msra.mxu0 0
        %3332 = vmatprep.subr.bf16.mxu0 0
        %3333 = vmatpush1.bf16.msra.mxu0 0
        %3334 = vmatprep.subr.bf16.mxu0 0
        %3335 = vmatpush1.bf16.msra.mxu0 0
        %3336 = vmatprep.subr.bf16.mxu0 0
        %3337 = vmatpush1.bf16.msra.mxu0 0
        %3338 = vmatprep.subr.bf16.mxu0 0
        %3339 = vmatpush1.bf16.msra.mxu0 0
        %3340 = vmatprep.subr.bf16.mxu0 0
        %3341 = vmatpush1.bf16.msra.mxu0 0
        %3342 = vmatprep.subr.bf16.mxu0 0
        %3343 = vmatpush1.bf16.msra.mxu0 0
        %3344 = vmatprep.subr.bf16.mxu0 0
        %3345 = vmatpush1.bf16.msra.mxu0 0
        %3346 = vmatprep.subr.bf16.mxu0 0
        %3347 = vmatpush1.bf16.msra.mxu0 0
        %3348 = vmatprep.subr.bf16.mxu0 0
        %3349 = vmatpush1.bf16.msra.mxu0 0
        %3350 = vmatprep.subr.bf16.mxu0 0
        %3351 = vmatpush1.bf16.msra.mxu0 0
        %3352 = vmatprep.subr.bf16.mxu0 0
        %3353 = vmatpush1.bf16.msra.mxu0 0
        %3354 = vmatprep.subr.bf16.mxu0 0
        %3355 = vmatpush1.bf16.msra.mxu0 0
        %3356 = vmatprep.mubr.bf16.mxu0 0
        %3357 = vmatmul.mubr.bf16.gmra.mrb[0].mxu0 %v3274
        %v3358 = vpop.f32.mrb[0].mxu0
        %v3359 = vadd.f32 0.0, %v3358
        %v3360 = vpop.f32.mrb[0].mxu0
        %v3361 = vpop.f32.mrb[0].mxu0
        %v3362 = vpop.f32.mrb[0].mxu0
        %3363 = vdwg.mxu0
        %v3364 = vadd.f32 %v3267, %v3314
        %v3365 = vadd.f32 %v3268, %v3359
        %s3366 = scalar_lea.vmem %s1, 32
        %v3367 = vld [vmem:[%s3366] sm:$0x1]
        %3368 = vrot.lane.b32.xlu0 %v263, 96
        %v3369 = vpop.permute.xlu0 %3368
        %v3371 = vsel %vm266, %v3367, 0
        %v3374 = vsel %vm270, %v3369, 0
        %3376 = vmatprep.subr.bf16.mxu0 0
        %3377 = vmatpush1.bf16.msra.mxu0 %v3374
        %3378 = vmatprep.subr.bf16.mxu0 0
        %3379 = vmatpush1.bf16.msra.mxu0 0
        %3380 = vmatprep.subr.bf16.mxu0 0
        %3381 = vmatpush1.bf16.msra.mxu0 0
        %3382 = vmatprep.subr.bf16.mxu0 0
        %3383 = vmatpush1.bf16.msra.mxu0 0
        %3384 = vmatprep.subr.bf16.mxu0 0
        %3385 = vmatpush1.bf16.msra.mxu0 0
        %3386 = vmatprep.subr.bf16.mxu0 0
        %3387 = vmatpush1.bf16.msra.mxu0 0
        %3388 = vmatprep.subr.bf16.mxu0 0
        %3389 = vmatpush1.bf16.msra.mxu0 0
        %3390 = vmatprep.subr.bf16.mxu0 0
        %3391 = vmatpush1.bf16.msra.mxu0 0
        %3392 = vmatprep.subr.bf16.mxu0 0
        %3393 = vmatpush1.bf16.msra.mxu0 0
        %3394 = vmatprep.subr.bf16.mxu0 0
        %3395 = vmatpush1.bf16.msra.mxu0 0
        %3396 = vmatprep.subr.bf16.mxu0 0
        %3397 = vmatpush1.bf16.msra.mxu0 0
        %3398 = vmatprep.subr.bf16.mxu0 0
        %3399 = vmatpush1.bf16.msra.mxu0 0
        %3400 = vmatprep.subr.bf16.mxu0 0
        %3401 = vmatpush1.bf16.msra.mxu0 0
        %3402 = vmatprep.subr.bf16.mxu0 0
        %3403 = vmatpush1.bf16.msra.mxu0 0
        %3404 = vmatprep.subr.bf16.mxu0 0
        %3405 = vmatpush1.bf16.msra.mxu0 0
        %3406 = vmatprep.subr.bf16.mxu0 0
        %3407 = vmatpush1.bf16.msra.mxu0 0
        %3408 = vmatprep.mubr.bf16.mxu0 0
        %3409 = vmatmul.mubr.bf16.gmra.mrb[0].mxu0 %v3371
        %v3410 = vpop.f32.mrb[0].mxu0
        %v3411 = vadd.f32 0.0, %v3410
        %v3412 = vpop.f32.mrb[0].mxu0
        %v3413 = vpop.f32.mrb[0].mxu0
        %v3414 = vpop.f32.mrb[0].mxu0
        %3415 = vdwg.mxu0
        %3416 = vrot.lane.b32.xlu0 %v321, 96
        %v3417 = vpop.permute.xlu0 %3416
        %v3419 = vsel %vm270, %v3417, 0
        %3421 = vmatprep.subr.bf16.mxu0 0
        %3422 = vmatpush1.bf16.msra.mxu0 %v3419
        %3423 = vmatprep.subr.bf16.mxu0 0
        %3424 = vmatpush1.bf16.msra.mxu0 0
        %3425 = vmatprep.subr.bf16.mxu0 0
        %3426 = vmatpush1.bf16.msra.mxu0 0
        %3427 = vmatprep.subr.bf16.mxu0 0
        %3428 = vmatpush1.bf16.msra.mxu0 0
        %3429 = vmatprep.subr.bf16.mxu0 0
        %3430 = vmatpush1.bf16.msra.mxu0 0
        %3431 = vmatprep.subr.bf16.mxu0 0
        %3432 = vmatpush1.bf16.msra.mxu0 0
        %3433 = vmatprep.subr.bf16.mxu0 0
        %3434 = vmatpush1.bf16.msra.mxu0 0
        %3435 = vmatprep.subr.bf16.mxu0 0
        %3436 = vmatpush1.bf16.msra.mxu0 0
        %3437 = vmatprep.subr.bf16.mxu0 0
        %3438 = vmatpush1.bf16.msra.mxu0 0
        %3439 = vmatprep.subr.bf16.mxu0 0
        %3440 = vmatpush1.bf16.msra.mxu0 0
        %3441 = vmatprep.subr.bf16.mxu0 0
        %3442 = vmatpush1.bf16.msra.mxu0 0
        %3443 = vmatprep.subr.bf16.mxu0 0
        %3444 = vmatpush1.bf16.msra.mxu0 0
        %3445 = vmatprep.subr.bf16.mxu0 0
        %3446 = vmatpush1.bf16.msra.mxu0 0
        %3447 = vmatprep.subr.bf16.mxu0 0
        %3448 = vmatpush1.bf16.msra.mxu0 0
        %3449 = vmatprep.subr.bf16.mxu0 0
        %3450 = vmatpush1.bf16.msra.mxu0 0
        %3451 = vmatprep.subr.bf16.mxu0 0
        %3452 = vmatpush1.bf16.msra.mxu0 0
        %3453 = vmatprep.mubr.bf16.mxu0 0
        %3454 = vmatmul.mubr.bf16.gmra.mrb[0].mxu0 %v3371
        %v3455 = vpop.f32.mrb[0].mxu0
        %v3456 = vadd.f32 0.0, %v3455
        %v3457 = vpop.f32.mrb[0].mxu0
        %v3458 = vpop.f32.mrb[0].mxu0
        %v3459 = vpop.f32.mrb[0].mxu0
        %3460 = vdwg.mxu0
        %v3461 = vadd.f32 %v3364, %v3411
        %v3462 = vadd.f32 %v3365, %v3456
        %s3463 = scalar_lea.vmem %s1, 33
        %v3464 = vld [vmem:[%s3463] sm:$0x1]
        %3465 = vrot.lane.b32.xlu0 %v263, 95
        %v3466 = vpop.permute.xlu0 %3465
        %v3468 = vsel %vm266, %v3464, 0
        %v3471 = vsel %vm270, %v3466, 0
        %3473 = vmatprep.subr.bf16.mxu0 0
        %3474 = vmatpush1.bf16.msra.mxu0 %v3471
        %3475 = vmatprep.subr.bf16.mxu0 0
        %3476 = vmatpush1.bf16.msra.mxu0 0
        %3477 = vmatprep.subr.bf16.mxu0 0
        %3478 = vmatpush1.bf16.msra.mxu0 0
        %3479 = vmatprep.subr.bf16.mxu0 0
        %3480 = vmatpush1.bf16.msra.mxu0 0
        %3481 = vmatprep.subr.bf16.mxu0 0
        %3482 = vmatpush1.bf16.msra.mxu0 0
        %3483 = vmatprep.subr.bf16.mxu0 0
        %3484 = vmatpush1.bf16.msra.mxu0 0
        %3485 = vmatprep.subr.bf16.mxu0 0
        %3486 = vmatpush1.bf16.msra.mxu0 0
        %3487 = vmatprep.subr.bf16.mxu0 0
        %3488 = vmatpush1.bf16.msra.mxu0 0
        %3489 = vmatprep.subr.bf16.mxu0 0
        %3490 = vmatpush1.bf16.msra.mxu0 0
        %3491 = vmatprep.subr.bf16.mxu0 0
        %3492 = vmatpush1.bf16.msra.mxu0 0
        %3493 = vmatprep.subr.bf16.mxu0 0
        %3494 = vmatpush1.bf16.msra.mxu0 0
        %3495 = vmatprep.subr.bf16.mxu0 0
        %3496 = vmatpush1.bf16.msra.mxu0 0
        %3497 = vmatprep.subr.bf16.mxu0 0
        %3498 = vmatpush1.bf16.msra.mxu0 0
        %3499 = vmatprep.subr.bf16.mxu0 0
        %3500 = vmatpush1.bf16.msra.mxu0 0
        %3501 = vmatprep.subr.bf16.mxu0 0
        %3502 = vmatpush1.bf16.msra.mxu0 0
        %3503 = vmatprep.subr.bf16.mxu0 0
        %3504 = vmatpush1.bf16.msra.mxu0 0
        %3505 = vmatprep.mubr.bf16.mxu0 0
        %3506 = vmatmul.mubr.bf16.gmra.mrb[0].mxu0 %v3468
        %v3507 = vpop.f32.mrb[0].mxu0
        %v3508 = vadd.f32 0.0, %v3507
        %v3509 = vpop.f32.mrb[0].mxu0
        %v3510 = vpop.f32.mrb[0].mxu0
        %v3511 = vpop.f32.mrb[0].mxu0
        %3512 = vdwg.mxu0
        %3513 = vrot.lane.b32.xlu0 %v321, 95
        %v3514 = vpop.permute.xlu0 %3513
        %v3516 = vsel %vm270, %v3514, 0
        %3518 = vmatprep.subr.bf16.mxu0 0
        %3519 = vmatpush1.bf16.msra.mxu0 %v3516
        %3520 = vmatprep.subr.bf16.mxu0 0
        %3521 = vmatpush1.bf16.msra.mxu0 0
        %3522 = vmatprep.subr.bf16.mxu0 0
        %3523 = vmatpush1.bf16.msra.mxu0 0
        %3524 = vmatprep.subr.bf16.mxu0 0
        %3525 = vmatpush1.bf16.msra.mxu0 0
        %3526 = vmatprep.subr.bf16.mxu0 0
        %3527 = vmatpush1.bf16.msra.mxu0 0
        %3528 = vmatprep.subr.bf16.mxu0 0
        %3529 = vmatpush1.bf16.msra.mxu0 0
        %3530 = vmatprep.subr.bf16.mxu0 0
        %3531 = vmatpush1.bf16.msra.mxu0 0
        %3532 = vmatprep.subr.bf16.mxu0 0
        %3533 = vmatpush1.bf16.msra.mxu0 0
        %3534 = vmatprep.subr.bf16.mxu0 0
        %3535 = vmatpush1.bf16.msra.mxu0 0
        %3536 = vmatprep.subr.bf16.mxu0 0
        %3537 = vmatpush1.bf16.msra.mxu0 0
        %3538 = vmatprep.subr.bf16.mxu0 0
        %3539 = vmatpush1.bf16.msra.mxu0 0
        %3540 = vmatprep.subr.bf16.mxu0 0
        %3541 = vmatpush1.bf16.msra.mxu0 0
        %3542 = vmatprep.subr.bf16.mxu0 0
        %3543 = vmatpush1.bf16.msra.mxu0 0
        %3544 = vmatprep.subr.bf16.mxu0 0
        %3545 = vmatpush1.bf16.msra.mxu0 0
        %3546 = vmatprep.subr.bf16.mxu0 0
        %3547 = vmatpush1.bf16.msra.mxu0 0
        %3548 = vmatprep.subr.bf16.mxu0 0
        %3549 = vmatpush1.bf16.msra.mxu0 0
        %3550 = vmatprep.mubr.bf16.mxu0 0
        %3551 = vmatmul.mubr.bf16.gmra.mrb[0].mxu0 %v3468
        %v3552 = vpop.f32.mrb[0].mxu0
        %v3553 = vadd.f32 0.0, %v3552
        %v3554 = vpop.f32.mrb[0].mxu0
        %v3555 = vpop.f32.mrb[0].mxu0
        %v3556 = vpop.f32.mrb[0].mxu0
        %3557 = vdwg.mxu0
        %v3558 = vadd.f32 %v3461, %v3508
        %v3559 = vadd.f32 %v3462, %v3553
        %s3560 = scalar_lea.vmem %s1, 34
        %v3561 = vld [vmem:[%s3560] sm:$0x1]
        %3562 = vrot.lane.b32.xlu0 %v263, 94
        %v3563 = vpop.permute.xlu0 %3562
        %v3565 = vsel %vm266, %v3561, 0
        %v3568 = vsel %vm270, %v3563, 0
        %3570 = vmatprep.subr.bf16.mxu0 0
        %3571 = vmatpush1.bf16.msra.mxu0 %v3568
        %3572 = vmatprep.subr.bf16.mxu0 0
        %3573 = vmatpush1.bf16.msra.mxu0 0
        %3574 = vmatprep.subr.bf16.mxu0 0
        %3575 = vmatpush1.bf16.msra.mxu0 0
        %3576 = vmatprep.subr.bf16.mxu0 0
        %3577 = vmatpush1.bf16.msra.mxu0 0
        %3578 = vmatprep.subr.bf16.mxu0 0
        %3579 = vmatpush1.bf16.msra.mxu0 0
        %3580 = vmatprep.subr.bf16.mxu0 0
        %3581 = vmatpush1.bf16.msra.mxu0 0
        %3582 = vmatprep.subr.bf16.mxu0 0
        %3583 = vmatpush1.bf16.msra.mxu0 0
        %3584 = vmatprep.subr.bf16.mxu0 0
        %3585 = vmatpush1.bf16.msra.mxu0 0
        %3586 = vmatprep.subr.bf16.mxu0 0
        %3587 = vmatpush1.bf16.msra.mxu0 0
        %3588 = vmatprep.subr.bf16.mxu0 0
        %3589 = vmatpush1.bf16.msra.mxu0 0
        %3590 = vmatprep.subr.bf16.mxu0 0
        %3591 = vmatpush1.bf16.msra.mxu0 0
        %3592 = vmatprep.subr.bf16.mxu0 0
        %3593 = vmatpush1.bf16.msra.mxu0 0
        %3594 = vmatprep.subr.bf16.mxu0 0
        %3595 = vmatpush1.bf16.msra.mxu0 0
        %3596 = vmatprep.subr.bf16.mxu0 0
        %3597 = vmatpush1.bf16.msra.mxu0 0
        %3598 = vmatprep.subr.bf16.mxu0 0
        %3599 = vmatpush1.bf16.msra.mxu0 0
        %3600 = vmatprep.subr.bf16.mxu0 0
        %3601 = vmatpush1.bf16.msra.mxu0 0
        %3602 = vmatprep.mubr.bf16.mxu0 0
        %3603 = vmatmul.mubr.bf16.gmra.mrb[0].mxu0 %v3565
        %v3604 = vpop.f32.mrb[0].mxu0
        %v3605 = vadd.f32 0.0, %v3604
        %v3606 = vpop.f32.mrb[0].mxu0
        %v3607 = vpop.f32.mrb[0].mxu0
        %v3608 = vpop.f32.mrb[0].mxu0
        %3609 = vdwg.mxu0
        %3610 = vrot.lane.b32.xlu0 %v321, 94
        %v3611 = vpop.permute.xlu0 %3610
        %v3613 = vsel %vm270, %v3611, 0
        %3615 = vmatprep.subr.bf16.mxu0 0
        %3616 = vmatpush1.bf16.msra.mxu0 %v3613
        %3617 = vmatprep.subr.bf16.mxu0 0
        %3618 = vmatpush1.bf16.msra.mxu0 0
        %3619 = vmatprep.subr.bf16.mxu0 0
        %3620 = vmatpush1.bf16.msra.mxu0 0
        %3621 = vmatprep.subr.bf16.mxu0 0
        %3622 = vmatpush1.bf16.msra.mxu0 0
        %3623 = vmatprep.subr.bf16.mxu0 0
        %3624 = vmatpush1.bf16.msra.mxu0 0
        %3625 = vmatprep.subr.bf16.mxu0 0
        %3626 = vmatpush1.bf16.msra.mxu0 0
        %3627 = vmatprep.subr.bf16.mxu0 0
        %3628 = vmatpush1.bf16.msra.mxu0 0
        %3629 = vmatprep.subr.bf16.mxu0 0
        %3630 = vmatpush1.bf16.msra.mxu0 0
        %3631 = vmatprep.subr.bf16.mxu0 0
        %3632 = vmatpush1.bf16.msra.mxu0 0
        %3633 = vmatprep.subr.bf16.mxu0 0
        %3634 = vmatpush1.bf16.msra.mxu0 0
        %3635 = vmatprep.subr.bf16.mxu0 0
        %3636 = vmatpush1.bf16.msra.mxu0 0
        %3637 = vmatprep.subr.bf16.mxu0 0
        %3638 = vmatpush1.bf16.msra.mxu0 0
        %3639 = vmatprep.subr.bf16.mxu0 0
        %3640 = vmatpush1.bf16.msra.mxu0 0
        %3641 = vmatprep.subr.bf16.mxu0 0
        %3642 = vmatpush1.bf16.msra.mxu0 0
        %3643 = vmatprep.subr.bf16.mxu0 0
        %3644 = vmatpush1.bf16.msra.mxu0 0
        %3645 = vmatprep.subr.bf16.mxu0 0
        %3646 = vmatpush1.bf16.msra.mxu0 0
        %3647 = vmatprep.mubr.bf16.mxu0 0
        %3648 = vmatmul.mubr.bf16.gmra.mrb[0].mxu0 %v3565
        %v3649 = vpop.f32.mrb[0].mxu0
        %v3650 = vadd.f32 0.0, %v3649
        %v3651 = vpop.f32.mrb[0].mxu0
        %v3652 = vpop.f32.mrb[0].mxu0
        %v3653 = vpop.f32.mrb[0].mxu0
        %3654 = vdwg.mxu0
        %v3655 = vadd.f32 %v3558, %v3605
        %v3656 = vadd.f32 %v3559, %v3650
        %s3657 = scalar_lea.vmem %s1, 35
        %v3658 = vld [vmem:[%s3657] sm:$0x1]
        %3659 = vrot.lane.b32.xlu0 %v263, 93
        %v3660 = vpop.permute.xlu0 %3659
        %v3662 = vsel %vm266, %v3658, 0
        %v3665 = vsel %vm270, %v3660, 0
        %3667 = vmatprep.subr.bf16.mxu0 0
        %3668 = vmatpush1.bf16.msra.mxu0 %v3665
        %3669 = vmatprep.subr.bf16.mxu0 0
        %3670 = vmatpush1.bf16.msra.mxu0 0
        %3671 = vmatprep.subr.bf16.mxu0 0
        %3672 = vmatpush1.bf16.msra.mxu0 0
        %3673 = vmatprep.subr.bf16.mxu0 0
        %3674 = vmatpush1.bf16.msra.mxu0 0
        %3675 = vmatprep.subr.bf16.mxu0 0
        %3676 = vmatpush1.bf16.msra.mxu0 0
        %3677 = vmatprep.subr.bf16.mxu0 0
        %3678 = vmatpush1.bf16.msra.mxu0 0
        %3679 = vmatprep.subr.bf16.mxu0 0
        %3680 = vmatpush1.bf16.msra.mxu0 0
        %3681 = vmatprep.subr.bf16.mxu0 0
        %3682 = vmatpush1.bf16.msra.mxu0 0
        %3683 = vmatprep.subr.bf16.mxu0 0
        %3684 = vmatpush1.bf16.msra.mxu0 0
        %3685 = vmatprep.subr.bf16.mxu0 0
        %3686 = vmatpush1.bf16.msra.mxu0 0
        %3687 = vmatprep.subr.bf16.mxu0 0
        %3688 = vmatpush1.bf16.msra.mxu0 0
        %3689 = vmatprep.subr.bf16.mxu0 0
        %3690 = vmatpush1.bf16.msra.mxu0 0
        %3691 = vmatprep.subr.bf16.mxu0 0
        %3692 = vmatpush1.bf16.msra.mxu0 0
        %3693 = vmatprep.subr.bf16.mxu0 0
        %3694 = vmatpush1.bf16.msra.mxu0 0
        %3695 = vmatprep.subr.bf16.mxu0 0
        %3696 = vmatpush1.bf16.msra.mxu0 0
        %3697 = vmatprep.subr.bf16.mxu0 0
        %3698 = vmatpush1.bf16.msra.mxu0 0
        %3699 = vmatprep.mubr.bf16.mxu0 0
        %3700 = vmatmul.mubr.bf16.gmra.mrb[0].mxu0 %v3662
        %v3701 = vpop.f32.mrb[0].mxu0
        %v3702 = vadd.f32 0.0, %v3701
        %v3703 = vpop.f32.mrb[0].mxu0
        %v3704 = vpop.f32.mrb[0].mxu0
        %v3705 = vpop.f32.mrb[0].mxu0
        %3706 = vdwg.mxu0
        %3707 = vrot.lane.b32.xlu0 %v321, 93
        %v3708 = vpop.permute.xlu0 %3707
        %v3710 = vsel %vm270, %v3708, 0
        %3712 = vmatprep.subr.bf16.mxu0 0
        %3713 = vmatpush1.bf16.msra.mxu0 %v3710
        %3714 = vmatprep.subr.bf16.mxu0 0
        %3715 = vmatpush1.bf16.msra.mxu0 0
        %3716 = vmatprep.subr.bf16.mxu0 0
        %3717 = vmatpush1.bf16.msra.mxu0 0
        %3718 = vmatprep.subr.bf16.mxu0 0
        %3719 = vmatpush1.bf16.msra.mxu0 0
        %3720 = vmatprep.subr.bf16.mxu0 0
        %3721 = vmatpush1.bf16.msra.mxu0 0
        %3722 = vmatprep.subr.bf16.mxu0 0
        %3723 = vmatpush1.bf16.msra.mxu0 0
        %3724 = vmatprep.subr.bf16.mxu0 0
        %3725 = vmatpush1.bf16.msra.mxu0 0
        %3726 = vmatprep.subr.bf16.mxu0 0
        %3727 = vmatpush1.bf16.msra.mxu0 0
        %3728 = vmatprep.subr.bf16.mxu0 0
        %3729 = vmatpush1.bf16.msra.mxu0 0
        %3730 = vmatprep.subr.bf16.mxu0 0
        %3731 = vmatpush1.bf16.msra.mxu0 0
        %3732 = vmatprep.subr.bf16.mxu0 0
        %3733 = vmatpush1.bf16.msra.mxu0 0
        %3734 = vmatprep.subr.bf16.mxu0 0
        %3735 = vmatpush1.bf16.msra.mxu0 0
        %3736 = vmatprep.subr.bf16.mxu0 0
        %3737 = vmatpush1.bf16.msra.mxu0 0
        %3738 = vmatprep.subr.bf16.mxu0 0
        %3739 = vmatpush1.bf16.msra.mxu0 0
        %3740 = vmatprep.subr.bf16.mxu0 0
        %3741 = vmatpush1.bf16.msra.mxu0 0
        %3742 = vmatprep.subr.bf16.mxu0 0
        %3743 = vmatpush1.bf16.msra.mxu0 0
        %3744 = vmatprep.mubr.bf16.mxu0 0
        %3745 = vmatmul.mubr.bf16.gmra.mrb[0].mxu0 %v3662
        %v3746 = vpop.f32.mrb[0].mxu0
        %v3747 = vadd.f32 0.0, %v3746
        %v3748 = vpop.f32.mrb[0].mxu0
        %v3749 = vpop.f32.mrb[0].mxu0
        %v3750 = vpop.f32.mrb[0].mxu0
        %3751 = vdwg.mxu0
        %v3752 = vadd.f32 %v3655, %v3702
        %v3753 = vadd.f32 %v3656, %v3747
        %s3754 = scalar_lea.vmem %s1, 36
        %v3755 = vld [vmem:[%s3754] sm:$0x1]
        %3756 = vrot.lane.b32.xlu0 %v263, 92
        %v3757 = vpop.permute.xlu0 %3756
        %v3759 = vsel %vm266, %v3755, 0
        %v3762 = vsel %vm270, %v3757, 0
        %3764 = vmatprep.subr.bf16.mxu0 0
        %3765 = vmatpush1.bf16.msra.mxu0 %v3762
        %3766 = vmatprep.subr.bf16.mxu0 0
        %3767 = vmatpush1.bf16.msra.mxu0 0
        %3768 = vmatprep.subr.bf16.mxu0 0
        %3769 = vmatpush1.bf16.msra.mxu0 0
        %3770 = vmatprep.subr.bf16.mxu0 0
        %3771 = vmatpush1.bf16.msra.mxu0 0
        %3772 = vmatprep.subr.bf16.mxu0 0
        %3773 = vmatpush1.bf16.msra.mxu0 0
        %3774 = vmatprep.subr.bf16.mxu0 0
        %3775 = vmatpush1.bf16.msra.mxu0 0
        %3776 = vmatprep.subr.bf16.mxu0 0
        %3777 = vmatpush1.bf16.msra.mxu0 0
        %3778 = vmatprep.subr.bf16.mxu0 0
        %3779 = vmatpush1.bf16.msra.mxu0 0
        %3780 = vmatprep.subr.bf16.mxu0 0
        %3781 = vmatpush1.bf16.msra.mxu0 0
        %3782 = vmatprep.subr.bf16.mxu0 0
        %3783 = vmatpush1.bf16.msra.mxu0 0
        %3784 = vmatprep.subr.bf16.mxu0 0
        %3785 = vmatpush1.bf16.msra.mxu0 0
        %3786 = vmatprep.subr.bf16.mxu0 0
        %3787 = vmatpush1.bf16.msra.mxu0 0
        %3788 = vmatprep.subr.bf16.mxu0 0
        %3789 = vmatpush1.bf16.msra.mxu0 0
        %3790 = vmatprep.subr.bf16.mxu0 0
        %3791 = vmatpush1.bf16.msra.mxu0 0
        %3792 = vmatprep.subr.bf16.mxu0 0
        %3793 = vmatpush1.bf16.msra.mxu0 0
        %3794 = vmatprep.subr.bf16.mxu0 0
        %3795 = vmatpush1.bf16.msra.mxu0 0
        %3796 = vmatprep.mubr.bf16.mxu0 0
        %3797 = vmatmul.mubr.bf16.gmra.mrb[0].mxu0 %v3759
        %v3798 = vpop.f32.mrb[0].mxu0
        %v3799 = vadd.f32 0.0, %v3798
        %v3800 = vpop.f32.mrb[0].mxu0
        %v3801 = vpop.f32.mrb[0].mxu0
        %v3802 = vpop.f32.mrb[0].mxu0
        %3803 = vdwg.mxu0
        %3804 = vrot.lane.b32.xlu0 %v321, 92
        %v3805 = vpop.permute.xlu0 %3804
        %v3807 = vsel %vm270, %v3805, 0
        %3809 = vmatprep.subr.bf16.mxu0 0
        %3810 = vmatpush1.bf16.msra.mxu0 %v3807
        %3811 = vmatprep.subr.bf16.mxu0 0
        %3812 = vmatpush1.bf16.msra.mxu0 0
        %3813 = vmatprep.subr.bf16.mxu0 0
        %3814 = vmatpush1.bf16.msra.mxu0 0
        %3815 = vmatprep.subr.bf16.mxu0 0
        %3816 = vmatpush1.bf16.msra.mxu0 0
        %3817 = vmatprep.subr.bf16.mxu0 0
        %3818 = vmatpush1.bf16.msra.mxu0 0
        %3819 = vmatprep.subr.bf16.mxu0 0
        %3820 = vmatpush1.bf16.msra.mxu0 0
        %3821 = vmatprep.subr.bf16.mxu0 0
        %3822 = vmatpush1.bf16.msra.mxu0 0
        %3823 = vmatprep.subr.bf16.mxu0 0
        %3824 = vmatpush1.bf16.msra.mxu0 0
        %3825 = vmatprep.subr.bf16.mxu0 0
        %3826 = vmatpush1.bf16.msra.mxu0 0
        %3827 = vmatprep.subr.bf16.mxu0 0
        %3828 = vmatpush1.bf16.msra.mxu0 0
        %3829 = vmatprep.subr.bf16.mxu0 0
        %3830 = vmatpush1.bf16.msra.mxu0 0
        %3831 = vmatprep.subr.bf16.mxu0 0
        %3832 = vmatpush1.bf16.msra.mxu0 0
        %3833 = vmatprep.subr.bf16.mxu0 0
        %3834 = vmatpush1.bf16.msra.mxu0 0
        %3835 = vmatprep.subr.bf16.mxu0 0
        %3836 = vmatpush1.bf16.msra.mxu0 0
        %3837 = vmatprep.subr.bf16.mxu0 0
        %3838 = vmatpush1.bf16.msra.mxu0 0
        %3839 = vmatprep.subr.bf16.mxu0 0
        %3840 = vmatpush1.bf16.msra.mxu0 0
        %3841 = vmatprep.mubr.bf16.mxu0 0
        %3842 = vmatmul.mubr.bf16.gmra.mrb[0].mxu0 %v3759
        %v3843 = vpop.f32.mrb[0].mxu0
        %v3844 = vadd.f32 0.0, %v3843
        %v3845 = vpop.f32.mrb[0].mxu0
        %v3846 = vpop.f32.mrb[0].mxu0
        %v3847 = vpop.f32.mrb[0].mxu0
        %3848 = vdwg.mxu0
        %v3849 = vadd.f32 %v3752, %v3799
        %v3850 = vadd.f32 %v3753, %v3844
        %s3851 = scalar_lea.vmem %s1, 37
        %v3852 = vld [vmem:[%s3851] sm:$0x1]
        %3853 = vrot.lane.b32.xlu0 %v263, 91
        %v3854 = vpop.permute.xlu0 %3853
        %v3856 = vsel %vm266, %v3852, 0
        %v3859 = vsel %vm270, %v3854, 0
        %3861 = vmatprep.subr.bf16.mxu0 0
        %3862 = vmatpush1.bf16.msra.mxu0 %v3859
        %3863 = vmatprep.subr.bf16.mxu0 0
        %3864 = vmatpush1.bf16.msra.mxu0 0
        %3865 = vmatprep.subr.bf16.mxu0 0
        %3866 = vmatpush1.bf16.msra.mxu0 0
        %3867 = vmatprep.subr.bf16.mxu0 0
        %3868 = vmatpush1.bf16.msra.mxu0 0
        %3869 = vmatprep.subr.bf16.mxu0 0
        %3870 = vmatpush1.bf16.msra.mxu0 0
        %3871 = vmatprep.subr.bf16.mxu0 0
        %3872 = vmatpush1.bf16.msra.mxu0 0
        %3873 = vmatprep.subr.bf16.mxu0 0
        %3874 = vmatpush1.bf16.msra.mxu0 0
        %3875 = vmatprep.subr.bf16.mxu0 0
        %3876 = vmatpush1.bf16.msra.mxu0 0
        %3877 = vmatprep.subr.bf16.mxu0 0
        %3878 = vmatpush1.bf16.msra.mxu0 0
        %3879 = vmatprep.subr.bf16.mxu0 0
        %3880 = vmatpush1.bf16.msra.mxu0 0
        %3881 = vmatprep.subr.bf16.mxu0 0
        %3882 = vmatpush1.bf16.msra.mxu0 0
        %3883 = vmatprep.subr.bf16.mxu0 0
        %3884 = vmatpush1.bf16.msra.mxu0 0
        %3885 = vmatprep.subr.bf16.mxu0 0
        %3886 = vmatpush1.bf16.msra.mxu0 0
        %3887 = vmatprep.subr.bf16.mxu0 0
        %3888 = vmatpush1.bf16.msra.mxu0 0
        %3889 = vmatprep.subr.bf16.mxu0 0
        %3890 = vmatpush1.bf16.msra.mxu0 0
        %3891 = vmatprep.subr.bf16.mxu0 0
        %3892 = vmatpush1.bf16.msra.mxu0 0
        %3893 = vmatprep.mubr.bf16.mxu0 0
        %3894 = vmatmul.mubr.bf16.gmra.mrb[0].mxu0 %v3856
        %v3895 = vpop.f32.mrb[0].mxu0
        %v3896 = vadd.f32 0.0, %v3895
        %v3897 = vpop.f32.mrb[0].mxu0
        %v3898 = vpop.f32.mrb[0].mxu0
        %v3899 = vpop.f32.mrb[0].mxu0
        %3900 = vdwg.mxu0
        %3901 = vrot.lane.b32.xlu0 %v321, 91
        %v3902 = vpop.permute.xlu0 %3901
        %v3904 = vsel %vm270, %v3902, 0
        %3906 = vmatprep.subr.bf16.mxu0 0
        %3907 = vmatpush1.bf16.msra.mxu0 %v3904
        %3908 = vmatprep.subr.bf16.mxu0 0
        %3909 = vmatpush1.bf16.msra.mxu0 0
        %3910 = vmatprep.subr.bf16.mxu0 0
        %3911 = vmatpush1.bf16.msra.mxu0 0
        %3912 = vmatprep.subr.bf16.mxu0 0
        %3913 = vmatpush1.bf16.msra.mxu0 0
        %3914 = vmatprep.subr.bf16.mxu0 0
        %3915 = vmatpush1.bf16.msra.mxu0 0
        %3916 = vmatprep.subr.bf16.mxu0 0
        %3917 = vmatpush1.bf16.msra.mxu0 0
        %3918 = vmatprep.subr.bf16.mxu0 0
        %3919 = vmatpush1.bf16.msra.mxu0 0
        %3920 = vmatprep.subr.bf16.mxu0 0
        %3921 = vmatpush1.bf16.msra.mxu0 0
        %3922 = vmatprep.subr.bf16.mxu0 0
        %3923 = vmatpush1.bf16.msra.mxu0 0
        %3924 = vmatprep.subr.bf16.mxu0 0
        %3925 = vmatpush1.bf16.msra.mxu0 0
        %3926 = vmatprep.subr.bf16.mxu0 0
        %3927 = vmatpush1.bf16.msra.mxu0 0
        %3928 = vmatprep.subr.bf16.mxu0 0
        %3929 = vmatpush1.bf16.msra.mxu0 0
        %3930 = vmatprep.subr.bf16.mxu0 0
        %3931 = vmatpush1.bf16.msra.mxu0 0
        %3932 = vmatprep.subr.bf16.mxu0 0
        %3933 = vmatpush1.bf16.msra.mxu0 0
        %3934 = vmatprep.subr.bf16.mxu0 0
        %3935 = vmatpush1.bf16.msra.mxu0 0
        %3936 = vmatprep.subr.bf16.mxu0 0
        %3937 = vmatpush1.bf16.msra.mxu0 0
        %3938 = vmatprep.mubr.bf16.mxu0 0
        %3939 = vmatmul.mubr.bf16.gmra.mrb[0].mxu0 %v3856
        %v3940 = vpop.f32.mrb[0].mxu0
        %v3941 = vadd.f32 0.0, %v3940
        %v3942 = vpop.f32.mrb[0].mxu0
        %v3943 = vpop.f32.mrb[0].mxu0
        %v3944 = vpop.f32.mrb[0].mxu0
        %3945 = vdwg.mxu0
        %v3946 = vadd.f32 %v3849, %v3896
        %v3947 = vadd.f32 %v3850, %v3941
        %s3948 = scalar_lea.vmem %s1, 38
        %v3949 = vld [vmem:[%s3948] sm:$0x1]
        %3950 = vrot.lane.b32.xlu0 %v263, 90
        %v3951 = vpop.permute.xlu0 %3950
        %v3953 = vsel %vm266, %v3949, 0
        %v3956 = vsel %vm270, %v3951, 0
        %3958 = vmatprep.subr.bf16.mxu0 0
        %3959 = vmatpush1.bf16.msra.mxu0 %v3956
        %3960 = vmatprep.subr.bf16.mxu0 0
        %3961 = vmatpush1.bf16.msra.mxu0 0
        %3962 = vmatprep.subr.bf16.mxu0 0
        %3963 = vmatpush1.bf16.msra.mxu0 0
        %3964 = vmatprep.subr.bf16.mxu0 0
        %3965 = vmatpush1.bf16.msra.mxu0 0
        %3966 = vmatprep.subr.bf16.mxu0 0
        %3967 = vmatpush1.bf16.msra.mxu0 0
        %3968 = vmatprep.subr.bf16.mxu0 0
        %3969 = vmatpush1.bf16.msra.mxu0 0
        %3970 = vmatprep.subr.bf16.mxu0 0
        %3971 = vmatpush1.bf16.msra.mxu0 0
        %3972 = vmatprep.subr.bf16.mxu0 0
        %3973 = vmatpush1.bf16.msra.mxu0 0
        %3974 = vmatprep.subr.bf16.mxu0 0
        %3975 = vmatpush1.bf16.msra.mxu0 0
        %3976 = vmatprep.subr.bf16.mxu0 0
        %3977 = vmatpush1.bf16.msra.mxu0 0
        %3978 = vmatprep.subr.bf16.mxu0 0
        %3979 = vmatpush1.bf16.msra.mxu0 0
        %3980 = vmatprep.subr.bf16.mxu0 0
        %3981 = vmatpush1.bf16.msra.mxu0 0
        %3982 = vmatprep.subr.bf16.mxu0 0
        %3983 = vmatpush1.bf16.msra.mxu0 0
        %3984 = vmatprep.subr.bf16.mxu0 0
        %3985 = vmatpush1.bf16.msra.mxu0 0
        %3986 = vmatprep.subr.bf16.mxu0 0
        %3987 = vmatpush1.bf16.msra.mxu0 0
        %3988 = vmatprep.subr.bf16.mxu0 0
        %3989 = vmatpush1.bf16.msra.mxu0 0
        %3990 = vmatprep.mubr.bf16.mxu0 0
        %3991 = vmatmul.mubr.bf16.gmra.mrb[0].mxu0 %v3953
        %v3992 = vpop.f32.mrb[0].mxu0
        %v3993 = vadd.f32 0.0, %v3992
        %v3994 = vpop.f32.mrb[0].mxu0
        %v3995 = vpop.f32.mrb[0].mxu0
        %v3996 = vpop.f32.mrb[0].mxu0
        %3997 = vdwg.mxu0
        %3998 = vrot.lane.b32.xlu0 %v321, 90
        %v3999 = vpop.permute.xlu0 %3998
        %v4001 = vsel %vm270, %v3999, 0
        %4003 = vmatprep.subr.bf16.mxu0 0
        %4004 = vmatpush1.bf16.msra.mxu0 %v4001
        %4005 = vmatprep.subr.bf16.mxu0 0
        %4006 = vmatpush1.bf16.msra.mxu0 0
        %4007 = vmatprep.subr.bf16.mxu0 0
        %4008 = vmatpush1.bf16.msra.mxu0 0
        %4009 = vmatprep.subr.bf16.mxu0 0
        %4010 = vmatpush1.bf16.msra.mxu0 0
        %4011 = vmatprep.subr.bf16.mxu0 0
        %4012 = vmatpush1.bf16.msra.mxu0 0
        %4013 = vmatprep.subr.bf16.mxu0 0
        %4014 = vmatpush1.bf16.msra.mxu0 0
        %4015 = vmatprep.subr.bf16.mxu0 0
        %4016 = vmatpush1.bf16.msra.mxu0 0
        %4017 = vmatprep.subr.bf16.mxu0 0
        %4018 = vmatpush1.bf16.msra.mxu0 0
        %4019 = vmatprep.subr.bf16.mxu0 0
        %4020 = vmatpush1.bf16.msra.mxu0 0
        %4021 = vmatprep.subr.bf16.mxu0 0
        %4022 = vmatpush1.bf16.msra.mxu0 0
        %4023 = vmatprep.subr.bf16.mxu0 0
        %4024 = vmatpush1.bf16.msra.mxu0 0
        %4025 = vmatprep.subr.bf16.mxu0 0
        %4026 = vmatpush1.bf16.msra.mxu0 0
        %4027 = vmatprep.subr.bf16.mxu0 0
        %4028 = vmatpush1.bf16.msra.mxu0 0
        %4029 = vmatprep.subr.bf16.mxu0 0
        %4030 = vmatpush1.bf16.msra.mxu0 0
        %4031 = vmatprep.subr.bf16.mxu0 0
        %4032 = vmatpush1.bf16.msra.mxu0 0
        %4033 = vmatprep.subr.bf16.mxu0 0
        %4034 = vmatpush1.bf16.msra.mxu0 0
        %4035 = vmatprep.mubr.bf16.mxu0 0
        %4036 = vmatmul.mubr.bf16.gmra.mrb[0].mxu0 %v3953
        %v4037 = vpop.f32.mrb[0].mxu0
        %v4038 = vadd.f32 0.0, %v4037
        %v4039 = vpop.f32.mrb[0].mxu0
        %v4040 = vpop.f32.mrb[0].mxu0
        %v4041 = vpop.f32.mrb[0].mxu0
        %4042 = vdwg.mxu0
        %v4043 = vadd.f32 %v3946, %v3993
        %v4044 = vadd.f32 %v3947, %v4038
        %s4045 = scalar_lea.vmem %s1, 39
        %v4046 = vld [vmem:[%s4045] sm:$0x1]
        %4047 = vrot.lane.b32.xlu0 %v263, 89
        %v4048 = vpop.permute.xlu0 %4047
        %v4050 = vsel %vm266, %v4046, 0
        %v4053 = vsel %vm270, %v4048, 0
        %4055 = vmatprep.subr.bf16.mxu0 0
        %4056 = vmatpush1.bf16.msra.mxu0 %v4053
        %4057 = vmatprep.subr.bf16.mxu0 0
        %4058 = vmatpush1.bf16.msra.mxu0 0
        %4059 = vmatprep.subr.bf16.mxu0 0
        %4060 = vmatpush1.bf16.msra.mxu0 0
        %4061 = vmatprep.subr.bf16.mxu0 0
        %4062 = vmatpush1.bf16.msra.mxu0 0
        %4063 = vmatprep.subr.bf16.mxu0 0
        %4064 = vmatpush1.bf16.msra.mxu0 0
        %4065 = vmatprep.subr.bf16.mxu0 0
        %4066 = vmatpush1.bf16.msra.mxu0 0
        %4067 = vmatprep.subr.bf16.mxu0 0
        %4068 = vmatpush1.bf16.msra.mxu0 0
        %4069 = vmatprep.subr.bf16.mxu0 0
        %4070 = vmatpush1.bf16.msra.mxu0 0
        %4071 = vmatprep.subr.bf16.mxu0 0
        %4072 = vmatpush1.bf16.msra.mxu0 0
        %4073 = vmatprep.subr.bf16.mxu0 0
        %4074 = vmatpush1.bf16.msra.mxu0 0
        %4075 = vmatprep.subr.bf16.mxu0 0
        %4076 = vmatpush1.bf16.msra.mxu0 0
        %4077 = vmatprep.subr.bf16.mxu0 0
        %4078 = vmatpush1.bf16.msra.mxu0 0
        %4079 = vmatprep.subr.bf16.mxu0 0
        %4080 = vmatpush1.bf16.msra.mxu0 0
        %4081 = vmatprep.subr.bf16.mxu0 0
        %4082 = vmatpush1.bf16.msra.mxu0 0
        %4083 = vmatprep.subr.bf16.mxu0 0
        %4084 = vmatpush1.bf16.msra.mxu0 0
        %4085 = vmatprep.subr.bf16.mxu0 0
        %4086 = vmatpush1.bf16.msra.mxu0 0
        %4087 = vmatprep.mubr.bf16.mxu0 0
        %4088 = vmatmul.mubr.bf16.gmra.mrb[0].mxu0 %v4050
        %v4089 = vpop.f32.mrb[0].mxu0
        %v4090 = vadd.f32 0.0, %v4089
        %v4091 = vpop.f32.mrb[0].mxu0
        %v4092 = vpop.f32.mrb[0].mxu0
        %v4093 = vpop.f32.mrb[0].mxu0
        %4094 = vdwg.mxu0
        %4095 = vrot.lane.b32.xlu0 %v321, 89
        %v4096 = vpop.permute.xlu0 %4095
        %v4098 = vsel %vm270, %v4096, 0
        %4100 = vmatprep.subr.bf16.mxu0 0
        %4101 = vmatpush1.bf16.msra.mxu0 %v4098
        %4102 = vmatprep.subr.bf16.mxu0 0
        %4103 = vmatpush1.bf16.msra.mxu0 0
        %4104 = vmatprep.subr.bf16.mxu0 0
        %4105 = vmatpush1.bf16.msra.mxu0 0
        %4106 = vmatprep.subr.bf16.mxu0 0
        %4107 = vmatpush1.bf16.msra.mxu0 0
        %4108 = vmatprep.subr.bf16.mxu0 0
        %4109 = vmatpush1.bf16.msra.mxu0 0
        %4110 = vmatprep.subr.bf16.mxu0 0
        %4111 = vmatpush1.bf16.msra.mxu0 0
        %4112 = vmatprep.subr.bf16.mxu0 0
        %4113 = vmatpush1.bf16.msra.mxu0 0
        %4114 = vmatprep.subr.bf16.mxu0 0
        %4115 = vmatpush1.bf16.msra.mxu0 0
        %4116 = vmatprep.subr.bf16.mxu0 0
        %4117 = vmatpush1.bf16.msra.mxu0 0
        %4118 = vmatprep.subr.bf16.mxu0 0
        %4119 = vmatpush1.bf16.msra.mxu0 0
        %4120 = vmatprep.subr.bf16.mxu0 0
        %4121 = vmatpush1.bf16.msra.mxu0 0
        %4122 = vmatprep.subr.bf16.mxu0 0
        %4123 = vmatpush1.bf16.msra.mxu0 0
        %4124 = vmatprep.subr.bf16.mxu0 0
        %4125 = vmatpush1.bf16.msra.mxu0 0
        %4126 = vmatprep.subr.bf16.mxu0 0
        %4127 = vmatpush1.bf16.msra.mxu0 0
        %4128 = vmatprep.subr.bf16.mxu0 0
        %4129 = vmatpush1.bf16.msra.mxu0 0
        %4130 = vmatprep.subr.bf16.mxu0 0
        %4131 = vmatpush1.bf16.msra.mxu0 0
        %4132 = vmatprep.mubr.bf16.mxu0 0
        %4133 = vmatmul.mubr.bf16.gmra.mrb[0].mxu0 %v4050
        %v4134 = vpop.f32.mrb[0].mxu0
        %v4135 = vadd.f32 0.0, %v4134
        %v4136 = vpop.f32.mrb[0].mxu0
        %v4137 = vpop.f32.mrb[0].mxu0
        %v4138 = vpop.f32.mrb[0].mxu0
        %4139 = vdwg.mxu0
        %v4140 = vadd.f32 %v4043, %v4090
        %v4141 = vadd.f32 %v4044, %v4135
        %v4142 = vld [vmem:[%s2] sm:$0x3]
        %4144 = vset.pattern.permute.xlu0 0
        %4145 = vperm.xlu0 %4144, %v4142
        %v4146 = vpop.permute.xlu0 %4145
        %v4148 = vadd.f32 %v4140, %v4146
        %v4149 = vadd.f32 %v4141, %v4146
        %v4150 = vld [vmem:[%s3] sm:$0x1]
        %v4152 = vlaneseq
        %v4153 = vshrl.u32 %v4152, 7
        %v4154 = vsub.s32 0, %v4153
        %v4155 = vrot.slane %v4150, %v4154
        %v4157 = vmul.f32 %v4148, %v4155
        %v4158 = vmul.f32 %v4149, %v4155
        %vm4159 = vcmask 320512
        %v4160 = vsel %vm4159, %v4157, -inf
        %4161 = vmax.xlane.f32.xlu0 %v4160
        %v4162 = vpop.xlane.xlu0 %4161
        %v4163 = vsel %vm4159, %v4158, -inf
        %4164 = vmax.xlane.f32.xlu0 %v4163
        %v4165 = vpop.xlane.xlu0 %4164
        %vm4166 = vcmask 648512
        %v4167 = vsel %vm4166, %v4157, -inf
        %4168 = vmax.xlane.f32.xlu0 %v4167
        %v4169 = vpop.xlane.xlu0 %4168
        %v4170 = vsel %vm4166, %v4158, -inf
        %4171 = vmax.xlane.f32.xlu0 %v4170
        %v4172 = vpop.xlane.xlu0 %4171
        %v4175 = vlaneseq
        %v4176 = vand.u32 %v4175, 127
        %v4177 = vlaneseq
        %v4178 = vshrl.u32 %v4177, 7
        %v4179 = vsub.s32 %v4176, %v4178
        %v4180 = vrot.slane %v4162, %v4179
        %v4181 = vlaneseq
        %v4182 = vshrl.u32 %v4181, 7
        %v4183 = vsub.s32 %v4176, %v4182
        %v4184 = vrot.slane %v4165, %v4183
        %vm4185 = vcmask 1041409
        %v4186 = vsel %vm4185, %v4184, %v4180
        %v4190 = vadd.s32 %v4176, 4294967294
        %v4191 = vlaneseq
        %v4192 = vshrl.u32 %v4191, 7
        %v4193 = vsub.s32 %v4190, %v4192
        %v4194 = vrot.slane %v4169, %v4193
        %v4195 = vlaneseq
        %v4196 = vshrl.u32 %v4195, 7
        %v4197 = vsub.s32 %v4190, %v4196
        %v4198 = vrot.slane %v4172, %v4197
        %v4199 = vsel %vm4185, %v4198, %v4194
        %vm4201 = vcmask 15360
        %v4202 = vsel %vm4201, %v4186, %v4199
        %v4203 = vmax.f32 %v4202, 0.0
        %v4204 = vld [vmem:[%s4] sm:$0xf]
        %v4205 = vld [vmem:[%s5] sm:$0x1]
        %v4207 = vlaneseq
        %v4208 = vshrl.u32 %v4207, 7
        %v4209 = vsub.s32 0, %v4208
        %v4210 = vrot.slane %v4205, %v4209
        %v4213 = vsel %vm266, %v4203, 0
        %vm4215 = vcmask 1043456
        %v4217 = vsel %vm4215, %v4204, 0
        %4219 = vmatprep.subr.mxu0 0.0
        %4220 = vmatpush1.msra.mxu0 %v4217
        %4221 = vmatprep.subr.mxu0 0.0
        %4222 = vmatpush1.msra.mxu0 0.0
        %4223 = vmatprep.subr.mxu0 0.0
        %4224 = vmatpush1.msra.mxu0 0.0
        %4225 = vmatprep.subr.mxu0 0.0
        %4226 = vmatpush1.msra.mxu0 0.0
        %4227 = vmatprep.subr.mxu0 0.0
        %4228 = vmatpush1.msra.mxu0 0.0
        %4229 = vmatprep.subr.mxu0 0.0
        %4230 = vmatpush1.msra.mxu0 0.0
        %4231 = vmatprep.subr.mxu0 0.0
        %4232 = vmatpush1.msra.mxu0 0.0
        %4233 = vmatprep.subr.mxu0 0.0
        %4234 = vmatpush1.msra.mxu0 0.0
        %4235 = vmatprep.subr.mxu0 0.0
        %4236 = vmatpush1.msra.mxu0 0.0
        %4237 = vmatprep.subr.mxu0 0.0
        %4238 = vmatpush1.msra.mxu0 0.0
        %4239 = vmatprep.subr.mxu0 0.0
        %4240 = vmatpush1.msra.mxu0 0.0
        %4241 = vmatprep.subr.mxu0 0.0
        %4242 = vmatpush1.msra.mxu0 0.0
        %4243 = vmatprep.subr.mxu0 0.0
        %4244 = vmatpush1.msra.mxu0 0.0
        %4245 = vmatprep.subr.mxu0 0.0
        %4246 = vmatpush1.msra.mxu0 0.0
        %4247 = vmatprep.subr.mxu0 0.0
        %4248 = vmatpush1.msra.mxu0 0.0
        %4249 = vmatprep.subr.mxu0 0.0
        %4250 = vmatpush1.msra.mxu0 0.0
        %4251 = vmatprep.subr.mxu0 0.0
        %4252 = vmatpush1.msra.mxu0 0.0
        %4253 = vmatprep.subr.mxu0 0.0
        %4254 = vmatpush1.msra.mxu0 0.0
        %4255 = vmatprep.subr.mxu0 0.0
        %4256 = vmatpush1.msra.mxu0 0.0
        %4257 = vmatprep.subr.mxu0 0.0
        %4258 = vmatpush1.msra.mxu0 0.0
        %4259 = vmatprep.subr.mxu0 0.0
        %4260 = vmatpush1.msra.mxu0 0.0
        %4261 = vmatprep.subr.mxu0 0.0
        %4262 = vmatpush1.msra.mxu0 0.0
        %4263 = vmatprep.subr.mxu0 0.0
        %4264 = vmatpush1.msra.mxu0 0.0
        %4265 = vmatprep.subr.mxu0 0.0
        %4266 = vmatpush1.msra.mxu0 0.0
        %4267 = vmatprep.subr.mxu0 0.0
        %4268 = vmatpush1.msra.mxu0 0.0
        %4269 = vmatprep.subr.mxu0 0.0
        %4270 = vmatpush1.msra.mxu0 0.0
        %4271 = vmatprep.subr.mxu0 0.0
        %4272 = vmatpush1.msra.mxu0 0.0
        %4273 = vmatprep.subr.mxu0 0.0
        %4274 = vmatpush1.msra.mxu0 0.0
        %4275 = vmatprep.subr.mxu0 0.0
        %4276 = vmatpush1.msra.mxu0 0.0
        %4277 = vmatprep.subr.mxu0 0.0
        %4278 = vmatpush1.msra.mxu0 0.0
        %4279 = vmatprep.subr.mxu0 0.0
        %4280 = vmatpush1.msra.mxu0 0.0
        %4281 = vmatprep.subr.mxu0 0.0
        %4282 = vmatpush1.msra.mxu0 0.0
        %4283 = vmatprep.mubr.f32.mxu0 0.0
        %4284 = vmatmul.mubr.f32.gmra.mrb[0].mxu0 %v4213
        %v4285 = vpop.f32.mrb[0].mxu0
        %v4286 = vadd.f32 %v4210, %v4285
        %v4287 = vpop.f32.mrb[0].mxu0
        %4288 = vdwg.mxu0
        %4289 = vst [vmem:[%s244] sm:$0x3] %v4286
        %s4290 = sand.u32 %s159, 1
        %s4291 = scalar_lea.sflag [#allocation3], %s4290
        %s4292 = sand.u32 %s159, 1
        %s4293 = smul.addr %s4292, 2
        %s4294 = scalar_lea.vmem [#allocation2], %s4293
        // Predicated region
        $region45: #{tpu_custom_call.1} parent=43 // pred_check
          %p4295 = pneg %p169
        $region46: #{tpu_custom_call.1} parent=43 // pred_check_branch
          %4297 = sbr.rel (%p4295) target = $region48
        $region47: #{tpu_custom_call.1} parent=43 // pred_region
          %s4299 = ssub.s32 32, 32
          %4300 = vsyncadd %s4291, %s4299
          %s4301 = smul.addr %s20, 32
          %s4302 = scalar_lea.hbm %s6, %s4301
          %s4304 = sshll.u32 %s4294, 4
          %s4305 = int_to_ptr.vmem [resolvable:$true] %s4304
          %4307 = dma.vmem_to_hbm [thread:$0]  %s4305, 32, %s4302, %s4291
        $region48: #{tpu_custom_call.1} parent=43 // pred_fallthru
          _
      $region44: #{tpu_custom_call.1} parent=5 // pred_fallthru
        _
      %p4308 = scmp.le.s32.totalorder 2, %s15
      // Predicated region
      $region49: #{tpu_custom_call.1} parent=5 // pred_check
        %p4309 = pneg %p4308
      $region50: #{tpu_custom_call.1} parent=5 // pred_check_branch
        %4311 = sbr.rel (%p4309) target = $region52
      $region51: #{tpu_custom_call.1} parent=5 // pred_region
        %s4312 = ssub.s32 %s15, 2
        // Predicated region
        $region53: #{tpu_custom_call.1} parent=51 // pred_check
          %p4313 = pneg %p175
        $region54: #{tpu_custom_call.1} parent=51 // pred_check_branch
          %4315 = sbr.rel (%p4313) target = $region56
        $region55: #{tpu_custom_call.1} parent=51 // pred_region
          %s4316 = sand.u32 %s160, 1
          %s4317 = scalar_lea.sflag [#allocation3], %s4316
          %s4318 = sand.u32 %s160, 1
          %s4319 = smul.addr %s4318, 2
          %s4320 = scalar_lea.vmem [#allocation2], %s4319
          %4321 = dma.done %s4317, 32
        $region56: #{tpu_custom_call.1} parent=51 // pred_fallthru
          _
      $region52: #{tpu_custom_call.1} parent=5 // pred_fallthru
        _
    $region6: #{tpu_custom_call.1} parent=1 // loop_footer
      %s19 = sadd.s32 1, %s15
    $region7: #{tpu_custom_call.1} parent=1 // loop_footer_branch
      %14 = sbr.rel target = $region3
    $region8: #{tpu_custom_call.1} parent=1 // loop_exit
      _
    %4322 = vsyncpa [#allocation3], 1
    %s4323 = scalar_lea.sflag [#allocation3], 1
    %4324 = vsyncpa %s4323, 1

</llo_original>
